<compile_context>
chip_gen: v6e
topology: v6e:2x2x1
jax: 0.10.0
libtpu: 0.0.40
codegen_flags: <defaults>
</compile_context>

<pallas_src>
import functools

import jax
import jax.numpy as jnp
import numpy as np
from jax import lax
from jax.experimental import pallas as pl
from jax.experimental.pallas import tpu as pltpu

EPS = 1e-5          # PyTorch BatchNorm2d default eps
LANE = 128          # TPU lane width (output-channel dims padded to this)
SUBLANE = 8         # f32 sublane height (row tiles multiple of this)

# Single-buffer grid-invariant operands (weights, scale/shift).  Flipped off
# automatically in __main__ if this jax version rejects pl.Buffered(1).
USE_SINGLE_BUFFER_CONSTS = True


def _round_up(x, m):
    return (x + m - 1) // m * m


def _vmem_limit_bytes():
    """Scoped-VMEM limit with ~25% headroom (≈96 MiB on v5e/v6e, ≈48 MiB on v7x)."""
    try:
        cap = int(pltpu.get_tpu_info().vmem_capacity_bytes)
    except Exception:
        cap = 64 * 1024 * 1024
    cap = min(cap, 128 * 1024 * 1024)
    return max(32 * 1024 * 1024, cap * 3 // 4)


def _const_spec(shape, index_map):
    """BlockSpec for a grid-invariant operand; single-buffered when supported."""
    if USE_SINGLE_BUFFER_CONSTS:
        try:
            return pl.BlockSpec(shape, index_map, pipeline_mode=pl.Buffered(1))
        except TypeError:
            pass
    return pl.BlockSpec(shape, index_map)


# ---------------------------------------------------------------------------
# Pallas kernels
# ---------------------------------------------------------------------------
def _accumulate_stats(st_ref, y):
    """Accumulate per-channel sum (sublanes 0-7) and sumsq (8-15) of an f32 tile.

    Full (1, 16, C) accumulator update -> unmasked full-tile store instead of
    two 1-row masked read-modify-writes.
    """
    c = y.shape[-1]
    psum = y.reshape(-1, SUBLANE, c).sum(axis=0)
    psq = (y * y).reshape(-1, SUBLANE, c).sum(axis=0)
    st_ref[...] += jnp.concatenate([psum, psq], axis=0)[None]


def conv_stats_kernel(p_ref, w_ref, y_ref, st_ref):
    """One row-tile of conv-as-matmul + BN statistics (f32), bf16 output."""
    @pl.when(pl.program_id(1) == 0)
    def _():
        st_ref[...] = jnp.zeros_like(st_ref)

    y = jnp.dot(p_ref[...], w_ref[...], preferred_element_type=jnp.float32)
    y_ref[...] = y.astype(y_ref.dtype)
    _accumulate_stats(st_ref, y)


def dual_conv_stats_kernel(p2_ref, w2_ref, p3_ref, w3_ref,
                           y2_ref, y3_ref, st2_ref, st3_ref):
    """Main-path conv2 and 1x1 shortcut conv3 row-tiles + their BN statistics."""
    @pl.when(pl.program_id(1) == 0)
    def _():
        st2_ref[...] = jnp.zeros_like(st2_ref)
        st3_ref[...] = jnp.zeros_like(st3_ref)

    y2 = jnp.dot(p2_ref[...], w2_ref[...], preferred_element_type=jnp.float32)
    y3 = jnp.dot(p3_ref[...], w3_ref[...], preferred_element_type=jnp.float32)
    y2_ref[...] = y2.astype(y2_ref.dtype)
    y3_ref[...] = y3.astype(y3_ref.dtype)
    _accumulate_stats(st2_ref, y2)
    _accumulate_stats(st3_ref, y3)


def bn_relu_kernel(y_ref, sc_ref, sh_ref, o_ref):
    """Folded BN (y*scale+shift) fused with ReLU; math in f32, output bf16/f32."""
    y = y_ref[...].astype(jnp.float32)
    o_ref[...] = jnp.maximum(y * sc_ref[...] + sh_ref[...], 0.0).astype(o_ref.dtype)


def tail_apply_kernel(y2_ref, y3_ref, sc2_ref, sh2_ref, sc3_ref, sh3_ref, o_ref):
    """bn2(y2) + bn3(y3) residual add + relu2 (both BNs folded), f32 math."""
    a = y2_ref[...].astype(jnp.float32) * sc2_ref[...] + sh2_ref[...]
    b = y3_ref[...].astype(jnp.float32) * sc3_ref[...] + sh3_ref[...]
    o_ref[...] = jnp.maximum(a + b, 0.0).astype(o_ref.dtype)


# ---------------------------------------------------------------------------
# pallas_call wrappers
# ---------------------------------------------------------------------------
def conv_stats_call(patches, w_mat, tile, n_cores, inter_dtype, vmem_limit):
    Rp, K = patches.shape
    C = w_mat.shape[1]
    steps = Rp // tile // n_cores
    isz = np.dtype(patches.dtype).itemsize
    osz = np.dtype(inter_dtype).itemsize

    p_spec = pl.BlockSpec((tile, K), lambda c, i: (c * steps + i, 0))
    y_spec = pl.BlockSpec((tile, C), lambda c, i: (c * steps + i, 0))
    w_spec = _const_spec((K, C), lambda c, i: (0, 0))
    st_spec = pl.BlockSpec((1, 2 * SUBLANE, C), lambda c, i: (c, 0, 0))

    return pl.pallas_call(
        conv_stats_kernel,
        out_shape=(jax.ShapeDtypeStruct((Rp, C), inter_dtype),
                   jax.ShapeDtypeStruct((n_cores, 2 * SUBLANE, C), jnp.float32)),
        grid=(n_cores, steps),
        in_specs=[p_spec, w_spec],
        out_specs=(y_spec, st_spec),
        compiler_params=pltpu.CompilerParams(
            # outer axis -> shard across TensorCores (v7x); inner axis carries
            # the resident BN-stats accumulator -> reduction semantics
            dimension_semantics=("parallel", "arbitrary"),
            vmem_limit_bytes=vmem_limit),
        cost_estimate=pl.CostEstimate(
            flops=2 * Rp * K * C, transcendentals=0,
            bytes_accessed=(Rp * K + K * C) * isz + Rp * C * osz
                           + n_cores * 2 * SUBLANE * C * 4),
    )(patches, w_mat)


def dual_conv_stats_call(p2, w2_mat, p3, w3_mat, tile, n_cores, inter_dtype,
                         vmem_limit):
    Rp, K2 = p2.shape
    _, K3 = p3.shape
    C = w2_mat.shape[1]
    steps = Rp // tile // n_cores
    isz = np.dtype(p2.dtype).itemsize
    osz = np.dtype(inter_dtype).itemsize

    def row(cols):
        return pl.BlockSpec((tile, cols), lambda c, i: (c * steps + i, 0))

    st_spec = pl.BlockSpec((1, 2 * SUBLANE, C), lambda c, i: (c, 0, 0))

    return pl.pallas_call(
        dual_conv_stats_kernel,
        out_shape=(jax.ShapeDtypeStruct((Rp, C), inter_dtype),
                   jax.ShapeDtypeStruct((Rp, C), inter_dtype),
                   jax.ShapeDtypeStruct((n_cores, 2 * SUBLANE, C), jnp.float32),
                   jax.ShapeDtypeStruct((n_cores, 2 * SUBLANE, C), jnp.float32)),
        grid=(n_cores, steps),
        in_specs=[row(K2), _const_spec((K2, C), lambda c, i: (0, 0)),
                  row(K3), _const_spec((K3, C), lambda c, i: (0, 0))],
        out_specs=(row(C), row(C), st_spec, st_spec),
        compiler_params=pltpu.CompilerParams(
            dimension_semantics=("parallel", "arbitrary"),
            vmem_limit_bytes=vmem_limit),
        cost_estimate=pl.CostEstimate(
            flops=2 * Rp * (K2 + K3) * C, transcendentals=0,
            bytes_accessed=(Rp * (K2 + K3) + (K2 + K3) * C) * isz
                           + 2 * Rp * C * osz + 2 * n_cores * 2 * SUBLANE * C * 4),
    )(p2, w2_mat, p3, w3_mat)


def bn_relu_call(y, scale, shift, ew_tile, out_dtype, vmem_limit):
    Rp, C = y.shape
    return pl.pallas_call(
        bn_relu_kernel,
        out_shape=jax.ShapeDtypeStruct((Rp, C), out_dtype),
        grid=(Rp // ew_tile,),
        in_specs=[pl.BlockSpec((ew_tile, C), lambda i: (i, 0)),
                  _const_spec((1, C), lambda i: (0, 0)),
                  _const_spec((1, C), lambda i: (0, 0))],
        out_specs=pl.BlockSpec((ew_tile, C), lambda i: (i, 0)),
        compiler_params=pltpu.CompilerParams(
            dimension_semantics=("parallel",),
            vmem_limit_bytes=vmem_limit),
    )(y, scale, shift)


def tail_apply_call(y2, y3, sc2, sh2, sc3, sh3, ew_tile, out_dtype, vmem_limit):
    Rp, C = y2.shape
    return pl.pallas_call(
        tail_apply_kernel,
        out_shape=jax.ShapeDtypeStruct((Rp, C), out_dtype),
        grid=(Rp // ew_tile,),
        in_specs=[pl.BlockSpec((ew_tile, C), lambda i: (i, 0)),
                  pl.BlockSpec((ew_tile, C), lambda i: (i, 0)),
                  _const_spec((1, C), lambda i: (0, 0)),
                  _const_spec((1, C), lambda i: (0, 0)),
                  _const_spec((1, C), lambda i: (0, 0)),
                  _const_spec((1, C), lambda i: (0, 0))],
        out_specs=pl.BlockSpec((ew_tile, C), lambda i: (i, 0)),
        compiler_params=pltpu.CompilerParams(
            dimension_semantics=("parallel",),
            vmem_limit_bytes=vmem_limit),
    )(y2, y3, sc2, sh2, sc3, sh3)


# ---------------------------------------------------------------------------
# JAX glue: im2col, weight packing, BN fold, full forward
# ---------------------------------------------------------------------------
def im2col(x_nhwc, k, stride, padding):
    """(N,H,W,C) -> (N*Ho*Wo, k*k*C) patch matrix, column order (dy, dx, c)."""
    N, H, W, C = x_nhwc.shape
    xp = jnp.pad(x_nhwc, ((0, 0), (padding, padding), (padding, padding), (0, 0)))
    Ho = (H + 2 * padding - k) // stride + 1
    Wo = (W + 2 * padding - k) // stride + 1
    taps = []
    for dy in range(k):
        for dx in range(k):
            taps.append(xp[:, dy:dy + stride * Ho:stride, dx:dx + stride * Wo:stride, :])
    p = jnp.stack(taps, axis=3)                       # (N, Ho, Wo, k*k, C)
    return p.reshape(N * Ho * Wo, k * k * C), (Ho, Wo)


def conv_w_to_mat(w_oihw, k_pad, cout_pad):
    """(Cout,Cin,kh,kw) -> (k_pad, cout_pad), flattened-K row order (dy, dx, c)."""
    Cout, Cin, kh, kw = w_oihw.shape
    w = jnp.transpose(w_oihw, (2, 3, 1, 0)).reshape(kh * kw * Cin, Cout)
    return jnp.pad(w, ((0, k_pad - kh * kw * Cin), (0, cout_pad - Cout)))


def fold_bn(stats, gamma, beta, count, c_pad):
    """Per-core (n_cores,16,C) sum/sumsq slabs -> folded (scale, shift), f32."""
    g = jnp.pad(gamma, (0, c_pad - gamma.shape[0]))
    b = jnp.pad(beta, (0, c_pad - beta.shape[0]))
    s = stats.sum(axis=0)                               # (16, C) across cores
    total = jnp.sum(s[0:SUBLANE], axis=0)               # (C,)
    totsq = jnp.sum(s[SUBLANE:2 * SUBLANE], axis=0)     # (C,)
    mean = total / count
    var = jnp.maximum(totsq / count - mean * mean, 0.0)
    scale = g * lax.rsqrt(var + EPS)
    shift = b - mean * scale
    return scale[None, :], shift[None, :]


def resblock_forward(x_nchw, params, stride, *, row_tile=512,
                     matmul_dtype=jnp.bfloat16, ew_rows=2048):
    """ResBlock forward.  bf16 operands/intermediates by default (all three MXU
    generations are bf16-native); BN stats and epilogue math stay f32."""
    N, Cin, H, W = x_nchw.shape
    Cout = params["w1"].shape[0]
    cpo = _round_up(Cout, LANE)          # padded output channels (lane-dense)
    vmem_limit = _vmem_limit_bytes()

    # NCHW -> NHWC (real Cin channels; the patch K dim is padded flat, below).
    x = jnp.transpose(x_nchw, (0, 2, 3, 1))

    # ---- conv1 (3x3, stride, pad=1): row-tiled matmul + BN stats -----------
    p1, (Ho, Wo) = im2col(x, 3, stride, 1)
    R = N * Ho * Wo                      # true row count (BN divisor)
    count = float(R)
    tile = max(SUBLANE, min(_round_up(row_tile, SUBLANE), _round_up(R, SUBLANE)))
    Rp = _round_up(R, tile)              # zero row padding: no effect on stats
    n_tiles = Rp // tile
    n_cores = 2 if (n_tiles % 2 == 0 and n_tiles >= 2) else 1   # v7x: 2 TCs
    # Elementwise passes are HBM-bound: use the largest tile dividing Rp.
    m = 1
    for cand in range(1, n_tiles + 1):
        if n_tiles % cand == 0 and tile * cand <= max(ew_rows, tile):
            m = cand
    ew_tile = tile * m

    Kp1 = _round_up(9 * Cin, LANE)       # flattened-K padding (not per-tap)
    p1 = jnp.pad(p1, ((0, Rp - R), (0, Kp1 - 9 * Cin))).astype(matmul_dtype)
    w1m = conv_w_to_mat(params["w1"], Kp1, cpo).astype(matmul_dtype)
    y1_raw, st1 = conv_stats_call(p1, w1m, tile, n_cores, matmul_dtype, vmem_limit)

    # Conv biases are skipped on purpose: training-mode BN subtracts the batch
    # mean, which cancels any per-channel bias exactly.
    sc1, sh1 = fold_bn(st1, params["g1"], params["be1"], count, cpo)
    # bn1 + relu1 (folded), written directly in the matmul dtype for conv2.
    y1 = bn_relu_call(y1_raw, sc1, sh1, ew_tile, matmul_dtype, vmem_limit)

    # ---- conv2 (3x3, s=1, pad=1) + shortcut conv3 (1x1, stride) ------------
    y1_nhwc = y1[:R, :Cout].reshape(N, Ho, Wo, Cout)    # real channels only
    p2, _ = im2col(y1_nhwc, 3, 1, 1)
    Kp2 = _round_up(9 * Cout, LANE)
    p2 = jnp.pad(p2, ((0, Rp - R), (0, Kp2 - 9 * Cout))).astype(matmul_dtype)
    w2m = conv_w_to_mat(params["w2"], Kp2, cpo).astype(matmul_dtype)

    # 1x1 shortcut: a strided view of x *is* the patch matrix (no im2col copy).
    Kp3 = _round_up(Cin, LANE)
    xs = x[:, ::stride, ::stride, :].reshape(R, Cin)
    xs = jnp.pad(xs, ((0, Rp - R), (0, Kp3 - Cin))).astype(matmul_dtype)
    w3m = conv_w_to_mat(params["w3"], Kp3, cpo).astype(matmul_dtype)

    y2_raw, y3_raw, st2, st3 = dual_conv_stats_call(
        p2, w2m, xs, w3m, tile, n_cores, matmul_dtype, vmem_limit)

    # ---- folded bn2 / bn3 + residual add + relu2 ----------------------------
    sc2, sh2 = fold_bn(st2, params["g2"], params["be2"], count, cpo)
    sc3, sh3 = fold_bn(st3, params["g3"], params["be3"], count, cpo)
    out = tail_apply_call(y2_raw, y3_raw, sc2, sh2, sc3, sh3, ew_tile,
                          jnp.float32, vmem_limit)

    out = out[:R, :Cout].reshape(N, Ho, Wo, Cout)
    return jnp.transpose(out, (0, 3, 1, 2))              # back to NCHW


# ---------------------------------------------------------------------------
# Pure-JAX reference (for correctness check)
# ---------------------------------------------------------------------------
def reference_resblock(x, params, stride):
    def conv(xx, w, b, s, p):
        y = lax.conv_general_dilated(xx, w, (s, s), [(p, p), (p, p)],
                                     dimension_numbers=("NCHW", "OIHW", "NCHW"))
        return y + b[None, :, None, None]

    def bn(xx, g, be):
        m = jnp.mean(xx, axis=(0, 2, 3), keepdims=True)
        v = jnp.mean((xx - m) ** 2, axis=(0, 2, 3), keepdims=True)
        return (xx - m) / jnp.sqrt(v + EPS) * g[None, :, None, None] + be[None, :, None, None]

    y = jax.nn.relu(bn(conv(x, params["w1"], params["b1"], stride, 1),
                       params["g1"], params["be1"]))
    y = bn(conv(y, params["w2"], params["b2"], 1, 1), params["g2"], params["be2"])
    yi = bn(conv(x, params["w3"], params["b3"], stride, 0), params["g3"], params["be3"])
    return jax.nn.relu(y + yi)


# ---------------------------------------------------------------------------
if __name__ == "__main__":
    N, Cin, H, W = 2, 4, 16, 16
    Cout, stride = 8, 2

    key = jax.random.PRNGKey(0)
    ks = jax.random.split(key, 13)
    x = jax.random.normal(ks[0], (N, Cin, H, W), jnp.float32)

    params = dict(
        w1=0.1 * jax.random.normal(ks[1], (Cout, Cin, 3, 3), jnp.float32),
        b1=0.1 * jax.random.normal(ks[2], (Cout,), jnp.float32),
        g1=1.0 + 0.1 * jax.random.normal(ks[3], (Cout,), jnp.float32),
        be1=0.1 * jax.random.normal(ks[4], (Cout,), jnp.float32),
        w2=0.1 * jax.random.normal(ks[5], (Cout, Cout, 3, 3), jnp.float32),
        b2=0.1 * jax.random.normal(ks[6], (Cout,), jnp.float32),
        g2=1.0 + 0.1 * jax.random.normal(ks[7], (Cout,), jnp.float32),
        be2=0.1 * jax.random.normal(ks[8], (Cout,), jnp.float32),
        w3=0.1 * jax.random.normal(ks[9], (Cout, Cin, 1, 1), jnp.float32),
        b3=0.1 * jax.random.normal(ks[10], (Cout,), jnp.float32),
        g3=1.0 + 0.1 * jax.random.normal(ks[11], (Cout,), jnp.float32),
        be3=0.1 * jax.random.normal(ks[12], (Cout,), jnp.float32),
    )

    # Toy shape: row_tile=64 so the grid has >1 row tile, exercising both the
    # cross-tile BN-stats accumulation and the 2-core parallel axis.
    # Use the 512-row default at real sizes.
    def make_fwd(**kw):
        return jax.jit(functools.partial(resblock_forward, stride=stride,
                                         row_tile=64, **kw))

    fwd = make_fwd()                     # bf16 operands/intermediates (default)
    try:
        out = jax.block_until_ready(fwd(x, params))
    except Exception:
        # Most likely cause: this jax version rejects single-buffered constants
        # (pl.Buffered(1)) -- fall back to default double buffering and retry.
        USE_SINGLE_BUFFER_CONSTS = False
        fwd = make_fwd()
        out = jax.block_until_ready(fwd(x, params))

    ref = reference_resblock(x, params, stride)
    np.testing.assert_allclose(np.asarray(out), np.asarray(ref), rtol=1e-1, atol=1e-1)
    assert out.shape == (N, Cout, H // stride, W // stride)

    # f32 operand path: tight check of the conv/BN/fusion plumbing.
    out_f32 = jax.block_until_ready(make_fwd(matmul_dtype=jnp.float32)(x, params))
    np.testing.assert_allclose(np.asarray(out_f32), np.asarray(ref),
                               rtol=1e-3, atol=1e-3)

    print("KERNEL_OK")
</pallas_src>

<mosaic_0001>
module attributes {stable_mosaic.version = 11 : i64} {
  func.func @conv_stats_kernel(%arg0: i32, %arg1: i32, %arg2: memref<64x128xbf16, #tpu.memory_space<vmem>>, %arg3: memref<128x128xbf16, #tpu.memory_space<vmem>>, %arg4: memref<64x128xbf16, #tpu.memory_space<vmem>>, %arg5: memref<1x16x128xf32, #tpu.memory_space<vmem>>) attributes {dimension_semantics = [#tpu.dimension_semantics<parallel>, #tpu.dimension_semantics<arbitrary>], iteration_bounds = array<i64: 2, 1>, scalar_prefetch = 0 : i64, scratch_operands = 0 : i64, tpu.core_type = #tpu.core_type<tc>, window_params = [{transform_indices = @transform_0, window_bounds = array<i64: 64, 128>}, {pipeline_mode = #tpu.pipeline_mode<synchronous>, transform_indices = @transform_1, window_bounds = array<i64: 128, 128>}, {transform_indices = @transform_2, window_bounds = array<i64: 64, 128>}, {transform_indices = @transform_3, window_bounds = array<i64: 1, 16, 128>}]} {
    %c0_i32 = arith.constant 0 : i32
    %0 = arith.cmpi eq, %arg1, %c0_i32 : i32
    %1 = arith.extui %0 : i1 to i32
    %c0_i32_0 = arith.constant 0 : i32
    %2 = arith.cmpi ne, %1, %c0_i32_0 : i32
    scf.if %2 {
      %cst_14 = arith.constant 0.000000e+00 : f32
      %18 = vector.broadcast %cst_14 : f32 to vector<1x16x128xf32>
      %c0_15 = arith.constant 0 : index
      %c0_16 = arith.constant 0 : index
      %c0_17 = arith.constant 0 : index
      %19 = vector.load %arg5[%c0_15, %c0_16, %c0_17] : memref<1x16x128xf32, #tpu.memory_space<vmem>>, vector<1x16x128xf32>
      tpu.vector_store %arg5[%c0_15, %c0_16, %c0_17], %18 {strides = array<i32>} : memref<1x16x128xf32, #tpu.memory_space<vmem>>, vector<1x16x128xf32>,
    } else {
    }
    %c0 = arith.constant 0 : index
    %c0_1 = arith.constant 0 : index
    %3 = vector.load %arg2[%c0, %c0_1] : memref<64x128xbf16, #tpu.memory_space<vmem>>, vector<64x128xbf16>
    %c0_2 = arith.constant 0 : index
    %c0_3 = arith.constant 0 : index
    %4 = vector.load %arg3[%c0_2, %c0_3] : memref<128x128xbf16, #tpu.memory_space<vmem>>, vector<128x128xbf16>
    %cst = arith.constant dense<0.000000e+00> : vector<64x128xf32>
    %5 = tpu.matmul %3, %4, %cst {dimension_numbers = #tpu.dot_dimension_numbers<[1], [0], [0], [1], [0, 0, 1, 1], [], []>} : vector<64x128xbf16>, vector<128x128xbf16>, vector<64x128xf32> -> vector<64x128xf32>
    %6 = arith.truncf %5 : vector<64x128xf32> to vector<64x128xbf16>
    %c0_4 = arith.constant 0 : index
    %c0_5 = arith.constant 0 : index
    %7 = vector.load %arg4[%c0_4, %c0_5] : memref<64x128xbf16, #tpu.memory_space<vmem>>, vector<64x128xbf16>
    tpu.vector_store %arg4[%c0_4, %c0_5], %6 {strides = array<i32>} : memref<64x128xbf16, #tpu.memory_space<vmem>>, vector<64x128xbf16>,
    %8 = vector.shape_cast %5 : vector<64x128xf32> to vector<8x8x128xf32>
    %cst_6 = arith.constant dense<0.000000e+00> : vector<8x128xf32>
    %9 = vector.multi_reduction <add>, %8, %cst_6 [0] : vector<8x8x128xf32> to vector<8x128xf32>
    %10 = arith.mulf %5, %5 : vector<64x128xf32>
    %11 = vector.shape_cast %10 : vector<64x128xf32> to vector<8x8x128xf32>
    %cst_7 = arith.constant dense<0.000000e+00> : vector<8x128xf32>
    %12 = vector.multi_reduction <add>, %11, %cst_7 [0] : vector<8x8x128xf32> to vector<8x128xf32>
    %c0_8 = arith.constant 0 : index
    %c0_9 = arith.constant 0 : index
    %c0_10 = arith.constant 0 : index
    %13 = vector.load %arg5[%c0_8, %c0_9, %c0_10] : memref<1x16x128xf32, #tpu.memory_space<vmem>>, vector<1x16x128xf32>
    %14 = tpu.concatenate %9, %12 in 0 : vector<8x128xf32>, vector<8x128xf32> -> vector<16x128xf32>
    %15 = vector.shape_cast %14 : vector<16x128xf32> to vector<1x16x128xf32>
    %16 = arith.addf %13, %15 : vector<1x16x128xf32>
    %c0_11 = arith.constant 0 : index
    %c0_12 = arith.constant 0 : index
    %c0_13 = arith.constant 0 : index
    %17 = vector.load %arg5[%c0_11, %c0_12, %c0_13] : memref<1x16x128xf32, #tpu.memory_space<vmem>>, vector<1x16x128xf32>
    tpu.vector_store %arg5[%c0_11, %c0_12, %c0_13], %16 {strides = array<i32>} : memref<1x16x128xf32, #tpu.memory_space<vmem>>, vector<1x16x128xf32>,
    return
  }
  func.func @transform_0(%arg0: i32, %arg1: i32) -> (i32, i32) {
    %c1_i32 = arith.constant 1 : i32
    %0 = arith.muli %arg0, %c1_i32 : i32
    %1 = arith.addi %0, %arg1 : i32
    %c0_i32 = arith.constant 0 : i32
    %c0_i32_0 = arith.constant 0 : i32
    return %1, %c0_i32 : i32, i32
  }
  func.func @transform_1(%arg0: i32, %arg1: i32) -> (i32, i32) {
    %c0_i32 = arith.constant 0 : i32
    %c0_i32_0 = arith.constant 0 : i32
    %c0_i32_1 = arith.constant 0 : i32
    return %c0_i32, %c0_i32_0 : i32, i32
  }
  func.func @transform_2(%arg0: i32, %arg1: i32) -> (i32, i32) {
    %c1_i32 = arith.constant 1 : i32
    %0 = arith.muli %arg0, %c1_i32 : i32
    %1 = arith.addi %0, %arg1 : i32
    %c0_i32 = arith.constant 0 : i32
    %c0_i32_0 = arith.constant 0 : i32
    return %1, %c0_i32 : i32, i32
  }
  func.func @transform_3(%arg0: i32, %arg1: i32) -> (i32, i32, i32) {
    %c0_i32 = arith.constant 0 : i32
    %c0_i32_0 = arith.constant 0 : i32
    %c0_i32_1 = arith.constant 0 : i32
    return %arg0, %c0_i32, %c0_i32_0 : i32, i32, i32
  }
}

module attributes {stable_mosaic.version = 11 : i64} {
  func.func @bn_relu_kernel(%arg0: i32, %arg1: memref<128x128xbf16, #tpu.memory_space<vmem>>, %arg2: memref<1x128xf32, #tpu.memory_space<vmem>>, %arg3: memref<1x128xf32, #tpu.memory_space<vmem>>, %arg4: memref<128x128xbf16, #tpu.memory_space<vmem>>) attributes {dimension_semantics = [#tpu.dimension_semantics<parallel>], iteration_bounds = array<i64: 1>, scalar_prefetch = 0 : i64, scratch_operands = 0 : i64, tpu.core_type = #tpu.core_type<tc>, window_params = [{transform_indices = @transform_0, window_bounds = array<i64: 128, 128>}, {pipeline_mode = #tpu.pipeline_mode<synchronous>, transform_indices = @transform_1, window_bounds = array<i64: 1, 128>}, {pipeline_mode = #tpu.pipeline_mode<synchronous>, transform_indices = @transform_2, window_bounds = array<i64: 1, 128>}, {transform_indices = @transform_3, window_bounds = array<i64: 128, 128>}]} {
    %c0 = arith.constant 0 : index
    %c0_0 = arith.constant 0 : index
    %0 = vector.load %arg1[%c0, %c0_0] : memref<128x128xbf16, #tpu.memory_space<vmem>>, vector<128x128xbf16>
    %1 = arith.extf %0 : vector<128x128xbf16> to vector<128x128xf32>
    %c0_1 = arith.constant 0 : index
    %c0_2 = arith.constant 0 : index
    %2 = vector.load %arg2[%c0_1, %c0_2] : memref<1x128xf32, #tpu.memory_space<vmem>>, vector<1x128xf32>
    %3 = vector.broadcast %2 : vector<1x128xf32> to vector<128x128xf32>
    %4 = arith.mulf %1, %3 : vector<128x128xf32>
    %c0_3 = arith.constant 0 : index
    %c0_4 = arith.constant 0 : index
    %5 = vector.load %arg3[%c0_3, %c0_4] : memref<1x128xf32, #tpu.memory_space<vmem>>, vector<1x128xf32>
    %6 = vector.broadcast %5 : vector<1x128xf32> to vector<128x128xf32>
    %7 = arith.addf %4, %6 : vector<128x128xf32>
    %cst = arith.constant 0.000000e+00 : f32
    %8 = vector.broadcast %cst : f32 to vector<128x128xf32>
    %9 = arith.maximumf %7, %8 : vector<128x128xf32>
    %10 = arith.truncf %9 : vector<128x128xf32> to vector<128x128xbf16>
    %c0_5 = arith.constant 0 : index
    %c0_6 = arith.constant 0 : index
    %11 = vector.load %arg4[%c0_5, %c0_6] : memref<128x128xbf16, #tpu.memory_space<vmem>>, vector<128x128xbf16>
    tpu.vector_store %arg4[%c0_5, %c0_6], %10 {strides = array<i32>} : memref<128x128xbf16, #tpu.memory_space<vmem>>, vector<128x128xbf16>,
    return
  }
  func.func @transform_0(%arg0: i32) -> (i32, i32) {
    %c0_i32 = arith.constant 0 : i32
    %c0_i32_0 = arith.constant 0 : i32
    return %arg0, %c0_i32 : i32, i32
  }
  func.func @transform_1(%arg0: i32) -> (i32, i32) {
    %c0_i32 = arith.constant 0 : i32
    %c0_i32_0 = arith.constant 0 : i32
    %c0_i32_1 = arith.constant 0 : i32
    return %c0_i32, %c0_i32_0 : i32, i32
  }
  func.func @transform_2(%arg0: i32) -> (i32, i32) {
    %c0_i32 = arith.constant 0 : i32
    %c0_i32_0 = arith.constant 0 : i32
    %c0_i32_1 = arith.constant 0 : i32
    return %c0_i32, %c0_i32_0 : i32, i32
  }
  func.func @transform_3(%arg0: i32) -> (i32, i32) {
    %c0_i32 = arith.constant 0 : i32
    %c0_i32_0 = arith.constant 0 : i32
    return %arg0, %c0_i32 : i32, i32
  }
}

module attributes {stable_mosaic.version = 11 : i64} {
  func.func @dual_conv_stats_kernel(%arg0: i32, %arg1: i32, %arg2: memref<64x128xbf16, #tpu.memory_space<vmem>>, %arg3: memref<128x128xbf16, #tpu.memory_space<vmem>>, %arg4: memref<64x128xbf16, #tpu.memory_space<vmem>>, %arg5: memref<128x128xbf16, #tpu.memory_space<vmem>>, %arg6: memref<64x128xbf16, #tpu.memory_space<vmem>>, %arg7: memref<64x128xbf16, #tpu.memory_space<vmem>>, %arg8: memref<1x16x128xf32, #tpu.memory_space<vmem>>, %arg9: memref<1x16x128xf32, #tpu.memory_space<vmem>>) attributes {dimension_semantics = [#tpu.dimension_semantics<parallel>, #tpu.dimension_semantics<arbitrary>], iteration_bounds = array<i64: 2, 1>, scalar_prefetch = 0 : i64, scratch_operands = 0 : i64, tpu.core_type = #tpu.core_type<tc>, window_params = [{transform_indices = @transform_0, window_bounds = array<i64: 64, 128>}, {pipeline_mode = #tpu.pipeline_mode<synchronous>, transform_indices = @transform_1, window_bounds = array<i64: 128, 128>}, {transform_indices = @transform_2, window_bounds = array<i64: 64, 128>}, {pipeline_mode = #tpu.pipeline_mode<synchronous>, transform_indices = @transform_3, window_bounds = array<i64: 128, 128>}, {transform_indices = @transform_4, window_bounds = array<i64: 64, 128>}, {transform_indices = @transform_5, window_bounds = array<i64: 64, 128>}, {transform_indices = @transform_6, window_bounds = array<i64: 1, 16, 128>}, {transform_indices = @transform_7, window_bounds = array<i64: 1, 16, 128>}]} {
    %c0_i32 = arith.constant 0 : i32
    %0 = arith.cmpi eq, %arg1, %c0_i32 : i32
    %1 = arith.extui %0 : i1 to i32
    %c0_i32_0 = arith.constant 0 : i32
    %2 = arith.cmpi ne, %1, %c0_i32_0 : i32
    scf.if %2 {
      %cst_29 = arith.constant 0.000000e+00 : f32
      %33 = vector.broadcast %cst_29 : f32 to vector<1x16x128xf32>
      %c0_30 = arith.constant 0 : index
      %c0_31 = arith.constant 0 : index
      %c0_32 = arith.constant 0 : index
      %34 = vector.load %arg8[%c0_30, %c0_31, %c0_32] : memref<1x16x128xf32, #tpu.memory_space<vmem>>, vector<1x16x128xf32>
      tpu.vector_store %arg8[%c0_30, %c0_31, %c0_32], %33 {strides = array<i32>} : memref<1x16x128xf32, #tpu.memory_space<vmem>>, vector<1x16x128xf32>,
      %cst_33 = arith.constant 0.000000e+00 : f32
      %35 = vector.broadcast %cst_33 : f32 to vector<1x16x128xf32>
      %c0_34 = arith.constant 0 : index
      %c0_35 = arith.constant 0 : index
      %c0_36 = arith.constant 0 : index
      %36 = vector.load %arg9[%c0_34, %c0_35, %c0_36] : memref<1x16x128xf32, #tpu.memory_space<vmem>>, vector<1x16x128xf32>
      tpu.vector_store %arg9[%c0_34, %c0_35, %c0_36], %35 {strides = array<i32>} : memref<1x16x128xf32, #tpu.memory_space<vmem>>, vector<1x16x128xf32>,
    } else {
    }
    %c0 = arith.constant 0 : index
    %c0_1 = arith.constant 0 : index
    %3 = vector.load %arg2[%c0, %c0_1] : memref<64x128xbf16, #tpu.memory_space<vmem>>, vector<64x128xbf16>
    %c0_2 = arith.constant 0 : index
    %c0_3 = arith.constant 0 : index
    %4 = vector.load %arg3[%c0_2, %c0_3] : memref<128x128xbf16, #tpu.memory_space<vmem>>, vector<128x128xbf16>
    %cst = arith.constant dense<0.000000e+00> : vector<64x128xf32>
    %5 = tpu.matmul %3, %4, %cst {dimension_numbers = #tpu.dot_dimension_numbers<[1], [0], [0], [1], [0, 0, 1, 1], [], []>} : vector<64x128xbf16>, vector<128x128xbf16>, vector<64x128xf32> -> vector<64x128xf32>
    %c0_4 = arith.constant 0 : index
    %c0_5 = arith.constant 0 : index
    %6 = vector.load %arg4[%c0_4, %c0_5] : memref<64x128xbf16, #tpu.memory_space<vmem>>, vector<64x128xbf16>
    %c0_6 = arith.constant 0 : index
    %c0_7 = arith.constant 0 : index
    %7 = vector.load %arg5[%c0_6, %c0_7] : memref<128x128xbf16, #tpu.memory_space<vmem>>, vector<128x128xbf16>
    %cst_8 = arith.constant dense<0.000000e+00> : vector<64x128xf32>
    %8 = tpu.matmul %6, %7, %cst_8 {dimension_numbers = #tpu.dot_dimension_numbers<[1], [0], [0], [1], [0, 0, 1, 1], [], []>} : vector<64x128xbf16>, vector<128x128xbf16>, vector<64x128xf32> -> vector<64x128xf32>
    %9 = arith.truncf %5 : vector<64x128xf32> to vector<64x128xbf16>
    %c0_9 = arith.constant 0 : index
    %c0_10 = arith.constant 0 : index
    %10 = vector.load %arg6[%c0_9, %c0_10] : memref<64x128xbf16, #tpu.memory_space<vmem>>, vector<64x128xbf16>
    tpu.vector_store %arg6[%c0_9, %c0_10], %9 {strides = array<i32>} : memref<64x128xbf16, #tpu.memory_space<vmem>>, vector<64x128xbf16>,
    %11 = arith.truncf %8 : vector<64x128xf32> to vector<64x128xbf16>
    %c0_11 = arith.constant 0 : index
    %c0_12 = arith.constant 0 : index
    %12 = vector.load %arg7[%c0_11, %c0_12] : memref<64x128xbf16, #tpu.memory_space<vmem>>, vector<64x128xbf16>
    tpu.vector_store %arg7[%c0_11, %c0_12], %11 {strides = array<i32>} : memref<64x128xbf16, #tpu.memory_space<vmem>>, vector<64x128xbf16>,
    %13 = vector.shape_cast %5 : vector<64x128xf32> to vector<8x8x128xf32>
    %cst_13 = arith.constant dense<0.000000e+00> : vector<8x128xf32>
    %14 = vector.multi_reduction <add>, %13, %cst_13 [0] : vector<8x8x128xf32> to vector<8x128xf32>
    %15 = arith.mulf %5, %5 : vector<64x128xf32>
    %16 = vector.shape_cast %15 : vector<64x128xf32> to vector<8x8x128xf32>
    %cst_14 = arith.constant dense<0.000000e+00> : vector<8x128xf32>
    %17 = vector.multi_reduction <add>, %16, %cst_14 [0] : vector<8x8x128xf32> to vector<8x128xf32>
    %c0_15 = arith.constant 0 : index
    %c0_16 = arith.constant 0 : index
    %c0_17 = arith.constant 0 : index
    %18 = vector.load %arg8[%c0_15, %c0_16, %c0_17] : memref<1x16x128xf32, #tpu.memory_space<vmem>>, vector<1x16x128xf32>
    %19 = tpu.concatenate %14, %17 in 0 : vector<8x128xf32>, vector<8x128xf32> -> vector<16x128xf32>
    %20 = vector.shape_cast %19 : vector<16x128xf32> to vector<1x16x128xf32>
    %21 = arith.addf %18, %20 : vector<1x16x128xf32>
    %c0_18 = arith.constant 0 : index
    %c0_19 = arith.constant 0 : index
    %c0_20 = arith.constant 0 : index
    %22 = vector.load %arg8[%c0_18, %c0_19, %c0_20] : memref<1x16x128xf32, #tpu.memory_space<vmem>>, vector<1x16x128xf32>
    tpu.vector_store %arg8[%c0_18, %c0_19, %c0_20], %21 {strides = array<i32>} : memref<1x16x128xf32, #tpu.memory_space<vmem>>, vector<1x16x128xf32>,
    %23 = vector.shape_cast %8 : vector<64x128xf32> to vector<8x8x128xf32>
    %cst_21 = arith.constant dense<0.000000e+00> : vector<8x128xf32>
    %24 = vector.multi_reduction <add>, %23, %cst_21 [0] : vector<8x8x128xf32> to vector<8x128xf32>
    %25 = arith.mulf %8, %8 : vector<64x128xf32>
    %26 = vector.shape_cast %25 : vector<64x128xf32> to vector<8x8x128xf32>
    %cst_22 = arith.constant dense<0.000000e+00> : vector<8x128xf32>
    %27 = vector.multi_reduction <add>, %26, %cst_22 [0] : vector<8x8x128xf32> to vector<8x128xf32>
    %c0_23 = arith.constant 0 : index
    %c0_24 = arith.constant 0 : index
    %c0_25 = arith.constant 0 : index
    %28 = vector.load %arg9[%c0_23, %c0_24, %c0_25] : memref<1x16x128xf32, #tpu.memory_space<vmem>>, vector<1x16x128xf32>
    %29 = tpu.concatenate %24, %27 in 0 : vector<8x128xf32>, vector<8x128xf32> -> vector<16x128xf32>
    %30 = vector.shape_cast %29 : vector<16x128xf32> to vector<1x16x128xf32>
    %31 = arith.addf %28, %30 : vector<1x16x128xf32>
    %c0_26 = arith.constant 0 : index
    %c0_27 = arith.constant 0 : index
    %c0_28 = arith.constant 0 : index
    %32 = vector.load %arg9[%c0_26, %c0_27, %c0_28] : memref<1x16x128xf32, #tpu.memory_space<vmem>>, vector<1x16x128xf32>
    tpu.vector_store %arg9[%c0_26, %c0_27, %c0_28], %31 {strides = array<i32>} : memref<1x16x128xf32, #tpu.memory_space<vmem>>, vector<1x16x128xf32>,
    return
  }
  func.func @transform_0(%arg0: i32, %arg1: i32) -> (i32, i32) {
    %c1_i32 = arith.constant 1 : i32
    %0 = arith.muli %arg0, %c1_i32 : i32
    %1 = arith.addi %0, %arg1 : i32
    %c0_i32 = arith.constant 0 : i32
    %c0_i32_0 = arith.constant 0 : i32
    return %1, %c0_i32 : i32, i32
  }
  func.func @transform_1(%arg0: i32, %arg1: i32) -> (i32, i32) {
    %c0_i32 = arith.constant 0 : i32
    %c0_i32_0 = arith.constant 0 : i32
    %c0_i32_1 = arith.constant 0 : i32
    return %c0_i32, %c0_i32_0 : i32, i32
  }
  func.func @transform_2(%arg0: i32, %arg1: i32) -> (i32, i32) {
    %c1_i32 = arith.constant 1 : i32
    %0 = arith.muli %arg0, %c1_i32 : i32
    %1 = arith.addi %0, %arg1 : i32
    %c0_i32 = arith.constant 0 : i32
    %c0_i32_0 = arith.constant 0 : i32
    return %1, %c0_i32 : i32, i32
  }
  func.func @transform_3(%arg0: i32, %arg1: i32) -> (i32, i32) {
    %c0_i32 = arith.constant 0 : i32
    %c0_i32_0 = arith.constant 0 : i32
    %c0_i32_1 = arith.constant 0 : i32
    return %c0_i32, %c0_i32_0 : i32, i32
  }
  func.func @transform_4(%arg0: i32, %arg1: i32) -> (i32, i32) {
    %c1_i32 = arith.constant 1 : i32
    %0 = arith.muli %arg0, %c1_i32 : i32
    %1 = arith.addi %0, %arg1 : i32
    %c0_i32 = arith.constant 0 : i32
    %c0_i32_0 = arith.constant 0 : i32
    return %1, %c0_i32 : i32, i32
  }
  func.func @transform_5(%arg0: i32, %arg1: i32) -> (i32, i32) {
    %c1_i32 = arith.constant 1 : i32
    %0 = arith.muli %arg0, %c1_i32 : i32
    %1 = arith.addi %0, %arg1 : i32
    %c0_i32 = arith.constant 0 : i32
    %c0_i32_0 = arith.constant 0 : i32
    return %1, %c0_i32 : i32, i32
  }
  func.func @transform_6(%arg0: i32, %arg1: i32) -> (i32, i32, i32) {
    %c0_i32 = arith.constant 0 : i32
    %c0_i32_0 = arith.constant 0 : i32
    %c0_i32_1 = arith.constant 0 : i32
    return %arg0, %c0_i32, %c0_i32_0 : i32, i32, i32
  }
  func.func @transform_7(%arg0: i32, %arg1: i32) -> (i32, i32, i32) {
    %c0_i32 = arith.constant 0 : i32
    %c0_i32_0 = arith.constant 0 : i32
    %c0_i32_1 = arith.constant 0 : i32
    return %arg0, %c0_i32, %c0_i32_0 : i32, i32, i32
  }
}

module attributes {stable_mosaic.version = 11 : i64} {
  func.func @tail_apply_kernel(%arg0: i32, %arg1: memref<128x128xbf16, #tpu.memory_space<vmem>>, %arg2: memref<128x128xbf16, #tpu.memory_space<vmem>>, %arg3: memref<1x128xf32, #tpu.memory_space<vmem>>, %arg4: memref<1x128xf32, #tpu.memory_space<vmem>>, %arg5: memref<1x128xf32, #tpu.memory_space<vmem>>, %arg6: memref<1x128xf32, #tpu.memory_space<vmem>>, %arg7: memref<128x128xf32, #tpu.memory_space<vmem>>) attributes {dimension_semantics = [#tpu.dimension_semantics<parallel>], iteration_bounds = array<i64: 1>, scalar_prefetch = 0 : i64, scratch_operands = 0 : i64, tpu.core_type = #tpu.core_type<tc>, window_params = [{transform_indices = @transform_0, window_bounds = array<i64: 128, 128>}, {transform_indices = @transform_1, window_bounds = array<i64: 128, 128>}, {pipeline_mode = #tpu.pipeline_mode<synchronous>, transform_indices = @transform_2, window_bounds = array<i64: 1, 128>}, {pipeline_mode = #tpu.pipeline_mode<synchronous>, transform_indices = @transform_3, window_bounds = array<i64: 1, 128>}, {pipeline_mode = #tpu.pipeline_mode<synchronous>, transform_indices = @transform_4, window_bounds = array<i64: 1, 128>}, {pipeline_mode = #tpu.pipeline_mode<synchronous>, transform_indices = @transform_5, window_bounds = array<i64: 1, 128>}, {transform_indices = @transform_6, window_bounds = array<i64: 128, 128>}]} {
    %c0 = arith.constant 0 : index
    %c0_0 = arith.constant 0 : index
    %0 = vector.load %arg1[%c0, %c0_0] : memref<128x128xbf16, #tpu.memory_space<vmem>>, vector<128x128xbf16>
    %1 = arith.extf %0 : vector<128x128xbf16> to vector<128x128xf32>
    %c0_1 = arith.constant 0 : index
    %c0_2 = arith.constant 0 : index
    %2 = vector.load %arg3[%c0_1, %c0_2] : memref<1x128xf32, #tpu.memory_space<vmem>>, vector<1x128xf32>
    %3 = vector.broadcast %2 : vector<1x128xf32> to vector<128x128xf32>
    %4 = arith.mulf %1, %3 : vector<128x128xf32>
    %c0_3 = arith.constant 0 : index
    %c0_4 = arith.constant 0 : index
    %5 = vector.load %arg4[%c0_3, %c0_4] : memref<1x128xf32, #tpu.memory_space<vmem>>, vector<1x128xf32>
    %6 = vector.broadcast %5 : vector<1x128xf32> to vector<128x128xf32>
    %7 = arith.addf %4, %6 : vector<128x128xf32>
    %c0_5 = arith.constant 0 : index
    %c0_6 = arith.constant 0 : index
    %8 = vector.load %arg2[%c0_5, %c0_6] : memref<128x128xbf16, #tpu.memory_space<vmem>>, vector<128x128xbf16>
    %9 = arith.extf %8 : vector<128x128xbf16> to vector<128x128xf32>
    %c0_7 = arith.constant 0 : index
    %c0_8 = arith.constant 0 : index
    %10 = vector.load %arg5[%c0_7, %c0_8] : memref<1x128xf32, #tpu.memory_space<vmem>>, vector<1x128xf32>
    %11 = vector.broadcast %10 : vector<1x128xf32> to vector<128x128xf32>
    %12 = arith.mulf %9, %11 : vector<128x128xf32>
    %c0_9 = arith.constant 0 : index
    %c0_10 = arith.constant 0 : index
    %13 = vector.load %arg6[%c0_9, %c0_10] : memref<1x128xf32, #tpu.memory_space<vmem>>, vector<1x128xf32>
    %14 = vector.broadcast %13 : vector<1x128xf32> to vector<128x128xf32>
    %15 = arith.addf %12, %14 : vector<128x128xf32>
    %16 = arith.addf %7, %15 : vector<128x128xf32>
    %cst = arith.constant 0.000000e+00 : f32
    %17 = vector.broadcast %cst : f32 to vector<128x128xf32>
    %18 = arith.maximumf %16, %17 : vector<128x128xf32>
    %c0_11 = arith.constant 0 : index
    %c0_12 = arith.constant 0 : index
    %19 = vector.load %arg7[%c0_11, %c0_12] : memref<128x128xf32, #tpu.memory_space<vmem>>, vector<128x128xf32>
    tpu.vector_store %arg7[%c0_11, %c0_12], %18 {strides = array<i32>} : memref<128x128xf32, #tpu.memory_space<vmem>>, vector<128x128xf32>,
    return
  }
  func.func @transform_0(%arg0: i32) -> (i32, i32) {
    %c0_i32 = arith.constant 0 : i32
    %c0_i32_0 = arith.constant 0 : i32
    return %arg0, %c0_i32 : i32, i32
  }
  func.func @transform_1(%arg0: i32) -> (i32, i32) {
    %c0_i32 = arith.constant 0 : i32
    %c0_i32_0 = arith.constant 0 : i32
    return %arg0, %c0_i32 : i32, i32
  }
  func.func @transform_2(%arg0: i32) -> (i32, i32) {
    %c0_i32 = arith.constant 0 : i32
    %c0_i32_0 = arith.constant 0 : i32
    %c0_i32_1 = arith.constant 0 : i32
    return %c0_i32, %c0_i32_0 : i32, i32
  }
  func.func @transform_3(%arg0: i32) -> (i32, i32) {
    %c0_i32 = arith.constant 0 : i32
    %c0_i32_0 = arith.constant 0 : i32
    %c0_i32_1 = arith.constant 0 : i32
    return %c0_i32, %c0_i32_0 : i32, i32
  }
  func.func @transform_4(%arg0: i32) -> (i32, i32) {
    %c0_i32 = arith.constant 0 : i32
    %c0_i32_0 = arith.constant 0 : i32
    %c0_i32_1 = arith.constant 0 : i32
    return %c0_i32, %c0_i32_0 : i32, i32
  }
  func.func @transform_5(%arg0: i32) -> (i32, i32) {
    %c0_i32 = arith.constant 0 : i32
    %c0_i32_0 = arith.constant 0 : i32
    %c0_i32_1 = arith.constant 0 : i32
    return %c0_i32, %c0_i32_0 : i32, i32
  }
  func.func @transform_6(%arg0: i32) -> (i32, i32) {
    %c0_i32 = arith.constant 0 : i32
    %c0_i32_0 = arith.constant 0 : i32
    return %arg0, %c0_i32 : i32, i32
  }
}

module attributes {stable_mosaic.version = 11 : i64} {
  func.func @conv_stats_kernel(%arg0: i32, %arg1: i32, %arg2: memref<64x128xbf16, #tpu.memory_space<vmem>>, %arg3: memref<128x128xbf16, #tpu.memory_space<vmem>>, %arg4: memref<64x128xbf16, #tpu.memory_space<vmem>>, %arg5: memref<1x16x128xf32, #tpu.memory_space<vmem>>) attributes {dimension_semantics = [#tpu.dimension_semantics<parallel>, #tpu.dimension_semantics<arbitrary>], iteration_bounds = array<i64: 2, 1>, scalar_prefetch = 0 : i64, scratch_operands = 0 : i64, tpu.core_type = #tpu.core_type<tc>, window_params = [{transform_indices = @transform_0, window_bounds = array<i64: 64, 128>}, {pipeline_mode = #tpu.pipeline_mode<synchronous>, transform_indices = @transform_1, window_bounds = array<i64: 128, 128>}, {transform_indices = @transform_2, window_bounds = array<i64: 64, 128>}, {transform_indices = @transform_3, window_bounds = array<i64: 1, 16, 128>}]} {
    %c0_i32 = arith.constant 0 : i32
    %0 = arith.cmpi eq, %arg1, %c0_i32 : i32
    %1 = arith.extui %0 : i1 to i32
    %c0_i32_0 = arith.constant 0 : i32
    %2 = arith.cmpi ne, %1, %c0_i32_0 : i32
    scf.if %2 {
      %cst_14 = arith.constant 0.000000e+00 : f32
      %18 = vector.broadcast %cst_14 : f32 to vector<1x16x128xf32>
      %c0_15 = arith.constant 0 : index
      %c0_16 = arith.constant 0 : index
      %c0_17 = arith.constant 0 : index
      %19 = vector.load %arg5[%c0_15, %c0_16, %c0_17] : memref<1x16x128xf32, #tpu.memory_space<vmem>>, vector<1x16x128xf32>
      tpu.vector_store %arg5[%c0_15, %c0_16, %c0_17], %18 {strides = array<i32>} : memref<1x16x128xf32, #tpu.memory_space<vmem>>, vector<1x16x128xf32>,
    } else {
    }
    %c0 = arith.constant 0 : index
    %c0_1 = arith.constant 0 : index
    %3 = vector.load %arg2[%c0, %c0_1] : memref<64x128xbf16, #tpu.memory_space<vmem>>, vector<64x128xbf16>
    %c0_2 = arith.constant 0 : index
    %c0_3 = arith.constant 0 : index
    %4 = vector.load %arg3[%c0_2, %c0_3] : memref<128x128xbf16, #tpu.memory_space<vmem>>, vector<128x128xbf16>
    %cst = arith.constant dense<0.000000e+00> : vector<64x128xf32>
    %5 = tpu.matmul %3, %4, %cst {dimension_numbers = #tpu.dot_dimension_numbers<[1], [0], [0], [1], [0, 0, 1, 1], [], []>} : vector<64x128xbf16>, vector<128x128xbf16>, vector<64x128xf32> -> vector<64x128xf32>
    %6 = arith.truncf %5 : vector<64x128xf32> to vector<64x128xbf16>
    %c0_4 = arith.constant 0 : index
    %c0_5 = arith.constant 0 : index
    %7 = vector.load %arg4[%c0_4, %c0_5] : memref<64x128xbf16, #tpu.memory_space<vmem>>, vector<64x128xbf16>
    tpu.vector_store %arg4[%c0_4, %c0_5], %6 {strides = array<i32>} : memref<64x128xbf16, #tpu.memory_space<vmem>>, vector<64x128xbf16>,
    %8 = vector.shape_cast %5 : vector<64x128xf32> to vector<8x8x128xf32>
    %cst_6 = arith.constant dense<0.000000e+00> : vector<8x128xf32>
    %9 = vector.multi_reduction <add>, %8, %cst_6 [0] : vector<8x8x128xf32> to vector<8x128xf32>
    %10 = arith.mulf %5, %5 : vector<64x128xf32>
    %11 = vector.shape_cast %10 : vector<64x128xf32> to vector<8x8x128xf32>
    %cst_7 = arith.constant dense<0.000000e+00> : vector<8x128xf32>
    %12 = vector.multi_reduction <add>, %11, %cst_7 [0] : vector<8x8x128xf32> to vector<8x128xf32>
    %c0_8 = arith.constant 0 : index
    %c0_9 = arith.constant 0 : index
    %c0_10 = arith.constant 0 : index
    %13 = vector.load %arg5[%c0_8, %c0_9, %c0_10] : memref<1x16x128xf32, #tpu.memory_space<vmem>>, vector<1x16x128xf32>
    %14 = tpu.concatenate %9, %12 in 0 : vector<8x128xf32>, vector<8x128xf32> -> vector<16x128xf32>
    %15 = vector.shape_cast %14 : vector<16x128xf32> to vector<1x16x128xf32>
    %16 = arith.addf %13, %15 : vector<1x16x128xf32>
    %c0_11 = arith.constant 0 : index
    %c0_12 = arith.constant 0 : index
    %c0_13 = arith.constant 0 : index
    %17 = vector.load %arg5[%c0_11, %c0_12, %c0_13] : memref<1x16x128xf32, #tpu.memory_space<vmem>>, vector<1x16x128xf32>
    tpu.vector_store %arg5[%c0_11, %c0_12, %c0_13], %16 {strides = array<i32>} : memref<1x16x128xf32, #tpu.memory_space<vmem>>, vector<1x16x128xf32>,
    return
  }
  func.func @transform_0(%arg0: i32, %arg1: i32) -> (i32, i32) {
    %c1_i32 = arith.constant 1 : i32
    %0 = arith.muli %arg0, %c1_i32 : i32
    %1 = arith.addi %0, %arg1 : i32
    %c0_i32 = arith.constant 0 : i32
    %c0_i32_0 = arith.constant 0 : i32
    return %1, %c0_i32 : i32, i32
  }
  func.func @transform_1(%arg0: i32, %arg1: i32) -> (i32, i32) {
    %c0_i32 = arith.constant 0 : i32
    %c0_i32_0 = arith.constant 0 : i32
    %c0_i32_1 = arith.constant 0 : i32
    return %c0_i32, %c0_i32_0 : i32, i32
  }
  func.func @transform_2(%arg0: i32, %arg1: i32) -> (i32, i32) {
    %c1_i32 = arith.constant 1 : i32
    %0 = arith.muli %arg0, %c1_i32 : i32
    %1 = arith.addi %0, %arg1 : i32
    %c0_i32 = arith.constant 0 : i32
    %c0_i32_0 = arith.constant 0 : i32
    return %1, %c0_i32 : i32, i32
  }
  func.func @transform_3(%arg0: i32, %arg1: i32) -> (i32, i32, i32) {
    %c0_i32 = arith.constant 0 : i32
    %c0_i32_0 = arith.constant 0 : i32
    %c0_i32_1 = arith.constant 0 : i32
    return %arg0, %c0_i32, %c0_i32_0 : i32, i32, i32
  }
}

module attributes {stable_mosaic.version = 11 : i64} {
  func.func @bn_relu_kernel(%arg0: i32, %arg1: memref<128x128xbf16, #tpu.memory_space<vmem>>, %arg2: memref<1x128xf32, #tpu.memory_space<vmem>>, %arg3: memref<1x128xf32, #tpu.memory_space<vmem>>, %arg4: memref<128x128xbf16, #tpu.memory_space<vmem>>) attributes {dimension_semantics = [#tpu.dimension_semantics<parallel>], iteration_bounds = array<i64: 1>, scalar_prefetch = 0 : i64, scratch_operands = 0 : i64, tpu.core_type = #tpu.core_type<tc>, window_params = [{transform_indices = @transform_0, window_bounds = array<i64: 128, 128>}, {pipeline_mode = #tpu.pipeline_mode<synchronous>, transform_indices = @transform_1, window_bounds = array<i64: 1, 128>}, {pipeline_mode = #tpu.pipeline_mode<synchronous>, transform_indices = @transform_2, window_bounds = array<i64: 1, 128>}, {transform_indices = @transform_3, window_bounds = array<i64: 128, 128>}]} {
    %c0 = arith.constant 0 : index
    %c0_0 = arith.constant 0 : index
    %0 = vector.load %arg1[%c0, %c0_0] : memref<128x128xbf16, #tpu.memory_space<vmem>>, vector<128x128xbf16>
    %1 = arith.extf %0 : vector<128x128xbf16> to vector<128x128xf32>
    %c0_1 = arith.constant 0 : index
    %c0_2 = arith.constant 0 : index
    %2 = vector.load %arg2[%c0_1, %c0_2] : memref<1x128xf32, #tpu.memory_space<vmem>>, vector<1x128xf32>
    %3 = vector.broadcast %2 : vector<1x128xf32> to vector<128x128xf32>
    %4 = arith.mulf %1, %3 : vector<128x128xf32>
    %c0_3 = arith.constant 0 : index
    %c0_4 = arith.constant 0 : index
    %5 = vector.load %arg3[%c0_3, %c0_4] : memref<1x128xf32, #tpu.memory_space<vmem>>, vector<1x128xf32>
    %6 = vector.broadcast %5 : vector<1x128xf32> to vector<128x128xf32>
    %7 = arith.addf %4, %6 : vector<128x128xf32>
    %cst = arith.constant 0.000000e+00 : f32
    %8 = vector.broadcast %cst : f32 to vector<128x128xf32>
    %9 = arith.maximumf %7, %8 : vector<128x128xf32>
    %10 = arith.truncf %9 : vector<128x128xf32> to vector<128x128xbf16>
    %c0_5 = arith.constant 0 : index
    %c0_6 = arith.constant 0 : index
    %11 = vector.load %arg4[%c0_5, %c0_6] : memref<128x128xbf16, #tpu.memory_space<vmem>>, vector<128x128xbf16>
    tpu.vector_store %arg4[%c0_5, %c0_6], %10 {strides = array<i32>} : memref<128x128xbf16, #tpu.memory_space<vmem>>, vector<128x128xbf16>,
    return
  }
  func.func @transform_0(%arg0: i32) -> (i32, i32) {
    %c0_i32 = arith.constant 0 : i32
    %c0_i32_0 = arith.constant 0 : i32
    return %arg0, %c0_i32 : i32, i32
  }
  func.func @transform_1(%arg0: i32) -> (i32, i32) {
    %c0_i32 = arith.constant 0 : i32
    %c0_i32_0 = arith.constant 0 : i32
    %c0_i32_1 = arith.constant 0 : i32
    return %c0_i32, %c0_i32_0 : i32, i32
  }
  func.func @transform_2(%arg0: i32) -> (i32, i32) {
    %c0_i32 = arith.constant 0 : i32
    %c0_i32_0 = arith.constant 0 : i32
    %c0_i32_1 = arith.constant 0 : i32
    return %c0_i32, %c0_i32_0 : i32, i32
  }
  func.func @transform_3(%arg0: i32) -> (i32, i32) {
    %c0_i32 = arith.constant 0 : i32
    %c0_i32_0 = arith.constant 0 : i32
    return %arg0, %c0_i32 : i32, i32
  }
}

module attributes {stable_mosaic.version = 11 : i64} {
  func.func @tail_apply_kernel(%arg0: i32, %arg1: memref<128x128xbf16, #tpu.memory_space<vmem>>, %arg2: memref<128x128xbf16, #tpu.memory_space<vmem>>, %arg3: memref<1x128xf32, #tpu.memory_space<vmem>>, %arg4: memref<1x128xf32, #tpu.memory_space<vmem>>, %arg5: memref<1x128xf32, #tpu.memory_space<vmem>>, %arg6: memref<1x128xf32, #tpu.memory_space<vmem>>, %arg7: memref<128x128xf32, #tpu.memory_space<vmem>>) attributes {dimension_semantics = [#tpu.dimension_semantics<parallel>], iteration_bounds = array<i64: 1>, scalar_prefetch = 0 : i64, scratch_operands = 0 : i64, tpu.core_type = #tpu.core_type<tc>, window_params = [{transform_indices = @transform_0, window_bounds = array<i64: 128, 128>}, {transform_indices = @transform_1, window_bounds = array<i64: 128, 128>}, {pipeline_mode = #tpu.pipeline_mode<synchronous>, transform_indices = @transform_2, window_bounds = array<i64: 1, 128>}, {pipeline_mode = #tpu.pipeline_mode<synchronous>, transform_indices = @transform_3, window_bounds = array<i64: 1, 128>}, {pipeline_mode = #tpu.pipeline_mode<synchronous>, transform_indices = @transform_4, window_bounds = array<i64: 1, 128>}, {pipeline_mode = #tpu.pipeline_mode<synchronous>, transform_indices = @transform_5, window_bounds = array<i64: 1, 128>}, {transform_indices = @transform_6, window_bounds = array<i64: 128, 128>}]} {
    %c0 = arith.constant 0 : index
    %c0_0 = arith.constant 0 : index
    %0 = vector.load %arg1[%c0, %c0_0] : memref<128x128xbf16, #tpu.memory_space<vmem>>, vector<128x128xbf16>
    %1 = arith.extf %0 : vector<128x128xbf16> to vector<128x128xf32>
    %c0_1 = arith.constant 0 : index
    %c0_2 = arith.constant 0 : index
    %2 = vector.load %arg3[%c0_1, %c0_2] : memref<1x128xf32, #tpu.memory_space<vmem>>, vector<1x128xf32>
    %3 = vector.broadcast %2 : vector<1x128xf32> to vector<128x128xf32>
    %4 = arith.mulf %1, %3 : vector<128x128xf32>
    %c0_3 = arith.constant 0 : index
    %c0_4 = arith.constant 0 : index
    %5 = vector.load %arg4[%c0_3, %c0_4] : memref<1x128xf32, #tpu.memory_space<vmem>>, vector<1x128xf32>
    %6 = vector.broadcast %5 : vector<1x128xf32> to vector<128x128xf32>
    %7 = arith.addf %4, %6 : vector<128x128xf32>
    %c0_5 = arith.constant 0 : index
    %c0_6 = arith.constant 0 : index
    %8 = vector.load %arg2[%c0_5, %c0_6] : memref<128x128xbf16, #tpu.memory_space<vmem>>, vector<128x128xbf16>
    %9 = arith.extf %8 : vector<128x128xbf16> to vector<128x128xf32>
    %c0_7 = arith.constant 0 : index
    %c0_8 = arith.constant 0 : index
    %10 = vector.load %arg5[%c0_7, %c0_8] : memref<1x128xf32, #tpu.memory_space<vmem>>, vector<1x128xf32>
    %11 = vector.broadcast %10 : vector<1x128xf32> to vector<128x128xf32>
    %12 = arith.mulf %9, %11 : vector<128x128xf32>
    %c0_9 = arith.constant 0 : index
    %c0_10 = arith.constant 0 : index
    %13 = vector.load %arg6[%c0_9, %c0_10] : memref<1x128xf32, #tpu.memory_space<vmem>>, vector<1x128xf32>
    %14 = vector.broadcast %13 : vector<1x128xf32> to vector<128x128xf32>
    %15 = arith.addf %12, %14 : vector<128x128xf32>
    %16 = arith.addf %7, %15 : vector<128x128xf32>
    %cst = arith.constant 0.000000e+00 : f32
    %17 = vector.broadcast %cst : f32 to vector<128x128xf32>
    %18 = arith.maximumf %16, %17 : vector<128x128xf32>
    %c0_11 = arith.constant 0 : index
    %c0_12 = arith.constant 0 : index
    %19 = vector.load %arg7[%c0_11, %c0_12] : memref<128x128xf32, #tpu.memory_space<vmem>>, vector<128x128xf32>
    tpu.vector_store %arg7[%c0_11, %c0_12], %18 {strides = array<i32>} : memref<128x128xf32, #tpu.memory_space<vmem>>, vector<128x128xf32>,
    return
  }
  func.func @transform_0(%arg0: i32) -> (i32, i32) {
    %c0_i32 = arith.constant 0 : i32
    %c0_i32_0 = arith.constant 0 : i32
    return %arg0, %c0_i32 : i32, i32
  }
  func.func @transform_1(%arg0: i32) -> (i32, i32) {
    %c0_i32 = arith.constant 0 : i32
    %c0_i32_0 = arith.constant 0 : i32
    return %arg0, %c0_i32 : i32, i32
  }
  func.func @transform_2(%arg0: i32) -> (i32, i32) {
    %c0_i32 = arith.constant 0 : i32
    %c0_i32_0 = arith.constant 0 : i32
    %c0_i32_1 = arith.constant 0 : i32
    return %c0_i32, %c0_i32_0 : i32, i32
  }
  func.func @transform_3(%arg0: i32) -> (i32, i32) {
    %c0_i32 = arith.constant 0 : i32
    %c0_i32_0 = arith.constant 0 : i32
    %c0_i32_1 = arith.constant 0 : i32
    return %c0_i32, %c0_i32_0 : i32, i32
  }
  func.func @transform_4(%arg0: i32) -> (i32, i32) {
    %c0_i32 = arith.constant 0 : i32
    %c0_i32_0 = arith.constant 0 : i32
    %c0_i32_1 = arith.constant 0 : i32
    return %c0_i32, %c0_i32_0 : i32, i32
  }
  func.func @transform_5(%arg0: i32) -> (i32, i32) {
    %c0_i32 = arith.constant 0 : i32
    %c0_i32_0 = arith.constant 0 : i32
    %c0_i32_1 = arith.constant 0 : i32
    return %c0_i32, %c0_i32_0 : i32, i32
  }
  func.func @transform_6(%arg0: i32) -> (i32, i32) {
    %c0_i32 = arith.constant 0 : i32
    %c0_i32_0 = arith.constant 0 : i32
    return %arg0, %c0_i32 : i32, i32
  }
}

module attributes {stable_mosaic.version = 11 : i64} {
  func.func @dual_conv_stats_kernel(%arg0: i32, %arg1: i32, %arg2: memref<64x128xbf16, #tpu.memory_space<vmem>>, %arg3: memref<128x128xbf16, #tpu.memory_space<vmem>>, %arg4: memref<64x128xbf16, #tpu.memory_space<vmem>>, %arg5: memref<128x128xbf16, #tpu.memory_space<vmem>>, %arg6: memref<64x128xbf16, #tpu.memory_space<vmem>>, %arg7: memref<64x128xbf16, #tpu.memory_space<vmem>>, %arg8: memref<1x16x128xf32, #tpu.memory_space<vmem>>, %arg9: memref<1x16x128xf32, #tpu.memory_space<vmem>>) attributes {dimension_semantics = [#tpu.dimension_semantics<parallel>, #tpu.dimension_semantics<arbitrary>], iteration_bounds = array<i64: 2, 1>, scalar_prefetch = 0 : i64, scratch_operands = 0 : i64, tpu.core_type = #tpu.core_type<tc>, window_params = [{transform_indices = @transform_0, window_bounds = array<i64: 64, 128>}, {pipeline_mode = #tpu.pipeline_mode<synchronous>, transform_indices = @transform_1, window_bounds = array<i64: 128, 128>}, {transform_indices = @transform_2, window_bounds = array<i64: 64, 128>}, {pipeline_mode = #tpu.pipeline_mode<synchronous>, transform_indices = @transform_3, window_bounds = array<i64: 128, 128>}, {transform_indices = @transform_4, window_bounds = array<i64: 64, 128>}, {transform_indices = @transform_5, window_bounds = array<i64: 64, 128>}, {transform_indices = @transform_6, window_bounds = array<i64: 1, 16, 128>}, {transform_indices = @transform_7, window_bounds = array<i64: 1, 16, 128>}]} {
    %c0_i32 = arith.constant 0 : i32
    %0 = arith.cmpi eq, %arg1, %c0_i32 : i32
    %1 = arith.extui %0 : i1 to i32
    %c0_i32_0 = arith.constant 0 : i32
    %2 = arith.cmpi ne, %1, %c0_i32_0 : i32
    scf.if %2 {
      %cst_29 = arith.constant 0.000000e+00 : f32
      %33 = vector.broadcast %cst_29 : f32 to vector<1x16x128xf32>
      %c0_30 = arith.constant 0 : index
      %c0_31 = arith.constant 0 : index
      %c0_32 = arith.constant 0 : index
      %34 = vector.load %arg8[%c0_30, %c0_31, %c0_32] : memref<1x16x128xf32, #tpu.memory_space<vmem>>, vector<1x16x128xf32>
      tpu.vector_store %arg8[%c0_30, %c0_31, %c0_32], %33 {strides = array<i32>} : memref<1x16x128xf32, #tpu.memory_space<vmem>>, vector<1x16x128xf32>,
      %cst_33 = arith.constant 0.000000e+00 : f32
      %35 = vector.broadcast %cst_33 : f32 to vector<1x16x128xf32>
      %c0_34 = arith.constant 0 : index
      %c0_35 = arith.constant 0 : index
      %c0_36 = arith.constant 0 : index
      %36 = vector.load %arg9[%c0_34, %c0_35, %c0_36] : memref<1x16x128xf32, #tpu.memory_space<vmem>>, vector<1x16x128xf32>
      tpu.vector_store %arg9[%c0_34, %c0_35, %c0_36], %35 {strides = array<i32>} : memref<1x16x128xf32, #tpu.memory_space<vmem>>, vector<1x16x128xf32>,
    } else {
    }
    %c0 = arith.constant 0 : index
    %c0_1 = arith.constant 0 : index
    %3 = vector.load %arg2[%c0, %c0_1] : memref<64x128xbf16, #tpu.memory_space<vmem>>, vector<64x128xbf16>
    %c0_2 = arith.constant 0 : index
    %c0_3 = arith.constant 0 : index
    %4 = vector.load %arg3[%c0_2, %c0_3] : memref<128x128xbf16, #tpu.memory_space<vmem>>, vector<128x128xbf16>
    %cst = arith.constant dense<0.000000e+00> : vector<64x128xf32>
    %5 = tpu.matmul %3, %4, %cst {dimension_numbers = #tpu.dot_dimension_numbers<[1], [0], [0], [1], [0, 0, 1, 1], [], []>} : vector<64x128xbf16>, vector<128x128xbf16>, vector<64x128xf32> -> vector<64x128xf32>
    %c0_4 = arith.constant 0 : index
    %c0_5 = arith.constant 0 : index
    %6 = vector.load %arg4[%c0_4, %c0_5] : memref<64x128xbf16, #tpu.memory_space<vmem>>, vector<64x128xbf16>
    %c0_6 = arith.constant 0 : index
    %c0_7 = arith.constant 0 : index
    %7 = vector.load %arg5[%c0_6, %c0_7] : memref<128x128xbf16, #tpu.memory_space<vmem>>, vector<128x128xbf16>
    %cst_8 = arith.constant dense<0.000000e+00> : vector<64x128xf32>
    %8 = tpu.matmul %6, %7, %cst_8 {dimension_numbers = #tpu.dot_dimension_numbers<[1], [0], [0], [1], [0, 0, 1, 1], [], []>} : vector<64x128xbf16>, vector<128x128xbf16>, vector<64x128xf32> -> vector<64x128xf32>
    %9 = arith.truncf %5 : vector<64x128xf32> to vector<64x128xbf16>
    %c0_9 = arith.constant 0 : index
    %c0_10 = arith.constant 0 : index
    %10 = vector.load %arg6[%c0_9, %c0_10] : memref<64x128xbf16, #tpu.memory_space<vmem>>, vector<64x128xbf16>
    tpu.vector_store %arg6[%c0_9, %c0_10], %9 {strides = array<i32>} : memref<64x128xbf16, #tpu.memory_space<vmem>>, vector<64x128xbf16>,
    %11 = arith.truncf %8 : vector<64x128xf32> to vector<64x128xbf16>
    %c0_11 = arith.constant 0 : index
    %c0_12 = arith.constant 0 : index
    %12 = vector.load %arg7[%c0_11, %c0_12] : memref<64x128xbf16, #tpu.memory_space<vmem>>, vector<64x128xbf16>
    tpu.vector_store %arg7[%c0_11, %c0_12], %11 {strides = array<i32>} : memref<64x128xbf16, #tpu.memory_space<vmem>>, vector<64x128xbf16>,
    %13 = vector.shape_cast %5 : vector<64x128xf32> to vector<8x8x128xf32>
    %cst_13 = arith.constant dense<0.000000e+00> : vector<8x128xf32>
    %14 = vector.multi_reduction <add>, %13, %cst_13 [0] : vector<8x8x128xf32> to vector<8x128xf32>
    %15 = arith.mulf %5, %5 : vector<64x128xf32>
    %16 = vector.shape_cast %15 : vector<64x128xf32> to vector<8x8x128xf32>
    %cst_14 = arith.constant dense<0.000000e+00> : vector<8x128xf32>
    %17 = vector.multi_reduction <add>, %16, %cst_14 [0] : vector<8x8x128xf32> to vector<8x128xf32>
    %c0_15 = arith.constant 0 : index
    %c0_16 = arith.constant 0 : index
    %c0_17 = arith.constant 0 : index
    %18 = vector.load %arg8[%c0_15, %c0_16, %c0_17] : memref<1x16x128xf32, #tpu.memory_space<vmem>>, vector<1x16x128xf32>
    %19 = tpu.concatenate %14, %17 in 0 : vector<8x128xf32>, vector<8x128xf32> -> vector<16x128xf32>
    %20 = vector.shape_cast %19 : vector<16x128xf32> to vector<1x16x128xf32>
    %21 = arith.addf %18, %20 : vector<1x16x128xf32>
    %c0_18 = arith.constant 0 : index
    %c0_19 = arith.constant 0 : index
    %c0_20 = arith.constant 0 : index
    %22 = vector.load %arg8[%c0_18, %c0_19, %c0_20] : memref<1x16x128xf32, #tpu.memory_space<vmem>>, vector<1x16x128xf32>
    tpu.vector_store %arg8[%c0_18, %c0_19, %c0_20], %21 {strides = array<i32>} : memref<1x16x128xf32, #tpu.memory_space<vmem>>, vector<1x16x128xf32>,
    %23 = vector.shape_cast %8 : vector<64x128xf32> to vector<8x8x128xf32>
    %cst_21 = arith.constant dense<0.000000e+00> : vector<8x128xf32>
    %24 = vector.multi_reduction <add>, %23, %cst_21 [0] : vector<8x8x128xf32> to vector<8x128xf32>
    %25 = arith.mulf %8, %8 : vector<64x128xf32>
    %26 = vector.shape_cast %25 : vector<64x128xf32> to vector<8x8x128xf32>
    %cst_22 = arith.constant dense<0.000000e+00> : vector<8x128xf32>
    %27 = vector.multi_reduction <add>, %26, %cst_22 [0] : vector<8x8x128xf32> to vector<8x128xf32>
    %c0_23 = arith.constant 0 : index
    %c0_24 = arith.constant 0 : index
    %c0_25 = arith.constant 0 : index
    %28 = vector.load %arg9[%c0_23, %c0_24, %c0_25] : memref<1x16x128xf32, #tpu.memory_space<vmem>>, vector<1x16x128xf32>
    %29 = tpu.concatenate %24, %27 in 0 : vector<8x128xf32>, vector<8x128xf32> -> vector<16x128xf32>
    %30 = vector.shape_cast %29 : vector<16x128xf32> to vector<1x16x128xf32>
    %31 = arith.addf %28, %30 : vector<1x16x128xf32>
    %c0_26 = arith.constant 0 : index
    %c0_27 = arith.constant 0 : index
    %c0_28 = arith.constant 0 : index
    %32 = vector.load %arg9[%c0_26, %c0_27, %c0_28] : memref<1x16x128xf32, #tpu.memory_space<vmem>>, vector<1x16x128xf32>
    tpu.vector_store %arg9[%c0_26, %c0_27, %c0_28], %31 {strides = array<i32>} : memref<1x16x128xf32, #tpu.memory_space<vmem>>, vector<1x16x128xf32>,
    return
  }
  func.func @transform_0(%arg0: i32, %arg1: i32) -> (i32, i32) {
    %c1_i32 = arith.constant 1 : i32
    %0 = arith.muli %arg0, %c1_i32 : i32
    %1 = arith.addi %0, %arg1 : i32
    %c0_i32 = arith.constant 0 : i32
    %c0_i32_0 = arith.constant 0 : i32
    return %1, %c0_i32 : i32, i32
  }
  func.func @transform_1(%arg0: i32, %arg1: i32) -> (i32, i32) {
    %c0_i32 = arith.constant 0 : i32
    %c0_i32_0 = arith.constant 0 : i32
    %c0_i32_1 = arith.constant 0 : i32
    return %c0_i32, %c0_i32_0 : i32, i32
  }
  func.func @transform_2(%arg0: i32, %arg1: i32) -> (i32, i32) {
    %c1_i32 = arith.constant 1 : i32
    %0 = arith.muli %arg0, %c1_i32 : i32
    %1 = arith.addi %0, %arg1 : i32
    %c0_i32 = arith.constant 0 : i32
    %c0_i32_0 = arith.constant 0 : i32
    return %1, %c0_i32 : i32, i32
  }
  func.func @transform_3(%arg0: i32, %arg1: i32) -> (i32, i32) {
    %c0_i32 = arith.constant 0 : i32
    %c0_i32_0 = arith.constant 0 : i32
    %c0_i32_1 = arith.constant 0 : i32
    return %c0_i32, %c0_i32_0 : i32, i32
  }
  func.func @transform_4(%arg0: i32, %arg1: i32) -> (i32, i32) {
    %c1_i32 = arith.constant 1 : i32
    %0 = arith.muli %arg0, %c1_i32 : i32
    %1 = arith.addi %0, %arg1 : i32
    %c0_i32 = arith.constant 0 : i32
    %c0_i32_0 = arith.constant 0 : i32
    return %1, %c0_i32 : i32, i32
  }
  func.func @transform_5(%arg0: i32, %arg1: i32) -> (i32, i32) {
    %c1_i32 = arith.constant 1 : i32
    %0 = arith.muli %arg0, %c1_i32 : i32
    %1 = arith.addi %0, %arg1 : i32
    %c0_i32 = arith.constant 0 : i32
    %c0_i32_0 = arith.constant 0 : i32
    return %1, %c0_i32 : i32, i32
  }
  func.func @transform_6(%arg0: i32, %arg1: i32) -> (i32, i32, i32) {
    %c0_i32 = arith.constant 0 : i32
    %c0_i32_0 = arith.constant 0 : i32
    %c0_i32_1 = arith.constant 0 : i32
    return %arg0, %c0_i32, %c0_i32_0 : i32, i32, i32
  }
  func.func @transform_7(%arg0: i32, %arg1: i32) -> (i32, i32, i32) {
    %c0_i32 = arith.constant 0 : i32
    %c0_i32_0 = arith.constant 0 : i32
    %c0_i32_1 = arith.constant 0 : i32
    return %arg0, %c0_i32, %c0_i32_0 : i32, i32, i32
  }
}

</mosaic_0001>

<llo_original>
// kernel: resblock_forward.5
$region0: #{resblock_forward.5}
  #allocation0 [shape = 'u32[]', space=smem, size = 0x4, offset = 0x4, fixed_abs, tag = 'smem constant byte address 0x4 - core index']
  #allocation1 [shape = 'u32[144,128]{1,0:T(1,128)}', space=vmem, size = 0x12000, scoped, tag = 'internal scratch']
  %s0 = inlined_call_operand.vmem [shape: bf16[128,128], index: 0, kind: input, shape index: {}]
  %s1 = inlined_call_operand.vmem [shape: f32[1,128], index: 1, kind: input, shape index: {}]
  %s2 = inlined_call_operand.vmem [shape: f32[1,128], index: 2, kind: input, shape index: {}]
  %s3 = inlined_call_operand.vmem [shape: bf16[128,128], index: 3, kind: output, shape index: {}]
  %s4 = sld [smem:[#allocation0]]
  $region22: #{resblock_forward.5} parent=0
    _
  %s6 = ssub.s32 1, %s4
  %s7 = scalar_select 0, %s6, %s4
  // Predicated region
  $region2: #{resblock_forward.5} parent=0 // pred_check
    _
  $region3: #{resblock_forward.5} parent=0 // pred_check_branch
    %9 = sbr.rel (0) target = $region5
  $region4: #{resblock_forward.5} parent=0 // pred_region
    _
  $region5: #{resblock_forward.5} parent=0 // pred_fallthru
    _
  // Predicated region
  $region6: #{resblock_forward.5} parent=0 // pred_check
    _
  $region7: #{resblock_forward.5} parent=0 // pred_check_branch
    %11 = sbr.rel (0) target = $region9
  $region8: #{resblock_forward.5} parent=0 // pred_region
    _
  $region9: #{resblock_forward.5} parent=0 // pred_fallthru
    _
  // Predicated region
  $region10: #{resblock_forward.5} parent=0 // pred_check
    _
  $region11: #{resblock_forward.5} parent=0 // pred_check_branch
    %13 = sbr.rel (0) target = $region13
  $region12: #{resblock_forward.5} parent=0 // pred_region
    _
  $region13: #{resblock_forward.5} parent=0 // pred_fallthru
    _
  %v14 = vld [vmem:[%s0] sm:$0xf]
  %v15 = vld [vmem:[%s0 + $0x4] sm:$0xf]
  %v16 = vld [vmem:[%s0 + $0x8] sm:$0xf]
  %v17 = vld [vmem:[%s0 + $0xc] sm:$0xf]
  %v18 = vld [vmem:[%s0 + $0x10] sm:$0xf]
  %v19 = vld [vmem:[%s0 + $0x14] sm:$0xf]
  %v20 = vld [vmem:[%s0 + $0x18] sm:$0xf]
  %v21 = vld [vmem:[%s0 + $0x1c] sm:$0xf]
  %v22 = vld [vmem:[%s0 + $0x20] sm:$0xf]
  %v23 = vld [vmem:[%s0 + $0x24] sm:$0xf]
  %v24 = vld [vmem:[%s0 + $0x28] sm:$0xf]
  %v25 = vld [vmem:[%s0 + $0x2c] sm:$0xf]
  %v26 = vld [vmem:[%s0 + $0x30] sm:$0xf]
  %v27 = vld [vmem:[%s0 + $0x34] sm:$0xf]
  %v28 = vld [vmem:[%s0 + $0x38] sm:$0xf]
  %v29 = vld [vmem:[%s0 + $0x3c] sm:$0xf]
  %v30 = vunpack.c.l.bf16 %v14
  %v31 = vunpack.c.l.bf16 %v15
  %v32 = vunpack.c.l.bf16 %v16
  %v33 = vunpack.c.l.bf16 %v17
  %v34 = vunpack.c.l.bf16 %v18
  %v35 = vunpack.c.l.bf16 %v19
  %v36 = vunpack.c.l.bf16 %v20
  %v37 = vunpack.c.l.bf16 %v21
  %v38 = vunpack.c.l.bf16 %v22
  %v39 = vunpack.c.l.bf16 %v23
  %v40 = vunpack.c.l.bf16 %v24
  %v41 = vunpack.c.l.bf16 %v25
  %v42 = vunpack.c.l.bf16 %v26
  %v43 = vunpack.c.l.bf16 %v27
  %v44 = vunpack.c.l.bf16 %v28
  %v45 = vunpack.c.l.bf16 %v29
  %v46 = vld [vmem:[%s1] sm:$0x1]
  %v48 = vlaneseq
  %v49 = vshrl.u32 %v48, 7
  %v50 = vsub.s32 0, %v49
  %v51 = vrot.slane %v46, %v50
  %v53 = vmul.f32 %v30, %v51
  %v54 = vmul.f32 %v31, %v51
  %v55 = vmul.f32 %v32, %v51
  %v56 = vmul.f32 %v33, %v51
  %v57 = vmul.f32 %v34, %v51
  %v58 = vmul.f32 %v35, %v51
  %v59 = vmul.f32 %v36, %v51
  %v60 = vmul.f32 %v37, %v51
  %v61 = vmul.f32 %v38, %v51
  %v62 = vmul.f32 %v39, %v51
  %v63 = vmul.f32 %v40, %v51
  %v64 = vmul.f32 %v41, %v51
  %v65 = vmul.f32 %v42, %v51
  %v66 = vmul.f32 %v43, %v51
  %v67 = vmul.f32 %v44, %v51
  %v68 = vmul.f32 %v45, %v51
  %v69 = vld [vmem:[%s2] sm:$0x1]
  %v71 = vlaneseq
  %v72 = vshrl.u32 %v71, 7
  %v73 = vsub.s32 0, %v72
  %v74 = vrot.slane %v69, %v73
  %v76 = vadd.f32 %v53, %v74
  %v77 = vadd.f32 %v54, %v74
  %v78 = vadd.f32 %v55, %v74
  %v79 = vadd.f32 %v56, %v74
  %v80 = vadd.f32 %v57, %v74
  %v81 = vadd.f32 %v58, %v74
  %v82 = vadd.f32 %v59, %v74
  %v83 = vadd.f32 %v60, %v74
  %v84 = vadd.f32 %v61, %v74
  %v85 = vadd.f32 %v62, %v74
  %v86 = vadd.f32 %v63, %v74
  %v87 = vadd.f32 %v64, %v74
  %v88 = vadd.f32 %v65, %v74
  %v89 = vadd.f32 %v66, %v74
  %v90 = vadd.f32 %v67, %v74
  %v91 = vadd.f32 %v68, %v74
  %v92 = vmax.f32 %v76, 0.0
  %v93 = vmax.f32 %v77, 0.0
  %v94 = vmax.f32 %v78, 0.0
  %v95 = vmax.f32 %v79, 0.0
  %v96 = vmax.f32 %v80, 0.0
  %v97 = vmax.f32 %v81, 0.0
  %v98 = vmax.f32 %v82, 0.0
  %v99 = vmax.f32 %v83, 0.0
  %v100 = vmax.f32 %v84, 0.0
  %v101 = vmax.f32 %v85, 0.0
  %v102 = vmax.f32 %v86, 0.0
  %v103 = vmax.f32 %v87, 0.0
  %v104 = vmax.f32 %v88, 0.0
  %v105 = vmax.f32 %v89, 0.0
  %v106 = vmax.f32 %v90, 0.0
  %v107 = vmax.f32 %v91, 0.0
  %v108 = vpack.c.bf16 %v93, %v92
  %v109 = vpack.c.bf16 %v95, %v94
  %v110 = vpack.c.bf16 %v97, %v96
  %v111 = vpack.c.bf16 %v99, %v98
  %v112 = vpack.c.bf16 %v101, %v100
  %v113 = vpack.c.bf16 %v103, %v102
  %v114 = vpack.c.bf16 %v105, %v104
  %v115 = vpack.c.bf16 %v107, %v106
  %v124 = vunpack.c.l.b16 %v108
  %v125 = vunpack.c.h.b16 %v108
  %v126 = vunpack.c.l.b16 %v109
  %v127 = vunpack.c.h.b16 %v109
  %v128 = vunpack.c.l.b16 %v110
  %v129 = vunpack.c.h.b16 %v110
  %v130 = vunpack.c.l.b16 %v111
  %v131 = vunpack.c.h.b16 %v111
  %v132 = vunpack.c.l.b16 %v112
  %v133 = vunpack.c.h.b16 %v112
  %v134 = vunpack.c.l.b16 %v113
  %v135 = vunpack.c.h.b16 %v113
  %v136 = vunpack.c.l.b16 %v114
  %v137 = vunpack.c.h.b16 %v114
  %v138 = vunpack.c.l.b16 %v115
  %v139 = vunpack.c.h.b16 %v115
  %v140 = vpack.c.b16 %v124, %v124
  %v141 = vpack.c.b16 %v125, %v125
  %v142 = vpack.c.b16 %v126, %v126
  %v143 = vpack.c.b16 %v127, %v127
  %v144 = vpack.c.b16 %v128, %v128
  %v145 = vpack.c.b16 %v129, %v129
  %v146 = vpack.c.b16 %v130, %v130
  %v147 = vpack.c.b16 %v131, %v131
  %v148 = vpack.c.b16 %v132, %v132
  %v149 = vpack.c.b16 %v133, %v133
  %v150 = vpack.c.b16 %v134, %v134
  %v151 = vpack.c.b16 %v135, %v135
  %v152 = vpack.c.b16 %v136, %v136
  %v153 = vpack.c.b16 %v137, %v137
  %v154 = vpack.c.b16 %v138, %v138
  %v155 = vpack.c.b16 %v139, %v139
  %172 = vst [vmem:[%s3] sm:$0xf] %v140
  %173 = vst [vmem:[%s3 + $0x4] sm:$0xf] %v141
  %174 = vst [vmem:[%s3 + $0x8] sm:$0xf] %v142
  %175 = vst [vmem:[%s3 + $0xc] sm:$0xf] %v143
  %176 = vst [vmem:[%s3 + $0x10] sm:$0xf] %v144
  %177 = vst [vmem:[%s3 + $0x14] sm:$0xf] %v145
  %178 = vst [vmem:[%s3 + $0x18] sm:$0xf] %v146
  %179 = vst [vmem:[%s3 + $0x1c] sm:$0xf] %v147
  %180 = vst [vmem:[%s3 + $0x20] sm:$0xf] %v148
  %181 = vst [vmem:[%s3 + $0x24] sm:$0xf] %v149
  %182 = vst [vmem:[%s3 + $0x28] sm:$0xf] %v150
  %183 = vst [vmem:[%s3 + $0x2c] sm:$0xf] %v151
  %184 = vst [vmem:[%s3 + $0x30] sm:$0xf] %v152
  %185 = vst [vmem:[%s3 + $0x34] sm:$0xf] %v153
  %186 = vst [vmem:[%s3 + $0x38] sm:$0xf] %v154
  %187 = vst [vmem:[%s3 + $0x3c] sm:$0xf] %v155
  // Predicated region
  $region14: #{resblock_forward.5} parent=0 // pred_check
    _
  $region15: #{resblock_forward.5} parent=0 // pred_check_branch
    %189 = sbr.rel (0) target = $region17
  $region16: #{resblock_forward.5} parent=0 // pred_region
    _
  $region17: #{resblock_forward.5} parent=0 // pred_fallthru
    _
  // Predicated region
  $region18: #{resblock_forward.5} parent=0 // pred_check
    _
  $region19: #{resblock_forward.5} parent=0 // pred_check_branch
    %191 = sbr.rel (0) target = $region21
  $region20: #{resblock_forward.5} parent=0 // pred_region
    _
  $region21: #{resblock_forward.5} parent=0 // pred_fallthru
    _

// kernel: resblock_forward.4
$region0: #{resblock_forward.4}
  #allocation0 [shape = 'u32[]', space=smem, size = 0x4, offset = 0x4, fixed_abs, tag = 'smem constant byte address 0x4 - core index']
  #allocation1 [shape = 'u32[144,128]{1,0:T(1,128)}', space=vmem, size = 0x12000, scoped, tag = 'internal scratch']
  %s0 = inlined_call_operand.vmem [shape: bf16[128,128], index: 0, kind: input, shape index: {}]
  %s1 = inlined_call_operand.vmem [shape: bf16[128,128], index: 1, kind: input, shape index: {}]
  %s2 = inlined_call_operand.vmem [shape: bf16[128,128], index: 2, kind: output, shape index: {0}]
  %s3 = inlined_call_operand.vmem [shape: f32[2,16,128], index: 3, kind: output, shape index: {1}]
  %4 = xla_tuple %s2, %s3
  %s5 = sld [smem:[#allocation0]]
  $region53: #{resblock_forward.4} parent=0
    _
  %s7 = ssub.s32 1, %s5
  %s8 = scalar_select 0, %s7, %s5
  loop: start=0, step=1, limit=4
  $region2: #{resblock_forward.4} parent=0 // loop_pre_header
    _
  $region3: #{resblock_forward.4} parent=0 // loop_header
    %s10 = sphi 0, %s14
    %p11 = scmp.ge.s32.totalorder %s10, 4
    %s17 = sphi 0, %s29
    %s18 = sphi 0, %s25
    %s19 = sphi 0, %s17
    %s20 = sphi 0, %s18
    %s21 = sphi 0, %s19
    %s22 = sphi 0, %s20
    %s34 = sphi 0, %s36
    %s37 = sphi 0, %s34
    %s38 = sphi 0, %s37
    %s54 = sphi 0, %s38
    %s58 = sphi 0, %s58
    %s60 = sphi 0, %s58
    %s61 = sphi 0, %s60
    %s75 = sphi 0, %s61
    %s83 = sphi 0, %s85
    %s86 = sphi 0, %s83
    %s87 = sphi 0, %s86
    %s103 = sphi 0, %s87
    %s109 = sphi 0, %s111
    %s112 = sphi 0, %s109
    %s113 = sphi 0, %s112
    %s129 = sphi 0, %s113
  $region4: #{resblock_forward.4} parent=0 // loop_header_branch
    %13 = sbr.rel (%p11) target = $region8
  $region5: #{resblock_forward.4} parent=0 // loop_body
    %s15 = ssub.s32 %s10, 1
    %s16 = ssub.s32 %s10, 2
    %s23 = sadd.s32 1, %s18
    %p24 = scmp.ge.s32.totalorder %s23, 1
    %s25 = scalar_select %p24, 0, %s23
    %s26 = sadd.s32 1, %s17
    %s27 = scalar_select %p24, %s26, %s17
    %p28 = scmp.ge.s32.totalorder %s27, 2
    %s29 = scalar_select %p28, 0, %s27
    %s30 = sadd.s32 %s17, %s18
    %s31 = sadd.s32 %s29, %s25
    %s32 = ssub.s32 %s30, %s31
    %p33 = scmp.eq.s32.totalorder %s32, 0
    %s35 = sadd.s32 %s34, 1
    %s36 = scalar_select %p33, %s34, %s35
    %p39 = pneg %p33
    %p40 = scmp.eq.s32.totalorder %s10, 1
    %p41 = por %p39, %p40
    %p42 = scmp.ne.s32.totalorder %s34, %s37
    %p43 = scmp.eq.s32.totalorder %s10, 0
    %p44 = por %p42, %p43
    %p45 = scmp.ne.s32.totalorder %s34, %s37
    %p46 = scmp.eq.s32.totalorder %s15, 1
    %p47 = por %p45, %p46
    %p48 = scmp.ne.s32.totalorder %s37, %s38
    %p49 = scmp.eq.s32.totalorder %s15, 0
    %p50 = por %p48, %p49
    %p51 = scmp.ne.s32.totalorder %s37, %s38
    %p52 = scmp.eq.s32.totalorder %s16, 1
    %p53 = por %p51, %p52
    %p55 = scmp.ne.s32.totalorder %s38, %s54
    %p56 = scmp.eq.s32.totalorder %s16, 0
    %p57 = por %p55, %p56
    %s59 = sadd.s32 %s58, 1
    %p62 = scmp.eq.s32.totalorder %s10, 1
    %p63 = scmp.ne.s32.totalorder %s58, %s60
    %p64 = scmp.eq.s32.totalorder %s10, 0
    %p65 = por %p63, %p64
    %p66 = scmp.ne.s32.totalorder %s58, %s60
    %p67 = scmp.eq.s32.totalorder %s15, 1
    %p68 = por %p66, %p67
    %p69 = scmp.ne.s32.totalorder %s60, %s61
    %p70 = scmp.eq.s32.totalorder %s15, 0
    %p71 = por %p69, %p70
    %p72 = scmp.ne.s32.totalorder %s60, %s61
    %p73 = scmp.eq.s32.totalorder %s16, 1
    %p74 = por %p72, %p73
    %p76 = scmp.ne.s32.totalorder %s61, %s75
    %p77 = scmp.eq.s32.totalorder %s16, 0
    %p78 = por %p76, %p77
    %s79 = sadd.s32 %s17, %s18
    %s80 = sadd.s32 %s29, %s25
    %s81 = ssub.s32 %s79, %s80
    %p82 = scmp.eq.s32.totalorder %s81, 0
    %s84 = sadd.s32 %s83, 1
    %s85 = scalar_select %p82, %s83, %s84
    %p88 = pneg %p82
    %p89 = scmp.eq.s32.totalorder %s10, 1
    %p90 = por %p88, %p89
    %p91 = scmp.ne.s32.totalorder %s83, %s86
    %p92 = scmp.eq.s32.totalorder %s10, 0
    %p93 = por %p91, %p92
    %p94 = scmp.ne.s32.totalorder %s83, %s86
    %p95 = scmp.eq.s32.totalorder %s15, 1
    %p96 = por %p94, %p95
    %p97 = scmp.ne.s32.totalorder %s86, %s87
    %p98 = scmp.eq.s32.totalorder %s15, 0
    %p99 = por %p97, %p98
    %p100 = scmp.ne.s32.totalorder %s86, %s87
    %p101 = scmp.eq.s32.totalorder %s16, 1
    %p102 = por %p100, %p101
    %p104 = scmp.ne.s32.totalorder %s87, %s103
    %p105 = scmp.eq.s32.totalorder %s16, 0
    %p106 = por %p104, %p105
    %s107 = ssub.s32 %s17, %s29
    %p108 = scmp.eq.s32.totalorder %s107, 0
    %s110 = sadd.s32 %s109, 1
    %s111 = scalar_select %p108, %s109, %s110
    %p114 = pneg %p108
    %p115 = scmp.eq.s32.totalorder %s10, 1
    %p116 = por %p114, %p115
    %p117 = scmp.ne.s32.totalorder %s109, %s112
    %p118 = scmp.eq.s32.totalorder %s10, 0
    %p119 = por %p117, %p118
    %p120 = scmp.ne.s32.totalorder %s109, %s112
    %p121 = scmp.eq.s32.totalorder %s15, 1
    %p122 = por %p120, %p121
    %p123 = scmp.ne.s32.totalorder %s112, %s113
    %p124 = scmp.eq.s32.totalorder %s15, 0
    %p125 = por %p123, %p124
    %p126 = scmp.ne.s32.totalorder %s112, %s113
    %p127 = scmp.eq.s32.totalorder %s16, 1
    %p128 = por %p126, %p127
    %p130 = scmp.ne.s32.totalorder %s113, %s129
    %p131 = scmp.eq.s32.totalorder %s16, 0
    %p132 = por %p130, %p131
    %p133 = scmp.le.s32.totalorder 1, %s10
    %p134 = scmp.lt.s32.totalorder %s10, 3
    %p135 = pnand %p133, %p134
    %p136 = pneg %p135
    // Predicated region
    $region9: #{resblock_forward.4} parent=5 // pred_check
      _
    $region10: #{resblock_forward.4} parent=5 // pred_check_branch
      %138 = sbr.rel (%p135) target = $region12
    $region11: #{resblock_forward.4} parent=5 // pred_region
      %s139 = ssub.s32 %s10, 1
      // Predicated region
      $region13: #{resblock_forward.4} parent=11 // pred_check
        %p140 = pneg %p71
      $region14: #{resblock_forward.4} parent=11 // pred_check_branch
        %142 = sbr.rel (%p140) target = $region16
      $region15: #{resblock_forward.4} parent=11 // pred_region
        _
      $region16: #{resblock_forward.4} parent=11 // pred_fallthru
        _
    $region12: #{resblock_forward.4} parent=5 // pred_fallthru
      _
    %p143 = scmp.lt.s32.totalorder %s10, 2
    // Predicated region
    $region17: #{resblock_forward.4} parent=5 // pred_check
      %p144 = pneg %p143
    $region18: #{resblock_forward.4} parent=5 // pred_check_branch
      %146 = sbr.rel (%p144) target = $region20
    $region19: #{resblock_forward.4} parent=5 // pred_region
      // Predicated region
      $region21: #{resblock_forward.4} parent=19 // pred_check
        %p147 = pneg %p44
      $region22: #{resblock_forward.4} parent=19 // pred_check_branch
        %149 = sbr.rel (%p147) target = $region24
      $region23: #{resblock_forward.4} parent=19 // pred_region
        %s150 = sadd.s32 %s17, %s18
        %s151 = smul.u32 8, %s150
        %p152 = scmp.lt.s32.totalorder %s151, 15
        %s153 = scalar_select %p152, %s151, 15
        %s154 = smul.addr %s153, 4
        %s155 = scalar_lea.vmem %s0, %s154
        %s156 = sadd.s32 %s17, %s18
        %s157 = smul.u32 8, %s156
      $region24: #{resblock_forward.4} parent=19 // pred_fallthru
        _
    $region20: #{resblock_forward.4} parent=5 // pred_fallthru
      _
    %p158 = scmp.le.s32.totalorder 1, %s10
    %p159 = scmp.lt.s32.totalorder %s10, 3
    %p160 = pnand %p158, %p159
    %p161 = pneg %p160
    // Predicated region
    $region25: #{resblock_forward.4} parent=5 // pred_check
      _
    $region26: #{resblock_forward.4} parent=5 // pred_check_branch
      %163 = sbr.rel (%p160) target = $region28
    $region27: #{resblock_forward.4} parent=5 // pred_region
      %s164 = ssub.s32 %s10, 1
      %s165 = sadd.s32 %s19, %s20
      %s166 = smul.u32 8, %s165
      %p167 = scmp.lt.s32.totalorder %s166, 15
      %s168 = scalar_select %p167, %s166, 15
      %s169 = smul.addr %s168, 4
      %s170 = scalar_lea.vmem %s0, %s169
      %p171 = pneg %p50
      %p172 = pneg %p47
      %p173 = pneg %p71
      %p174 = pneg %p68
      %p175 = pneg %p99
      %p176 = pneg %p96
      %s177 = sadd.s32 %s19, %s20
      %s178 = smul.u32 8, %s177
      %p179 = scmp.lt.s32.totalorder %s178, 15
      %s180 = scalar_select %p179, %s178, 15
      %s181 = smul.addr %s180, 4
      %s182 = scalar_lea.vmem %s2, %s181
      %p183 = pneg %p125
      %p184 = pneg %p122
      %p185 = scmp.lt.s32.totalorder %s19, 1
      %s186 = scalar_select %p185, %s19, 1
      %s187 = smul.addr %s186, 2
      %s188 = smul.addr %s187, 8
      %s189 = scalar_lea.vmem %s3, %s188
      %s190 = sadd.s32 %s19, %s20
      %s191 = smul.u32 8, %s190
      %p192 = scmp.lt.s32.totalorder %s191, 15
      %s193 = scalar_select %p192, %s191, 15
      %s194 = smul.addr %s193, 4
      %s195 = scalar_lea.vmem %s0, %s194
      %s196 = sadd.s32 %s19, %s20
      %s197 = smul.u32 8, %s196
      %s198 = sadd.s32 %s19, %s20
      %s199 = smul.u32 8, %s198
      %p200 = scmp.lt.s32.totalorder %s199, 15
      %s201 = scalar_select %p200, %s199, 15
      %s202 = smul.addr %s201, 4
      %s203 = scalar_lea.vmem %s2, %s202
      %s204 = sadd.s32 %s19, %s20
      %s205 = smul.u32 8, %s204
      %p206 = scmp.lt.s32.totalorder %s19, 1
      %s207 = scalar_select %p206, %s19, 1
      %s208 = smul.addr %s207, 2
      %s209 = smul.addr %s208, 8
      %s210 = scalar_lea.vmem %s3, %s209
      %p212 = scmp.eq.s32.totalorder %s20, 0
      // Predicated region
      $region29: #{resblock_forward.4} parent=27 // pred_check
        %p213 = pneg %p212
      $region30: #{resblock_forward.4} parent=27 // pred_check_branch
        %215 = sbr.rel (%p213) target = $region32
      $region31: #{resblock_forward.4} parent=27 // pred_region
        %216 = vst [vmem:[%s210] sm:$0xff] 0.0
        %217 = vst [vmem:[%s210 + $0x8] sm:$0xff] 0.0
      $region32: #{resblock_forward.4} parent=27 // pred_fallthru
        _
      %v218 = vld [vmem:[%s195] sm:$0xf]
      %v219 = vld [vmem:[%s195 + $0x4] sm:$0xf]
      %v220 = vld [vmem:[%s195 + $0x8] sm:$0xf]
      %v221 = vld [vmem:[%s195 + $0xc] sm:$0xf]
      %v222 = vld [vmem:[%s195 + $0x10] sm:$0xf]
      %v223 = vld [vmem:[%s195 + $0x14] sm:$0xf]
      %v224 = vld [vmem:[%s195 + $0x18] sm:$0xf]
      %v225 = vld [vmem:[%s195 + $0x1c] sm:$0xf]
      %v226 = vld [vmem:[%s1] sm:$0xf]
      %v227 = vld [vmem:[%s1 + $0x4] sm:$0xf]
      %v228 = vld [vmem:[%s1 + $0x8] sm:$0xf]
      %v229 = vld [vmem:[%s1 + $0xc] sm:$0xf]
      %v230 = vld [vmem:[%s1 + $0x10] sm:$0xf]
      %v231 = vld [vmem:[%s1 + $0x14] sm:$0xf]
      %v232 = vld [vmem:[%s1 + $0x18] sm:$0xf]
      %v233 = vld [vmem:[%s1 + $0x1c] sm:$0xf]
      %v234 = vld [vmem:[%s1 + $0x20] sm:$0xf]
      %v235 = vld [vmem:[%s1 + $0x24] sm:$0xf]
      %v236 = vld [vmem:[%s1 + $0x28] sm:$0xf]
      %v237 = vld [vmem:[%s1 + $0x2c] sm:$0xf]
      %v238 = vld [vmem:[%s1 + $0x30] sm:$0xf]
      %v239 = vld [vmem:[%s1 + $0x34] sm:$0xf]
      %v240 = vld [vmem:[%s1 + $0x38] sm:$0xf]
      %v241 = vld [vmem:[%s1 + $0x3c] sm:$0xf]
      %v250 = vunpack.c.l.b16 %v218
      %v251 = vunpack.c.l.b16 %v219
      %v252 = vunpack.c.l.b16 %v220
      %v253 = vunpack.c.l.b16 %v221
      %v254 = vunpack.c.l.b16 %v222
      %v255 = vunpack.c.l.b16 %v223
      %v256 = vunpack.c.l.b16 %v224
      %v257 = vunpack.c.l.b16 %v225
      %v258 = vpack.c.b16 %v251, %v250
      %v259 = vpack.c.b16 %v253, %v252
      %v260 = vpack.c.b16 %v255, %v254
      %v261 = vpack.c.b16 %v257, %v256
      %v282 = vunpack.c.l.b16 %v226
      %v283 = vunpack.c.l.b16 %v227
      %v284 = vunpack.c.l.b16 %v228
      %v285 = vunpack.c.l.b16 %v229
      %v286 = vunpack.c.l.b16 %v230
      %v287 = vunpack.c.l.b16 %v231
      %v288 = vunpack.c.l.b16 %v232
      %v289 = vunpack.c.l.b16 %v233
      %v290 = vunpack.c.l.b16 %v234
      %v291 = vunpack.c.l.b16 %v235
      %v292 = vunpack.c.l.b16 %v236
      %v293 = vunpack.c.l.b16 %v237
      %v294 = vunpack.c.l.b16 %v238
      %v295 = vunpack.c.l.b16 %v239
      %v296 = vunpack.c.l.b16 %v240
      %v297 = vunpack.c.l.b16 %v241
      %v298 = vpack.c.b16 %v283, %v282
      %v299 = vpack.c.b16 %v285, %v284
      %v300 = vpack.c.b16 %v287, %v286
      %v301 = vpack.c.b16 %v289, %v288
      %v302 = vpack.c.b16 %v291, %v290
      %v303 = vpack.c.b16 %v293, %v292
      %v304 = vpack.c.b16 %v295, %v294
      %v305 = vpack.c.b16 %v297, %v296
      %314 = vmatprep.subr.bf16.mxu0 0
      %315 = vmatpush1.bf16.msra.mxu0 %v305
      %316 = vmatprep.subr.bf16.mxu0 0
      %317 = vmatpush1.bf16.msra.mxu0 %v304
      %318 = vmatprep.subr.bf16.mxu0 0
      %319 = vmatpush1.bf16.msra.mxu0 %v303
      %320 = vmatprep.subr.bf16.mxu0 0
      %321 = vmatpush1.bf16.msra.mxu0 %v302
      %322 = vmatprep.subr.bf16.mxu0 0
      %323 = vmatpush1.bf16.msra.mxu0 %v301
      %324 = vmatprep.subr.bf16.mxu0 0
      %325 = vmatpush1.bf16.msra.mxu0 %v300
      %326 = vmatprep.subr.bf16.mxu0 0
      %327 = vmatpush1.bf16.msra.mxu0 %v299
      %328 = vmatprep.subr.bf16.mxu0 0
      %329 = vmatpush1.bf16.msra.mxu0 %v298
      %330 = vmatprep.subr.bf16.mxu0 0
      %331 = vmatpush2.bf16.msra.mxu0 0
      %332 = vmatprep.subr.bf16.mxu0 0
      %333 = vmatpush2.bf16.msra.mxu0 0
      %334 = vmatprep.subr.bf16.mxu0 0
      %335 = vmatpush2.bf16.msra.mxu0 0
      %336 = vmatprep.subr.bf16.mxu0 0
      %337 = vmatpush2.bf16.msra.mxu0 0
      %338 = vmatprep.subr.bf16.mxu0 0
      %339 = vmatpush2.bf16.msra.mxu0 0
      %340 = vmatprep.subr.bf16.mxu0 0
      %341 = vmatpush2.bf16.msra.mxu0 0
      %342 = vmatprep.subr.bf16.mxu0 0
      %343 = vmatpush2.bf16.msra.mxu0 0
      %344 = vmatprep.subr.bf16.mxu0 0
      %345 = vmatpush2.bf16.msra.mxu0 0
      %346 = vmatprep.mubr.bf16.mxu0 0
      %347 = vmatmul.mubr.bf16.gmra.mxu0 %v258
      %v348 = vpop.f32.mrf.mxu0
      %v349 = vadd.f32 0.0, %v348
      %v350 = vpop.f32.mrf.mxu0
      %v351 = vpop.f32.mrf.mxu0
      %v352 = vadd.f32 0.0, %v351
      %v353 = vpop.f32.mrf.mxu0
      %354 = vmatprep.mubr.bf16.mxu0 0
      %355 = vmatmul.mubr.bf16.gmra.mxu0 %v259
      %v356 = vpop.f32.mrf.mxu0
      %v357 = vadd.f32 0.0, %v356
      %v358 = vpop.f32.mrf.mxu0
      %v359 = vpop.f32.mrf.mxu0
      %v360 = vadd.f32 0.0, %v359
      %v361 = vpop.f32.mrf.mxu0
      %362 = vmatprep.mubr.bf16.mxu0 0
      %363 = vmatmul.mubr.bf16.gmra.mxu0 %v260
      %v364 = vpop.f32.mrf.mxu0
      %v365 = vadd.f32 0.0, %v364
      %v366 = vpop.f32.mrf.mxu0
      %v367 = vpop.f32.mrf.mxu0
      %v368 = vadd.f32 0.0, %v367
      %v369 = vpop.f32.mrf.mxu0
      %370 = vmatprep.mubr.bf16.mxu0 0
      %371 = vmatmul.mubr.bf16.gmra.mxu0 %v261
      %v372 = vpop.f32.mrf.mxu0
      %v373 = vadd.f32 0.0, %v372
      %v374 = vpop.f32.mrf.mxu0
      %v375 = vpop.f32.mrf.mxu0
      %v376 = vadd.f32 0.0, %v375
      %v377 = vpop.f32.mrf.mxu0
      %378 = vdwg.mxu0
      %v379 = vpack.c.bf16 %v352, %v349
      %v380 = vpack.c.bf16 %v360, %v357
      %v381 = vpack.c.bf16 %v368, %v365
      %v382 = vpack.c.bf16 %v376, %v373
      %v387 = vunpack.c.l.b16 %v379
      %v388 = vunpack.c.h.b16 %v379
      %v389 = vunpack.c.l.b16 %v380
      %v390 = vunpack.c.h.b16 %v380
      %v391 = vunpack.c.l.b16 %v381
      %v392 = vunpack.c.h.b16 %v381
      %v393 = vunpack.c.l.b16 %v382
      %v394 = vunpack.c.h.b16 %v382
      %v395 = vpack.c.b16 %v387, %v387
      %v396 = vpack.c.b16 %v388, %v388
      %v397 = vpack.c.b16 %v389, %v389
      %v398 = vpack.c.b16 %v390, %v390
      %v399 = vpack.c.b16 %v391, %v391
      %v400 = vpack.c.b16 %v392, %v392
      %v401 = vpack.c.b16 %v393, %v393
      %v402 = vpack.c.b16 %v394, %v394
      %411 = vst [vmem:[%s203] sm:$0xf] %v395
      %412 = vst [vmem:[%s203 + $0x4] sm:$0xf] %v396
      %413 = vst [vmem:[%s203 + $0x8] sm:$0xf] %v397
      %414 = vst [vmem:[%s203 + $0xc] sm:$0xf] %v398
      %415 = vst [vmem:[%s203 + $0x10] sm:$0xf] %v399
      %416 = vst [vmem:[%s203 + $0x14] sm:$0xf] %v400
      %417 = vst [vmem:[%s203 + $0x18] sm:$0xf] %v401
      %418 = vst [vmem:[%s203 + $0x1c] sm:$0xf] %v402
      %v419 = vadd.f32 %v349, %v352
      %v420 = vadd.f32 %v419, %v357
      %v421 = vadd.f32 %v420, %v360
      %v422 = vadd.f32 %v421, %v365
      %v423 = vadd.f32 %v422, %v368
      %v424 = vadd.f32 %v423, %v373
      %v425 = vadd.f32 %v424, %v376
      %v426 = vmul.f32 %v349, %v349
      %v427 = vmul.f32 %v352, %v352
      %v428 = vmul.f32 %v357, %v357
      %v429 = vmul.f32 %v360, %v360
      %v430 = vmul.f32 %v365, %v365
      %v431 = vmul.f32 %v368, %v368
      %v432 = vmul.f32 %v373, %v373
      %v433 = vmul.f32 %v376, %v376
      %v434 = vadd.f32 %v426, %v427
      %v435 = vadd.f32 %v434, %v428
      %v436 = vadd.f32 %v435, %v429
      %v437 = vadd.f32 %v436, %v430
      %v438 = vadd.f32 %v437, %v431
      %v439 = vadd.f32 %v438, %v432
      %v440 = vadd.f32 %v439, %v433
      %v441 = vld [vmem:[%s210] sm:$0xff]
      %v442 = vld [vmem:[%s210 + $0x8] sm:$0xff]
      %v443 = vadd.f32 %v441, %v425
      %v444 = vadd.f32 %v442, %v440
      %445 = vst [vmem:[%s210] sm:$0xff] %v443
      %446 = vst [vmem:[%s210 + $0x8] sm:$0xff] %v444
      %s447 = sadd.s32 %s19, %s20
      %s448 = smul.u32 8, %s447
      %p449 = scmp.lt.s32.totalorder %s448, 15
      %s450 = scalar_select %p449, %s448, 15
      %s451 = smul.addr %s450, 4
      %s452 = scalar_lea.vmem %s2, %s451
      %p453 = scmp.lt.s32.totalorder %s19, 1
      %s454 = scalar_select %p453, %s19, 1
      %s455 = smul.addr %s454, 2
      %s456 = smul.addr %s455, 8
      %s457 = scalar_lea.vmem %s3, %s456
      // Predicated region
      $region33: #{resblock_forward.4} parent=27 // pred_check
        %p458 = pneg %p96
      $region34: #{resblock_forward.4} parent=27 // pred_check_branch
        %460 = sbr.rel (%p458) target = $region36
      $region35: #{resblock_forward.4} parent=27 // pred_region
        %s461 = sadd.s32 %s19, %s20
        %s462 = smul.u32 8, %s461
      $region36: #{resblock_forward.4} parent=27 // pred_fallthru
        _
      // Predicated region
      $region37: #{resblock_forward.4} parent=27 // pred_check
        %p463 = pneg %p122
      $region38: #{resblock_forward.4} parent=27 // pred_check_branch
        %465 = sbr.rel (%p463) target = $region40
      $region39: #{resblock_forward.4} parent=27 // pred_region
        _
      $region40: #{resblock_forward.4} parent=27 // pred_fallthru
        _
    $region28: #{resblock_forward.4} parent=5 // pred_fallthru
      _
    %p466 = scmp.le.s32.totalorder 2, %s10
    // Predicated region
    $region41: #{resblock_forward.4} parent=5 // pred_check
      %p467 = pneg %p466
    $region42: #{resblock_forward.4} parent=5 // pred_check_branch
      %469 = sbr.rel (%p467) target = $region44
    $region43: #{resblock_forward.4} parent=5 // pred_region
      %s470 = ssub.s32 %s10, 2
      // Predicated region
      $region45: #{resblock_forward.4} parent=43 // pred_check
        %p471 = pneg %p102
      $region46: #{resblock_forward.4} parent=43 // pred_check_branch
        %473 = sbr.rel (%p471) target = $region48
      $region47: #{resblock_forward.4} parent=43 // pred_region
        %s474 = sadd.s32 %s21, %s22
        %s475 = smul.u32 8, %s474
        %p476 = scmp.lt.s32.totalorder %s475, 15
        %s477 = scalar_select %p476, %s475, 15
        %s478 = smul.addr %s477, 4
        %s479 = scalar_lea.vmem %s2, %s478
      $region48: #{resblock_forward.4} parent=43 // pred_fallthru
        _
      // Predicated region
      $region49: #{resblock_forward.4} parent=43 // pred_check
        %p480 = pneg %p128
      $region50: #{resblock_forward.4} parent=43 // pred_check_branch
        %482 = sbr.rel (%p480) target = $region52
      $region51: #{resblock_forward.4} parent=43 // pred_region
        %p483 = scmp.lt.s32.totalorder %s21, 1
        %s484 = scalar_select %p483, %s21, 1
        %s485 = smul.addr %s484, 2
        %s486 = smul.addr %s485, 8
        %s487 = scalar_lea.vmem %s3, %s486
      $region52: #{resblock_forward.4} parent=43 // pred_fallthru
        _
    $region44: #{resblock_forward.4} parent=5 // pred_fallthru
      _
  $region6: #{resblock_forward.4} parent=0 // loop_footer
    %s14 = sadd.s32 1, %s10
  $region7: #{resblock_forward.4} parent=0 // loop_footer_branch
    %9 = sbr.rel target = $region3
  $region8: #{resblock_forward.4} parent=0 // loop_exit
    _

// kernel: resblock_forward.7
$region0: #{resblock_forward.7}
  #allocation0 [shape = 'u32[]', space=smem, size = 0x4, offset = 0x4, fixed_abs, tag = 'smem constant byte address 0x4 - core index']
  #allocation1 [shape = 'u32[144,128]{1,0:T(1,128)}', space=vmem, size = 0x12000, scoped, tag = 'internal scratch']
  %s0 = inlined_call_operand.vmem [shape: bf16[128,128], index: 0, kind: input, shape index: {}]
  %s1 = inlined_call_operand.vmem [shape: bf16[128,128], index: 1, kind: input, shape index: {}]
  %s2 = inlined_call_operand.vmem [shape: f32[1,128], index: 2, kind: input, shape index: {}]
  %s3 = inlined_call_operand.vmem [shape: f32[1,128], index: 3, kind: input, shape index: {}]
  %s4 = inlined_call_operand.vmem [shape: f32[1,128], index: 4, kind: input, shape index: {}]
  %s5 = inlined_call_operand.vmem [shape: f32[1,128], index: 5, kind: input, shape index: {}]
  %s6 = inlined_call_operand.vmem [shape: f32[128,128], index: 6, kind: output, shape index: {}]
  %s7 = sld [smem:[#allocation0]]
  $region34: #{resblock_forward.7} parent=0
    _
  %s9 = ssub.s32 1, %s7
  %s10 = scalar_select 0, %s9, %s7
  // Predicated region
  $region2: #{resblock_forward.7} parent=0 // pred_check
    _
  $region3: #{resblock_forward.7} parent=0 // pred_check_branch
    %12 = sbr.rel (0) target = $region5
  $region4: #{resblock_forward.7} parent=0 // pred_region
    _
  $region5: #{resblock_forward.7} parent=0 // pred_fallthru
    _
  // Predicated region
  $region6: #{resblock_forward.7} parent=0 // pred_check
    _
  $region7: #{resblock_forward.7} parent=0 // pred_check_branch
    %14 = sbr.rel (0) target = $region9
  $region8: #{resblock_forward.7} parent=0 // pred_region
    _
  $region9: #{resblock_forward.7} parent=0 // pred_fallthru
    _
  // Predicated region
  $region10: #{resblock_forward.7} parent=0 // pred_check
    _
  $region11: #{resblock_forward.7} parent=0 // pred_check_branch
    %16 = sbr.rel (0) target = $region13
  $region12: #{resblock_forward.7} parent=0 // pred_region
    _
  $region13: #{resblock_forward.7} parent=0 // pred_fallthru
    _
  // Predicated region
  $region14: #{resblock_forward.7} parent=0 // pred_check
    _
  $region15: #{resblock_forward.7} parent=0 // pred_check_branch
    %18 = sbr.rel (0) target = $region17
  $region16: #{resblock_forward.7} parent=0 // pred_region
    _
  $region17: #{resblock_forward.7} parent=0 // pred_fallthru
    _
  // Predicated region
  $region18: #{resblock_forward.7} parent=0 // pred_check
    _
  $region19: #{resblock_forward.7} parent=0 // pred_check_branch
    %20 = sbr.rel (0) target = $region21
  $region20: #{resblock_forward.7} parent=0 // pred_region
    _
  $region21: #{resblock_forward.7} parent=0 // pred_fallthru
    _
  // Predicated region
  $region22: #{resblock_forward.7} parent=0 // pred_check
    _
  $region23: #{resblock_forward.7} parent=0 // pred_check_branch
    %22 = sbr.rel (0) target = $region25
  $region24: #{resblock_forward.7} parent=0 // pred_region
    _
  $region25: #{resblock_forward.7} parent=0 // pred_fallthru
    _
  %v23 = vld [vmem:[%s0] sm:$0xf]
  %v24 = vld [vmem:[%s0 + $0x4] sm:$0xf]
  %v25 = vld [vmem:[%s0 + $0x8] sm:$0xf]
  %v26 = vld [vmem:[%s0 + $0xc] sm:$0xf]
  %v27 = vld [vmem:[%s0 + $0x10] sm:$0xf]
  %v28 = vld [vmem:[%s0 + $0x14] sm:$0xf]
  %v29 = vld [vmem:[%s0 + $0x18] sm:$0xf]
  %v30 = vld [vmem:[%s0 + $0x1c] sm:$0xf]
  %v31 = vld [vmem:[%s0 + $0x20] sm:$0xf]
  %v32 = vld [vmem:[%s0 + $0x24] sm:$0xf]
  %v33 = vld [vmem:[%s0 + $0x28] sm:$0xf]
  %v34 = vld [vmem:[%s0 + $0x2c] sm:$0xf]
  %v35 = vld [vmem:[%s0 + $0x30] sm:$0xf]
  %v36 = vld [vmem:[%s0 + $0x34] sm:$0xf]
  %v37 = vld [vmem:[%s0 + $0x38] sm:$0xf]
  %v38 = vld [vmem:[%s0 + $0x3c] sm:$0xf]
  %v39 = vunpack.c.l.bf16 %v23
  %v40 = vunpack.c.l.bf16 %v24
  %v41 = vunpack.c.l.bf16 %v25
  %v42 = vunpack.c.l.bf16 %v26
  %v43 = vunpack.c.l.bf16 %v27
  %v44 = vunpack.c.l.bf16 %v28
  %v45 = vunpack.c.l.bf16 %v29
  %v46 = vunpack.c.l.bf16 %v30
  %v47 = vunpack.c.l.bf16 %v31
  %v48 = vunpack.c.l.bf16 %v32
  %v49 = vunpack.c.l.bf16 %v33
  %v50 = vunpack.c.l.bf16 %v34
  %v51 = vunpack.c.l.bf16 %v35
  %v52 = vunpack.c.l.bf16 %v36
  %v53 = vunpack.c.l.bf16 %v37
  %v54 = vunpack.c.l.bf16 %v38
  %v55 = vld [vmem:[%s2] sm:$0x1]
  %v57 = vlaneseq
  %v58 = vshrl.u32 %v57, 7
  %v59 = vsub.s32 0, %v58
  %v60 = vrot.slane %v55, %v59
  %v62 = vmul.f32 %v39, %v60
  %v63 = vmul.f32 %v40, %v60
  %v64 = vmul.f32 %v41, %v60
  %v65 = vmul.f32 %v42, %v60
  %v66 = vmul.f32 %v43, %v60
  %v67 = vmul.f32 %v44, %v60
  %v68 = vmul.f32 %v45, %v60
  %v69 = vmul.f32 %v46, %v60
  %v70 = vmul.f32 %v47, %v60
  %v71 = vmul.f32 %v48, %v60
  %v72 = vmul.f32 %v49, %v60
  %v73 = vmul.f32 %v50, %v60
  %v74 = vmul.f32 %v51, %v60
  %v75 = vmul.f32 %v52, %v60
  %v76 = vmul.f32 %v53, %v60
  %v77 = vmul.f32 %v54, %v60
  %v78 = vld [vmem:[%s3] sm:$0x1]
  %v80 = vlaneseq
  %v81 = vshrl.u32 %v80, 7
  %v82 = vsub.s32 0, %v81
  %v83 = vrot.slane %v78, %v82
  %v85 = vadd.f32 %v62, %v83
  %v86 = vadd.f32 %v63, %v83
  %v87 = vadd.f32 %v64, %v83
  %v88 = vadd.f32 %v65, %v83
  %v89 = vadd.f32 %v66, %v83
  %v90 = vadd.f32 %v67, %v83
  %v91 = vadd.f32 %v68, %v83
  %v92 = vadd.f32 %v69, %v83
  %v93 = vadd.f32 %v70, %v83
  %v94 = vadd.f32 %v71, %v83
  %v95 = vadd.f32 %v72, %v83
  %v96 = vadd.f32 %v73, %v83
  %v97 = vadd.f32 %v74, %v83
  %v98 = vadd.f32 %v75, %v83
  %v99 = vadd.f32 %v76, %v83
  %v100 = vadd.f32 %v77, %v83
  %v101 = vld [vmem:[%s1] sm:$0xf]
  %v102 = vld [vmem:[%s1 + $0x4] sm:$0xf]
  %v103 = vld [vmem:[%s1 + $0x8] sm:$0xf]
  %v104 = vld [vmem:[%s1 + $0xc] sm:$0xf]
  %v105 = vld [vmem:[%s1 + $0x10] sm:$0xf]
  %v106 = vld [vmem:[%s1 + $0x14] sm:$0xf]
  %v107 = vld [vmem:[%s1 + $0x18] sm:$0xf]
  %v108 = vld [vmem:[%s1 + $0x1c] sm:$0xf]
  %v109 = vld [vmem:[%s1 + $0x20] sm:$0xf]
  %v110 = vld [vmem:[%s1 + $0x24] sm:$0xf]
  %v111 = vld [vmem:[%s1 + $0x28] sm:$0xf]
  %v112 = vld [vmem:[%s1 + $0x2c] sm:$0xf]
  %v113 = vld [vmem:[%s1 + $0x30] sm:$0xf]
  %v114 = vld [vmem:[%s1 + $0x34] sm:$0xf]
  %v115 = vld [vmem:[%s1 + $0x38] sm:$0xf]
  %v116 = vld [vmem:[%s1 + $0x3c] sm:$0xf]
  %v117 = vunpack.c.l.bf16 %v101
  %v118 = vunpack.c.l.bf16 %v102
  %v119 = vunpack.c.l.bf16 %v103
  %v120 = vunpack.c.l.bf16 %v104
  %v121 = vunpack.c.l.bf16 %v105
  %v122 = vunpack.c.l.bf16 %v106
  %v123 = vunpack.c.l.bf16 %v107
  %v124 = vunpack.c.l.bf16 %v108
  %v125 = vunpack.c.l.bf16 %v109
  %v126 = vunpack.c.l.bf16 %v110
  %v127 = vunpack.c.l.bf16 %v111
  %v128 = vunpack.c.l.bf16 %v112
  %v129 = vunpack.c.l.bf16 %v113
  %v130 = vunpack.c.l.bf16 %v114
  %v131 = vunpack.c.l.bf16 %v115
  %v132 = vunpack.c.l.bf16 %v116
  %v133 = vld [vmem:[%s4] sm:$0x1]
  %v135 = vlaneseq
  %v136 = vshrl.u32 %v135, 7
  %v137 = vsub.s32 0, %v136
  %v138 = vrot.slane %v133, %v137
  %v140 = vmul.f32 %v117, %v138
  %v141 = vmul.f32 %v118, %v138
  %v142 = vmul.f32 %v119, %v138
  %v143 = vmul.f32 %v120, %v138
  %v144 = vmul.f32 %v121, %v138
  %v145 = vmul.f32 %v122, %v138
  %v146 = vmul.f32 %v123, %v138
  %v147 = vmul.f32 %v124, %v138
  %v148 = vmul.f32 %v125, %v138
  %v149 = vmul.f32 %v126, %v138
  %v150 = vmul.f32 %v127, %v138
  %v151 = vmul.f32 %v128, %v138
  %v152 = vmul.f32 %v129, %v138
  %v153 = vmul.f32 %v130, %v138
  %v154 = vmul.f32 %v131, %v138
  %v155 = vmul.f32 %v132, %v138
  %v156 = vld [vmem:[%s5] sm:$0x1]
  %v158 = vlaneseq
  %v159 = vshrl.u32 %v158, 7
  %v160 = vsub.s32 0, %v159
  %v161 = vrot.slane %v156, %v160
  %v163 = vadd.f32 %v140, %v161
  %v164 = vadd.f32 %v141, %v161
  %v165 = vadd.f32 %v142, %v161
  %v166 = vadd.f32 %v143, %v161
  %v167 = vadd.f32 %v144, %v161
  %v168 = vadd.f32 %v145, %v161
  %v169 = vadd.f32 %v146, %v161
  %v170 = vadd.f32 %v147, %v161
  %v171 = vadd.f32 %v148, %v161
  %v172 = vadd.f32 %v149, %v161
  %v173 = vadd.f32 %v150, %v161
  %v174 = vadd.f32 %v151, %v161
  %v175 = vadd.f32 %v152, %v161
  %v176 = vadd.f32 %v153, %v161
  %v177 = vadd.f32 %v154, %v161
  %v178 = vadd.f32 %v155, %v161
  %v179 = vadd.f32 %v85, %v163
  %v180 = vadd.f32 %v86, %v164
  %v181 = vadd.f32 %v87, %v165
  %v182 = vadd.f32 %v88, %v166
  %v183 = vadd.f32 %v89, %v167
  %v184 = vadd.f32 %v90, %v168
  %v185 = vadd.f32 %v91, %v169
  %v186 = vadd.f32 %v92, %v170
  %v187 = vadd.f32 %v93, %v171
  %v188 = vadd.f32 %v94, %v172
  %v189 = vadd.f32 %v95, %v173
  %v190 = vadd.f32 %v96, %v174
  %v191 = vadd.f32 %v97, %v175
  %v192 = vadd.f32 %v98, %v176
  %v193 = vadd.f32 %v99, %v177
  %v194 = vadd.f32 %v100, %v178
  %v195 = vmax.f32 %v179, 0.0
  %v196 = vmax.f32 %v180, 0.0
  %v197 = vmax.f32 %v181, 0.0
  %v198 = vmax.f32 %v182, 0.0
  %v199 = vmax.f32 %v183, 0.0
  %v200 = vmax.f32 %v184, 0.0
  %v201 = vmax.f32 %v185, 0.0
  %v202 = vmax.f32 %v186, 0.0
  %v203 = vmax.f32 %v187, 0.0
  %v204 = vmax.f32 %v188, 0.0
  %v205 = vmax.f32 %v189, 0.0
  %v206 = vmax.f32 %v190, 0.0
  %v207 = vmax.f32 %v191, 0.0
  %v208 = vmax.f32 %v192, 0.0
  %v209 = vmax.f32 %v193, 0.0
  %v210 = vmax.f32 %v194, 0.0
  %211 = vst [vmem:[%s6] sm:$0xff] %v195
  %212 = vst [vmem:[%s6 + $0x8] sm:$0xff] %v196
  %213 = vst [vmem:[%s6 + $0x10] sm:$0xff] %v197
  %214 = vst [vmem:[%s6 + $0x18] sm:$0xff] %v198
  %215 = vst [vmem:[%s6 + $0x20] sm:$0xff] %v199
  %216 = vst [vmem:[%s6 + $0x28] sm:$0xff] %v200
  %217 = vst [vmem:[%s6 + $0x30] sm:$0xff] %v201
  %218 = vst [vmem:[%s6 + $0x38] sm:$0xff] %v202
  %219 = vst [vmem:[%s6 + $0x40] sm:$0xff] %v203
  %220 = vst [vmem:[%s6 + $0x48] sm:$0xff] %v204
  %221 = vst [vmem:[%s6 + $0x50] sm:$0xff] %v205
  %222 = vst [vmem:[%s6 + $0x58] sm:$0xff] %v206
  %223 = vst [vmem:[%s6 + $0x60] sm:$0xff] %v207
  %224 = vst [vmem:[%s6 + $0x68] sm:$0xff] %v208
  %225 = vst [vmem:[%s6 + $0x70] sm:$0xff] %v209
  %226 = vst [vmem:[%s6 + $0x78] sm:$0xff] %v210
  // Predicated region
  $region26: #{resblock_forward.7} parent=0 // pred_check
    _
  $region27: #{resblock_forward.7} parent=0 // pred_check_branch
    %228 = sbr.rel (0) target = $region29
  $region28: #{resblock_forward.7} parent=0 // pred_region
    _
  $region29: #{resblock_forward.7} parent=0 // pred_fallthru
    _
  // Predicated region
  $region30: #{resblock_forward.7} parent=0 // pred_check
    _
  $region31: #{resblock_forward.7} parent=0 // pred_check_branch
    %230 = sbr.rel (0) target = $region33
  $region32: #{resblock_forward.7} parent=0 // pred_region
    _
  $region33: #{resblock_forward.7} parent=0 // pred_fallthru
    _

// kernel: resblock_forward.6
$region0: #{resblock_forward.6}
  #allocation0 [shape = 'u32[]', space=smem, size = 0x4, offset = 0x4, fixed_abs, tag = 'smem constant byte address 0x4 - core index']
  #allocation1 [shape = 'u32[144,128]{1,0:T(1,128)}', space=vmem, size = 0x12000, scoped, tag = 'internal scratch']
  %s0 = inlined_call_operand.vmem [shape: bf16[128,128], index: 0, kind: input, shape index: {}]
  %s1 = inlined_call_operand.vmem [shape: bf16[128,128], index: 1, kind: input, shape index: {}]
  %s2 = inlined_call_operand.vmem [shape: bf16[128,128], index: 2, kind: input, shape index: {}]
  %s3 = inlined_call_operand.vmem [shape: bf16[128,128], index: 3, kind: input, shape index: {}]
  %s4 = inlined_call_operand.vmem [shape: bf16[128,128], index: 4, kind: output, shape index: {0}]
  %s5 = inlined_call_operand.vmem [shape: bf16[128,128], index: 5, kind: output, shape index: {1}]
  %s6 = inlined_call_operand.vmem [shape: f32[2,16,128], index: 6, kind: output, shape index: {2}]
  %s7 = inlined_call_operand.vmem [shape: f32[2,16,128], index: 7, kind: output, shape index: {3}]
  %8 = xla_tuple %s4, %s5, %s6, %s7
  %s9 = sld [smem:[#allocation0]]
  $region77: #{resblock_forward.6} parent=0
    _
  %s11 = ssub.s32 1, %s9
  %s12 = scalar_select 0, %s11, %s9
  loop: start=0, step=1, limit=4
  $region2: #{resblock_forward.6} parent=0 // loop_pre_header
    _
  $region3: #{resblock_forward.6} parent=0 // loop_header
    %s14 = sphi 0, %s18
    %p15 = scmp.ge.s32.totalorder %s14, 4
    %s21 = sphi 0, %s33
    %s22 = sphi 0, %s29
    %s23 = sphi 0, %s21
    %s24 = sphi 0, %s22
    %s25 = sphi 0, %s23
    %s26 = sphi 0, %s24
    %s38 = sphi 0, %s40
    %s41 = sphi 0, %s38
    %s42 = sphi 0, %s41
    %s58 = sphi 0, %s42
    %s62 = sphi 0, %s62
    %s64 = sphi 0, %s62
    %s65 = sphi 0, %s64
    %s79 = sphi 0, %s65
    %s87 = sphi 0, %s89
    %s90 = sphi 0, %s87
    %s91 = sphi 0, %s90
    %s107 = sphi 0, %s91
    %s111 = sphi 0, %s111
    %s113 = sphi 0, %s111
    %s114 = sphi 0, %s113
    %s128 = sphi 0, %s114
    %s136 = sphi 0, %s138
    %s139 = sphi 0, %s136
    %s140 = sphi 0, %s139
    %s156 = sphi 0, %s140
    %s164 = sphi 0, %s166
    %s167 = sphi 0, %s164
    %s168 = sphi 0, %s167
    %s184 = sphi 0, %s168
    %s190 = sphi 0, %s192
    %s193 = sphi 0, %s190
    %s194 = sphi 0, %s193
    %s210 = sphi 0, %s194
    %s216 = sphi 0, %s218
    %s219 = sphi 0, %s216
    %s220 = sphi 0, %s219
    %s236 = sphi 0, %s220
  $region4: #{resblock_forward.6} parent=0 // loop_header_branch
    %17 = sbr.rel (%p15) target = $region8
  $region5: #{resblock_forward.6} parent=0 // loop_body
    %s19 = ssub.s32 %s14, 1
    %s20 = ssub.s32 %s14, 2
    %s27 = sadd.s32 1, %s22
    %p28 = scmp.ge.s32.totalorder %s27, 1
    %s29 = scalar_select %p28, 0, %s27
    %s30 = sadd.s32 1, %s21
    %s31 = scalar_select %p28, %s30, %s21
    %p32 = scmp.ge.s32.totalorder %s31, 2
    %s33 = scalar_select %p32, 0, %s31
    %s34 = sadd.s32 %s21, %s22
    %s35 = sadd.s32 %s33, %s29
    %s36 = ssub.s32 %s34, %s35
    %p37 = scmp.eq.s32.totalorder %s36, 0
    %s39 = sadd.s32 %s38, 1
    %s40 = scalar_select %p37, %s38, %s39
    %p43 = pneg %p37
    %p44 = scmp.eq.s32.totalorder %s14, 1
    %p45 = por %p43, %p44
    %p46 = scmp.ne.s32.totalorder %s38, %s41
    %p47 = scmp.eq.s32.totalorder %s14, 0
    %p48 = por %p46, %p47
    %p49 = scmp.ne.s32.totalorder %s38, %s41
    %p50 = scmp.eq.s32.totalorder %s19, 1
    %p51 = por %p49, %p50
    %p52 = scmp.ne.s32.totalorder %s41, %s42
    %p53 = scmp.eq.s32.totalorder %s19, 0
    %p54 = por %p52, %p53
    %p55 = scmp.ne.s32.totalorder %s41, %s42
    %p56 = scmp.eq.s32.totalorder %s20, 1
    %p57 = por %p55, %p56
    %p59 = scmp.ne.s32.totalorder %s42, %s58
    %p60 = scmp.eq.s32.totalorder %s20, 0
    %p61 = por %p59, %p60
    %s63 = sadd.s32 %s62, 1
    %p66 = scmp.eq.s32.totalorder %s14, 1
    %p67 = scmp.ne.s32.totalorder %s62, %s64
    %p68 = scmp.eq.s32.totalorder %s14, 0
    %p69 = por %p67, %p68
    %p70 = scmp.ne.s32.totalorder %s62, %s64
    %p71 = scmp.eq.s32.totalorder %s19, 1
    %p72 = por %p70, %p71
    %p73 = scmp.ne.s32.totalorder %s64, %s65
    %p74 = scmp.eq.s32.totalorder %s19, 0
    %p75 = por %p73, %p74
    %p76 = scmp.ne.s32.totalorder %s64, %s65
    %p77 = scmp.eq.s32.totalorder %s20, 1
    %p78 = por %p76, %p77
    %p80 = scmp.ne.s32.totalorder %s65, %s79
    %p81 = scmp.eq.s32.totalorder %s20, 0
    %p82 = por %p80, %p81
    %s83 = sadd.s32 %s21, %s22
    %s84 = sadd.s32 %s33, %s29
    %s85 = ssub.s32 %s83, %s84
    %p86 = scmp.eq.s32.totalorder %s85, 0
    %s88 = sadd.s32 %s87, 1
    %s89 = scalar_select %p86, %s87, %s88
    %p92 = pneg %p86
    %p93 = scmp.eq.s32.totalorder %s14, 1
    %p94 = por %p92, %p93
    %p95 = scmp.ne.s32.totalorder %s87, %s90
    %p96 = scmp.eq.s32.totalorder %s14, 0
    %p97 = por %p95, %p96
    %p98 = scmp.ne.s32.totalorder %s87, %s90
    %p99 = scmp.eq.s32.totalorder %s19, 1
    %p100 = por %p98, %p99
    %p101 = scmp.ne.s32.totalorder %s90, %s91
    %p102 = scmp.eq.s32.totalorder %s19, 0
    %p103 = por %p101, %p102
    %p104 = scmp.ne.s32.totalorder %s90, %s91
    %p105 = scmp.eq.s32.totalorder %s20, 1
    %p106 = por %p104, %p105
    %p108 = scmp.ne.s32.totalorder %s91, %s107
    %p109 = scmp.eq.s32.totalorder %s20, 0
    %p110 = por %p108, %p109
    %s112 = sadd.s32 %s111, 1
    %p115 = scmp.eq.s32.totalorder %s14, 1
    %p116 = scmp.ne.s32.totalorder %s111, %s113
    %p117 = scmp.eq.s32.totalorder %s14, 0
    %p118 = por %p116, %p117
    %p119 = scmp.ne.s32.totalorder %s111, %s113
    %p120 = scmp.eq.s32.totalorder %s19, 1
    %p121 = por %p119, %p120
    %p122 = scmp.ne.s32.totalorder %s113, %s114
    %p123 = scmp.eq.s32.totalorder %s19, 0
    %p124 = por %p122, %p123
    %p125 = scmp.ne.s32.totalorder %s113, %s114
    %p126 = scmp.eq.s32.totalorder %s20, 1
    %p127 = por %p125, %p126
    %p129 = scmp.ne.s32.totalorder %s114, %s128
    %p130 = scmp.eq.s32.totalorder %s20, 0
    %p131 = por %p129, %p130
    %s132 = sadd.s32 %s21, %s22
    %s133 = sadd.s32 %s33, %s29
    %s134 = ssub.s32 %s132, %s133
    %p135 = scmp.eq.s32.totalorder %s134, 0
    %s137 = sadd.s32 %s136, 1
    %s138 = scalar_select %p135, %s136, %s137
    %p141 = pneg %p135
    %p142 = scmp.eq.s32.totalorder %s14, 1
    %p143 = por %p141, %p142
    %p144 = scmp.ne.s32.totalorder %s136, %s139
    %p145 = scmp.eq.s32.totalorder %s14, 0
    %p146 = por %p144, %p145
    %p147 = scmp.ne.s32.totalorder %s136, %s139
    %p148 = scmp.eq.s32.totalorder %s19, 1
    %p149 = por %p147, %p148
    %p150 = scmp.ne.s32.totalorder %s139, %s140
    %p151 = scmp.eq.s32.totalorder %s19, 0
    %p152 = por %p150, %p151
    %p153 = scmp.ne.s32.totalorder %s139, %s140
    %p154 = scmp.eq.s32.totalorder %s20, 1
    %p155 = por %p153, %p154
    %p157 = scmp.ne.s32.totalorder %s140, %s156
    %p158 = scmp.eq.s32.totalorder %s20, 0
    %p159 = por %p157, %p158
    %s160 = sadd.s32 %s21, %s22
    %s161 = sadd.s32 %s33, %s29
    %s162 = ssub.s32 %s160, %s161
    %p163 = scmp.eq.s32.totalorder %s162, 0
    %s165 = sadd.s32 %s164, 1
    %s166 = scalar_select %p163, %s164, %s165
    %p169 = pneg %p163
    %p170 = scmp.eq.s32.totalorder %s14, 1
    %p171 = por %p169, %p170
    %p172 = scmp.ne.s32.totalorder %s164, %s167
    %p173 = scmp.eq.s32.totalorder %s14, 0
    %p174 = por %p172, %p173
    %p175 = scmp.ne.s32.totalorder %s164, %s167
    %p176 = scmp.eq.s32.totalorder %s19, 1
    %p177 = por %p175, %p176
    %p178 = scmp.ne.s32.totalorder %s167, %s168
    %p179 = scmp.eq.s32.totalorder %s19, 0
    %p180 = por %p178, %p179
    %p181 = scmp.ne.s32.totalorder %s167, %s168
    %p182 = scmp.eq.s32.totalorder %s20, 1
    %p183 = por %p181, %p182
    %p185 = scmp.ne.s32.totalorder %s168, %s184
    %p186 = scmp.eq.s32.totalorder %s20, 0
    %p187 = por %p185, %p186
    %s188 = ssub.s32 %s21, %s33
    %p189 = scmp.eq.s32.totalorder %s188, 0
    %s191 = sadd.s32 %s190, 1
    %s192 = scalar_select %p189, %s190, %s191
    %p195 = pneg %p189
    %p196 = scmp.eq.s32.totalorder %s14, 1
    %p197 = por %p195, %p196
    %p198 = scmp.ne.s32.totalorder %s190, %s193
    %p199 = scmp.eq.s32.totalorder %s14, 0
    %p200 = por %p198, %p199
    %p201 = scmp.ne.s32.totalorder %s190, %s193
    %p202 = scmp.eq.s32.totalorder %s19, 1
    %p203 = por %p201, %p202
    %p204 = scmp.ne.s32.totalorder %s193, %s194
    %p205 = scmp.eq.s32.totalorder %s19, 0
    %p206 = por %p204, %p205
    %p207 = scmp.ne.s32.totalorder %s193, %s194
    %p208 = scmp.eq.s32.totalorder %s20, 1
    %p209 = por %p207, %p208
    %p211 = scmp.ne.s32.totalorder %s194, %s210
    %p212 = scmp.eq.s32.totalorder %s20, 0
    %p213 = por %p211, %p212
    %s214 = ssub.s32 %s21, %s33
    %p215 = scmp.eq.s32.totalorder %s214, 0
    %s217 = sadd.s32 %s216, 1
    %s218 = scalar_select %p215, %s216, %s217
    %p221 = pneg %p215
    %p222 = scmp.eq.s32.totalorder %s14, 1
    %p223 = por %p221, %p222
    %p224 = scmp.ne.s32.totalorder %s216, %s219
    %p225 = scmp.eq.s32.totalorder %s14, 0
    %p226 = por %p224, %p225
    %p227 = scmp.ne.s32.totalorder %s216, %s219
    %p228 = scmp.eq.s32.totalorder %s19, 1
    %p229 = por %p227, %p228
    %p230 = scmp.ne.s32.totalorder %s219, %s220
    %p231 = scmp.eq.s32.totalorder %s19, 0
    %p232 = por %p230, %p231
    %p233 = scmp.ne.s32.totalorder %s219, %s220
    %p234 = scmp.eq.s32.totalorder %s20, 1
    %p235 = por %p233, %p234
    %p237 = scmp.ne.s32.totalorder %s220, %s236
    %p238 = scmp.eq.s32.totalorder %s20, 0
    %p239 = por %p237, %p238
    %p240 = scmp.le.s32.totalorder 1, %s14
    %p241 = scmp.lt.s32.totalorder %s14, 3
    %p242 = pnand %p240, %p241
    %p243 = pneg %p242
    // Predicated region
    $region9: #{resblock_forward.6} parent=5 // pred_check
      _
    $region10: #{resblock_forward.6} parent=5 // pred_check_branch
      %245 = sbr.rel (%p242) target = $region12
    $region11: #{resblock_forward.6} parent=5 // pred_region
      %s246 = ssub.s32 %s14, 1
      // Predicated region
      $region13: #{resblock_forward.6} parent=11 // pred_check
        %p247 = pneg %p75
      $region14: #{resblock_forward.6} parent=11 // pred_check_branch
        %249 = sbr.rel (%p247) target = $region16
      $region15: #{resblock_forward.6} parent=11 // pred_region
        _
      $region16: #{resblock_forward.6} parent=11 // pred_fallthru
        _
      // Predicated region
      $region17: #{resblock_forward.6} parent=11 // pred_check
        %p250 = pneg %p124
      $region18: #{resblock_forward.6} parent=11 // pred_check_branch
        %252 = sbr.rel (%p250) target = $region20
      $region19: #{resblock_forward.6} parent=11 // pred_region
        _
      $region20: #{resblock_forward.6} parent=11 // pred_fallthru
        _
    $region12: #{resblock_forward.6} parent=5 // pred_fallthru
      _
    %p253 = scmp.lt.s32.totalorder %s14, 2
    // Predicated region
    $region21: #{resblock_forward.6} parent=5 // pred_check
      %p254 = pneg %p253
    $region22: #{resblock_forward.6} parent=5 // pred_check_branch
      %256 = sbr.rel (%p254) target = $region24
    $region23: #{resblock_forward.6} parent=5 // pred_region
      // Predicated region
      $region25: #{resblock_forward.6} parent=23 // pred_check
        %p257 = pneg %p48
      $region26: #{resblock_forward.6} parent=23 // pred_check_branch
        %259 = sbr.rel (%p257) target = $region28
      $region27: #{resblock_forward.6} parent=23 // pred_region
        %s260 = sadd.s32 %s21, %s22
        %s261 = smul.u32 8, %s260
        %p262 = scmp.lt.s32.totalorder %s261, 15
        %s263 = scalar_select %p262, %s261, 15
        %s264 = smul.addr %s263, 4
        %s265 = scalar_lea.vmem %s0, %s264
        %s266 = sadd.s32 %s21, %s22
        %s267 = smul.u32 8, %s266
      $region28: #{resblock_forward.6} parent=23 // pred_fallthru
        _
      // Predicated region
      $region29: #{resblock_forward.6} parent=23 // pred_check
        %p268 = pneg %p97
      $region30: #{resblock_forward.6} parent=23 // pred_check_branch
        %270 = sbr.rel (%p268) target = $region32
      $region31: #{resblock_forward.6} parent=23 // pred_region
        %s271 = sadd.s32 %s21, %s22
        %s272 = smul.u32 8, %s271
        %p273 = scmp.lt.s32.totalorder %s272, 15
        %s274 = scalar_select %p273, %s272, 15
        %s275 = smul.addr %s274, 4
        %s276 = scalar_lea.vmem %s2, %s275
        %s277 = sadd.s32 %s21, %s22
        %s278 = smul.u32 8, %s277
      $region32: #{resblock_forward.6} parent=23 // pred_fallthru
        _
    $region24: #{resblock_forward.6} parent=5 // pred_fallthru
      _
    %p279 = scmp.le.s32.totalorder 1, %s14
    %p280 = scmp.lt.s32.totalorder %s14, 3
    %p281 = pnand %p279, %p280
    %p282 = pneg %p281
    // Predicated region
    $region33: #{resblock_forward.6} parent=5 // pred_check
      _
    $region34: #{resblock_forward.6} parent=5 // pred_check_branch
      %284 = sbr.rel (%p281) target = $region36
    $region35: #{resblock_forward.6} parent=5 // pred_region
      %s285 = ssub.s32 %s14, 1
      %s286 = sadd.s32 %s23, %s24
      %s287 = smul.u32 8, %s286
      %p288 = scmp.lt.s32.totalorder %s287, 15
      %s289 = scalar_select %p288, %s287, 15
      %s290 = smul.addr %s289, 4
      %s291 = scalar_lea.vmem %s0, %s290
      %p292 = pneg %p54
      %p293 = pneg %p51
      %p294 = pneg %p75
      %p295 = pneg %p72
      %s296 = sadd.s32 %s23, %s24
      %s297 = smul.u32 8, %s296
      %p298 = scmp.lt.s32.totalorder %s297, 15
      %s299 = scalar_select %p298, %s297, 15
      %s300 = smul.addr %s299, 4
      %s301 = scalar_lea.vmem %s2, %s300
      %p302 = pneg %p103
      %p303 = pneg %p100
      %p304 = pneg %p124
      %p305 = pneg %p121
      %p306 = pneg %p152
      %p307 = pneg %p149
      %s308 = sadd.s32 %s23, %s24
      %s309 = smul.u32 8, %s308
      %p310 = scmp.lt.s32.totalorder %s309, 15
      %s311 = scalar_select %p310, %s309, 15
      %s312 = smul.addr %s311, 4
      %s313 = scalar_lea.vmem %s4, %s312
      %p314 = pneg %p180
      %p315 = pneg %p177
      %s316 = sadd.s32 %s23, %s24
      %s317 = smul.u32 8, %s316
      %p318 = scmp.lt.s32.totalorder %s317, 15
      %s319 = scalar_select %p318, %s317, 15
      %s320 = smul.addr %s319, 4
      %s321 = scalar_lea.vmem %s5, %s320
      %p322 = pneg %p206
      %p323 = pneg %p203
      %p324 = scmp.lt.s32.totalorder %s23, 1
      %s325 = scalar_select %p324, %s23, 1
      %s326 = smul.addr %s325, 2
      %s327 = smul.addr %s326, 8
      %s328 = scalar_lea.vmem %s6, %s327
      %p329 = pneg %p232
      %p330 = pneg %p229
      %p331 = scmp.lt.s32.totalorder %s23, 1
      %s332 = scalar_select %p331, %s23, 1
      %s333 = smul.addr %s332, 2
      %s334 = smul.addr %s333, 8
      %s335 = scalar_lea.vmem %s7, %s334
      %s336 = sadd.s32 %s23, %s24
      %s337 = smul.u32 8, %s336
      %p338 = scmp.lt.s32.totalorder %s337, 15
      %s339 = scalar_select %p338, %s337, 15
      %s340 = smul.addr %s339, 4
      %s341 = scalar_lea.vmem %s0, %s340
      %s342 = sadd.s32 %s23, %s24
      %s343 = smul.u32 8, %s342
      %s344 = sadd.s32 %s23, %s24
      %s345 = smul.u32 8, %s344
      %p346 = scmp.lt.s32.totalorder %s345, 15
      %s347 = scalar_select %p346, %s345, 15
      %s348 = smul.addr %s347, 4
      %s349 = scalar_lea.vmem %s2, %s348
      %s350 = sadd.s32 %s23, %s24
      %s351 = smul.u32 8, %s350
      %s352 = sadd.s32 %s23, %s24
      %s353 = smul.u32 8, %s352
      %p354 = scmp.lt.s32.totalorder %s353, 15
      %s355 = scalar_select %p354, %s353, 15
      %s356 = smul.addr %s355, 4
      %s357 = scalar_lea.vmem %s4, %s356
      %s358 = sadd.s32 %s23, %s24
      %s359 = smul.u32 8, %s358
      %s360 = sadd.s32 %s23, %s24
      %s361 = smul.u32 8, %s360
      %p362 = scmp.lt.s32.totalorder %s361, 15
      %s363 = scalar_select %p362, %s361, 15
      %s364 = smul.addr %s363, 4
      %s365 = scalar_lea.vmem %s5, %s364
      %s366 = sadd.s32 %s23, %s24
      %s367 = smul.u32 8, %s366
      %p368 = scmp.lt.s32.totalorder %s23, 1
      %s369 = scalar_select %p368, %s23, 1
      %s370 = smul.addr %s369, 2
      %s371 = smul.addr %s370, 8
      %s372 = scalar_lea.vmem %s6, %s371
      %p373 = scmp.lt.s32.totalorder %s23, 1
      %s374 = scalar_select %p373, %s23, 1
      %s375 = smul.addr %s374, 2
      %s376 = smul.addr %s375, 8
      %s377 = scalar_lea.vmem %s7, %s376
      %p379 = scmp.eq.s32.totalorder %s24, 0
      // Predicated region
      $region37: #{resblock_forward.6} parent=35 // pred_check
        %p380 = pneg %p379
      $region38: #{resblock_forward.6} parent=35 // pred_check_branch
        %382 = sbr.rel (%p380) target = $region40
      $region39: #{resblock_forward.6} parent=35 // pred_region
        %383 = vst [vmem:[%s372] sm:$0xff] 0.0
        %384 = vst [vmem:[%s372 + $0x8] sm:$0xff] 0.0
        %385 = vst [vmem:[%s377] sm:$0xff] 0.0
        %386 = vst [vmem:[%s377 + $0x8] sm:$0xff] 0.0
      $region40: #{resblock_forward.6} parent=35 // pred_fallthru
        _
      %v387 = vld [vmem:[%s341] sm:$0xf]
      %v388 = vld [vmem:[%s341 + $0x4] sm:$0xf]
      %v389 = vld [vmem:[%s341 + $0x8] sm:$0xf]
      %v390 = vld [vmem:[%s341 + $0xc] sm:$0xf]
      %v391 = vld [vmem:[%s341 + $0x10] sm:$0xf]
      %v392 = vld [vmem:[%s341 + $0x14] sm:$0xf]
      %v393 = vld [vmem:[%s341 + $0x18] sm:$0xf]
      %v394 = vld [vmem:[%s341 + $0x1c] sm:$0xf]
      %v395 = vld [vmem:[%s1] sm:$0xf]
      %v396 = vld [vmem:[%s1 + $0x4] sm:$0xf]
      %v397 = vld [vmem:[%s1 + $0x8] sm:$0xf]
      %v398 = vld [vmem:[%s1 + $0xc] sm:$0xf]
      %v399 = vld [vmem:[%s1 + $0x10] sm:$0xf]
      %v400 = vld [vmem:[%s1 + $0x14] sm:$0xf]
      %v401 = vld [vmem:[%s1 + $0x18] sm:$0xf]
      %v402 = vld [vmem:[%s1 + $0x1c] sm:$0xf]
      %v403 = vld [vmem:[%s1 + $0x20] sm:$0xf]
      %v404 = vld [vmem:[%s1 + $0x24] sm:$0xf]
      %v405 = vld [vmem:[%s1 + $0x28] sm:$0xf]
      %v406 = vld [vmem:[%s1 + $0x2c] sm:$0xf]
      %v407 = vld [vmem:[%s1 + $0x30] sm:$0xf]
      %v408 = vld [vmem:[%s1 + $0x34] sm:$0xf]
      %v409 = vld [vmem:[%s1 + $0x38] sm:$0xf]
      %v410 = vld [vmem:[%s1 + $0x3c] sm:$0xf]
      %v419 = vunpack.c.l.b16 %v387
      %v420 = vunpack.c.l.b16 %v388
      %v421 = vunpack.c.l.b16 %v389
      %v422 = vunpack.c.l.b16 %v390
      %v423 = vunpack.c.l.b16 %v391
      %v424 = vunpack.c.l.b16 %v392
      %v425 = vunpack.c.l.b16 %v393
      %v426 = vunpack.c.l.b16 %v394
      %v427 = vpack.c.b16 %v420, %v419
      %v428 = vpack.c.b16 %v422, %v421
      %v429 = vpack.c.b16 %v424, %v423
      %v430 = vpack.c.b16 %v426, %v425
      %v451 = vunpack.c.l.b16 %v395
      %v452 = vunpack.c.l.b16 %v396
      %v453 = vunpack.c.l.b16 %v397
      %v454 = vunpack.c.l.b16 %v398
      %v455 = vunpack.c.l.b16 %v399
      %v456 = vunpack.c.l.b16 %v400
      %v457 = vunpack.c.l.b16 %v401
      %v458 = vunpack.c.l.b16 %v402
      %v459 = vunpack.c.l.b16 %v403
      %v460 = vunpack.c.l.b16 %v404
      %v461 = vunpack.c.l.b16 %v405
      %v462 = vunpack.c.l.b16 %v406
      %v463 = vunpack.c.l.b16 %v407
      %v464 = vunpack.c.l.b16 %v408
      %v465 = vunpack.c.l.b16 %v409
      %v466 = vunpack.c.l.b16 %v410
      %v467 = vpack.c.b16 %v452, %v451
      %v468 = vpack.c.b16 %v454, %v453
      %v469 = vpack.c.b16 %v456, %v455
      %v470 = vpack.c.b16 %v458, %v457
      %v471 = vpack.c.b16 %v460, %v459
      %v472 = vpack.c.b16 %v462, %v461
      %v473 = vpack.c.b16 %v464, %v463
      %v474 = vpack.c.b16 %v466, %v465
      %483 = vmatprep.subr.bf16.mxu0 0
      %484 = vmatpush1.bf16.msra.mxu0 %v474
      %485 = vmatprep.subr.bf16.mxu0 0
      %486 = vmatpush1.bf16.msra.mxu0 %v473
      %487 = vmatprep.subr.bf16.mxu0 0
      %488 = vmatpush1.bf16.msra.mxu0 %v472
      %489 = vmatprep.subr.bf16.mxu0 0
      %490 = vmatpush1.bf16.msra.mxu0 %v471
      %491 = vmatprep.subr.bf16.mxu0 0
      %492 = vmatpush1.bf16.msra.mxu0 %v470
      %493 = vmatprep.subr.bf16.mxu0 0
      %494 = vmatpush1.bf16.msra.mxu0 %v469
      %495 = vmatprep.subr.bf16.mxu0 0
      %496 = vmatpush1.bf16.msra.mxu0 %v468
      %497 = vmatprep.subr.bf16.mxu0 0
      %498 = vmatpush1.bf16.msra.mxu0 %v467
      %499 = vmatprep.subr.bf16.mxu0 0
      %500 = vmatpush2.bf16.msra.mxu0 0
      %501 = vmatprep.subr.bf16.mxu0 0
      %502 = vmatpush2.bf16.msra.mxu0 0
      %503 = vmatprep.subr.bf16.mxu0 0
      %504 = vmatpush2.bf16.msra.mxu0 0
      %505 = vmatprep.subr.bf16.mxu0 0
      %506 = vmatpush2.bf16.msra.mxu0 0
      %507 = vmatprep.subr.bf16.mxu0 0
      %508 = vmatpush2.bf16.msra.mxu0 0
      %509 = vmatprep.subr.bf16.mxu0 0
      %510 = vmatpush2.bf16.msra.mxu0 0
      %511 = vmatprep.subr.bf16.mxu0 0
      %512 = vmatpush2.bf16.msra.mxu0 0
      %513 = vmatprep.subr.bf16.mxu0 0
      %514 = vmatpush2.bf16.msra.mxu0 0
      %515 = vmatprep.mubr.bf16.mxu0 0
      %516 = vmatmul.mubr.bf16.gmra.mxu0 %v427
      %v517 = vpop.f32.mrf.mxu0
      %v518 = vadd.f32 0.0, %v517
      %v519 = vpop.f32.mrf.mxu0
      %v520 = vpop.f32.mrf.mxu0
      %v521 = vadd.f32 0.0, %v520
      %v522 = vpop.f32.mrf.mxu0
      %523 = vmatprep.mubr.bf16.mxu0 0
      %524 = vmatmul.mubr.bf16.gmra.mxu0 %v428
      %v525 = vpop.f32.mrf.mxu0
      %v526 = vadd.f32 0.0, %v525
      %v527 = vpop.f32.mrf.mxu0
      %v528 = vpop.f32.mrf.mxu0
      %v529 = vadd.f32 0.0, %v528
      %v530 = vpop.f32.mrf.mxu0
      %531 = vmatprep.mubr.bf16.mxu0 0
      %532 = vmatmul.mubr.bf16.gmra.mxu0 %v429
      %v533 = vpop.f32.mrf.mxu0
      %v534 = vadd.f32 0.0, %v533
      %v535 = vpop.f32.mrf.mxu0
      %v536 = vpop.f32.mrf.mxu0
      %v537 = vadd.f32 0.0, %v536
      %v538 = vpop.f32.mrf.mxu0
      %539 = vmatprep.mubr.bf16.mxu0 0
      %540 = vmatmul.mubr.bf16.gmra.mxu0 %v430
      %v541 = vpop.f32.mrf.mxu0
      %v542 = vadd.f32 0.0, %v541
      %v543 = vpop.f32.mrf.mxu0
      %v544 = vpop.f32.mrf.mxu0
      %v545 = vadd.f32 0.0, %v544
      %v546 = vpop.f32.mrf.mxu0
      %547 = vdwg.mxu0
      %v548 = vld [vmem:[%s349] sm:$0xf]
      %v549 = vld [vmem:[%s349 + $0x4] sm:$0xf]
      %v550 = vld [vmem:[%s349 + $0x8] sm:$0xf]
      %v551 = vld [vmem:[%s349 + $0xc] sm:$0xf]
      %v552 = vld [vmem:[%s349 + $0x10] sm:$0xf]
      %v553 = vld [vmem:[%s349 + $0x14] sm:$0xf]
      %v554 = vld [vmem:[%s349 + $0x18] sm:$0xf]
      %v555 = vld [vmem:[%s349 + $0x1c] sm:$0xf]
      %v556 = vld [vmem:[%s3] sm:$0xf]
      %v557 = vld [vmem:[%s3 + $0x4] sm:$0xf]
      %v558 = vld [vmem:[%s3 + $0x8] sm:$0xf]
      %v559 = vld [vmem:[%s3 + $0xc] sm:$0xf]
      %v560 = vld [vmem:[%s3 + $0x10] sm:$0xf]
      %v561 = vld [vmem:[%s3 + $0x14] sm:$0xf]
      %v562 = vld [vmem:[%s3 + $0x18] sm:$0xf]
      %v563 = vld [vmem:[%s3 + $0x1c] sm:$0xf]
      %v564 = vld [vmem:[%s3 + $0x20] sm:$0xf]
      %v565 = vld [vmem:[%s3 + $0x24] sm:$0xf]
      %v566 = vld [vmem:[%s3 + $0x28] sm:$0xf]
      %v567 = vld [vmem:[%s3 + $0x2c] sm:$0xf]
      %v568 = vld [vmem:[%s3 + $0x30] sm:$0xf]
      %v569 = vld [vmem:[%s3 + $0x34] sm:$0xf]
      %v570 = vld [vmem:[%s3 + $0x38] sm:$0xf]
      %v571 = vld [vmem:[%s3 + $0x3c] sm:$0xf]
      %v580 = vunpack.c.l.b16 %v548
      %v581 = vunpack.c.l.b16 %v549
      %v582 = vunpack.c.l.b16 %v550
      %v583 = vunpack.c.l.b16 %v551
      %v584 = vunpack.c.l.b16 %v552
      %v585 = vunpack.c.l.b16 %v553
      %v586 = vunpack.c.l.b16 %v554
      %v587 = vunpack.c.l.b16 %v555
      %v588 = vpack.c.b16 %v581, %v580
      %v589 = vpack.c.b16 %v583, %v582
      %v590 = vpack.c.b16 %v585, %v584
      %v591 = vpack.c.b16 %v587, %v586
      %v612 = vunpack.c.l.b16 %v556
      %v613 = vunpack.c.l.b16 %v557
      %v614 = vunpack.c.l.b16 %v558
      %v615 = vunpack.c.l.b16 %v559
      %v616 = vunpack.c.l.b16 %v560
      %v617 = vunpack.c.l.b16 %v561
      %v618 = vunpack.c.l.b16 %v562
      %v619 = vunpack.c.l.b16 %v563
      %v620 = vunpack.c.l.b16 %v564
      %v621 = vunpack.c.l.b16 %v565
      %v622 = vunpack.c.l.b16 %v566
      %v623 = vunpack.c.l.b16 %v567
      %v624 = vunpack.c.l.b16 %v568
      %v625 = vunpack.c.l.b16 %v569
      %v626 = vunpack.c.l.b16 %v570
      %v627 = vunpack.c.l.b16 %v571
      %v628 = vpack.c.b16 %v613, %v612
      %v629 = vpack.c.b16 %v615, %v614
      %v630 = vpack.c.b16 %v617, %v616
      %v631 = vpack.c.b16 %v619, %v618
      %v632 = vpack.c.b16 %v621, %v620
      %v633 = vpack.c.b16 %v623, %v622
      %v634 = vpack.c.b16 %v625, %v624
      %v635 = vpack.c.b16 %v627, %v626
      %644 = vmatprep.subr.bf16.mxu0 0
      %645 = vmatpush1.bf16.msra.mxu0 %v635
      %646 = vmatprep.subr.bf16.mxu0 0
      %647 = vmatpush1.bf16.msra.mxu0 %v634
      %648 = vmatprep.subr.bf16.mxu0 0
      %649 = vmatpush1.bf16.msra.mxu0 %v633
      %650 = vmatprep.subr.bf16.mxu0 0
      %651 = vmatpush1.bf16.msra.mxu0 %v632
      %652 = vmatprep.subr.bf16.mxu0 0
      %653 = vmatpush1.bf16.msra.mxu0 %v631
      %654 = vmatprep.subr.bf16.mxu0 0
      %655 = vmatpush1.bf16.msra.mxu0 %v630
      %656 = vmatprep.subr.bf16.mxu0 0
      %657 = vmatpush1.bf16.msra.mxu0 %v629
      %658 = vmatprep.subr.bf16.mxu0 0
      %659 = vmatpush1.bf16.msra.mxu0 %v628
      %660 = vmatprep.subr.bf16.mxu0 0
      %661 = vmatpush2.bf16.msra.mxu0 0
      %662 = vmatprep.subr.bf16.mxu0 0
      %663 = vmatpush2.bf16.msra.mxu0 0
      %664 = vmatprep.subr.bf16.mxu0 0
      %665 = vmatpush2.bf16.msra.mxu0 0
      %666 = vmatprep.subr.bf16.mxu0 0
      %667 = vmatpush2.bf16.msra.mxu0 0
      %668 = vmatprep.subr.bf16.mxu0 0
      %669 = vmatpush2.bf16.msra.mxu0 0
      %670 = vmatprep.subr.bf16.mxu0 0
      %671 = vmatpush2.bf16.msra.mxu0 0
      %672 = vmatprep.subr.bf16.mxu0 0
      %673 = vmatpush2.bf16.msra.mxu0 0
      %674 = vmatprep.subr.bf16.mxu0 0
      %675 = vmatpush2.bf16.msra.mxu0 0
      %676 = vmatprep.mubr.bf16.mxu0 0
      %677 = vmatmul.mubr.bf16.gmra.mxu0 %v588
      %v678 = vpop.f32.mrf.mxu0
      %v679 = vadd.f32 0.0, %v678
      %v680 = vpop.f32.mrf.mxu0
      %v681 = vpop.f32.mrf.mxu0
      %v682 = vadd.f32 0.0, %v681
      %v683 = vpop.f32.mrf.mxu0
      %684 = vmatprep.mubr.bf16.mxu0 0
      %685 = vmatmul.mubr.bf16.gmra.mxu0 %v589
      %v686 = vpop.f32.mrf.mxu0
      %v687 = vadd.f32 0.0, %v686
      %v688 = vpop.f32.mrf.mxu0
      %v689 = vpop.f32.mrf.mxu0
      %v690 = vadd.f32 0.0, %v689
      %v691 = vpop.f32.mrf.mxu0
      %692 = vmatprep.mubr.bf16.mxu0 0
      %693 = vmatmul.mubr.bf16.gmra.mxu0 %v590
      %v694 = vpop.f32.mrf.mxu0
      %v695 = vadd.f32 0.0, %v694
      %v696 = vpop.f32.mrf.mxu0
      %v697 = vpop.f32.mrf.mxu0
      %v698 = vadd.f32 0.0, %v697
      %v699 = vpop.f32.mrf.mxu0
      %700 = vmatprep.mubr.bf16.mxu0 0
      %701 = vmatmul.mubr.bf16.gmra.mxu0 %v591
      %v702 = vpop.f32.mrf.mxu0
      %v703 = vadd.f32 0.0, %v702
      %v704 = vpop.f32.mrf.mxu0
      %v705 = vpop.f32.mrf.mxu0
      %v706 = vadd.f32 0.0, %v705
      %v707 = vpop.f32.mrf.mxu0
      %708 = vdwg.mxu0
      %v709 = vpack.c.bf16 %v521, %v518
      %v710 = vpack.c.bf16 %v529, %v526
      %v711 = vpack.c.bf16 %v537, %v534
      %v712 = vpack.c.bf16 %v545, %v542
      %v717 = vunpack.c.l.b16 %v709
      %v718 = vunpack.c.h.b16 %v709
      %v719 = vunpack.c.l.b16 %v710
      %v720 = vunpack.c.h.b16 %v710
      %v721 = vunpack.c.l.b16 %v711
      %v722 = vunpack.c.h.b16 %v711
      %v723 = vunpack.c.l.b16 %v712
      %v724 = vunpack.c.h.b16 %v712
      %v725 = vpack.c.b16 %v717, %v717
      %v726 = vpack.c.b16 %v718, %v718
      %v727 = vpack.c.b16 %v719, %v719
      %v728 = vpack.c.b16 %v720, %v720
      %v729 = vpack.c.b16 %v721, %v721
      %v730 = vpack.c.b16 %v722, %v722
      %v731 = vpack.c.b16 %v723, %v723
      %v732 = vpack.c.b16 %v724, %v724
      %741 = vst [vmem:[%s357] sm:$0xf] %v725
      %742 = vst [vmem:[%s357 + $0x4] sm:$0xf] %v726
      %743 = vst [vmem:[%s357 + $0x8] sm:$0xf] %v727
      %744 = vst [vmem:[%s357 + $0xc] sm:$0xf] %v728
      %745 = vst [vmem:[%s357 + $0x10] sm:$0xf] %v729
      %746 = vst [vmem:[%s357 + $0x14] sm:$0xf] %v730
      %747 = vst [vmem:[%s357 + $0x18] sm:$0xf] %v731
      %748 = vst [vmem:[%s357 + $0x1c] sm:$0xf] %v732
      %v749 = vpack.c.bf16 %v682, %v679
      %v750 = vpack.c.bf16 %v690, %v687
      %v751 = vpack.c.bf16 %v698, %v695
      %v752 = vpack.c.bf16 %v706, %v703
      %v757 = vunpack.c.l.b16 %v749
      %v758 = vunpack.c.h.b16 %v749
      %v759 = vunpack.c.l.b16 %v750
      %v760 = vunpack.c.h.b16 %v750
      %v761 = vunpack.c.l.b16 %v751
      %v762 = vunpack.c.h.b16 %v751
      %v763 = vunpack.c.l.b16 %v752
      %v764 = vunpack.c.h.b16 %v752
      %v765 = vpack.c.b16 %v757, %v757
      %v766 = vpack.c.b16 %v758, %v758
      %v767 = vpack.c.b16 %v759, %v759
      %v768 = vpack.c.b16 %v760, %v760
      %v769 = vpack.c.b16 %v761, %v761
      %v770 = vpack.c.b16 %v762, %v762
      %v771 = vpack.c.b16 %v763, %v763
      %v772 = vpack.c.b16 %v764, %v764
      %781 = vst [vmem:[%s365] sm:$0xf] %v765
      %782 = vst [vmem:[%s365 + $0x4] sm:$0xf] %v766
      %783 = vst [vmem:[%s365 + $0x8] sm:$0xf] %v767
      %784 = vst [vmem:[%s365 + $0xc] sm:$0xf] %v768
      %785 = vst [vmem:[%s365 + $0x10] sm:$0xf] %v769
      %786 = vst [vmem:[%s365 + $0x14] sm:$0xf] %v770
      %787 = vst [vmem:[%s365 + $0x18] sm:$0xf] %v771
      %788 = vst [vmem:[%s365 + $0x1c] sm:$0xf] %v772
      %v789 = vadd.f32 %v518, %v521
      %v790 = vadd.f32 %v789, %v526
      %v791 = vadd.f32 %v790, %v529
      %v792 = vadd.f32 %v791, %v534
      %v793 = vadd.f32 %v792, %v537
      %v794 = vadd.f32 %v793, %v542
      %v795 = vadd.f32 %v794, %v545
      %v796 = vmul.f32 %v518, %v518
      %v797 = vmul.f32 %v521, %v521
      %v798 = vmul.f32 %v526, %v526
      %v799 = vmul.f32 %v529, %v529
      %v800 = vmul.f32 %v534, %v534
      %v801 = vmul.f32 %v537, %v537
      %v802 = vmul.f32 %v542, %v542
      %v803 = vmul.f32 %v545, %v545
      %v804 = vadd.f32 %v796, %v797
      %v805 = vadd.f32 %v804, %v798
      %v806 = vadd.f32 %v805, %v799
      %v807 = vadd.f32 %v806, %v800
      %v808 = vadd.f32 %v807, %v801
      %v809 = vadd.f32 %v808, %v802
      %v810 = vadd.f32 %v809, %v803
      %v811 = vld [vmem:[%s372] sm:$0xff]
      %v812 = vld [vmem:[%s372 + $0x8] sm:$0xff]
      %v813 = vadd.f32 %v811, %v795
      %v814 = vadd.f32 %v812, %v810
      %815 = vst [vmem:[%s372] sm:$0xff] %v813
      %816 = vst [vmem:[%s372 + $0x8] sm:$0xff] %v814
      %v817 = vadd.f32 %v679, %v682
      %v818 = vadd.f32 %v817, %v687
      %v819 = vadd.f32 %v818, %v690
      %v820 = vadd.f32 %v819, %v695
      %v821 = vadd.f32 %v820, %v698
      %v822 = vadd.f32 %v821, %v703
      %v823 = vadd.f32 %v822, %v706
      %v824 = vmul.f32 %v679, %v679
      %v825 = vmul.f32 %v682, %v682
      %v826 = vmul.f32 %v687, %v687
      %v827 = vmul.f32 %v690, %v690
      %v828 = vmul.f32 %v695, %v695
      %v829 = vmul.f32 %v698, %v698
      %v830 = vmul.f32 %v703, %v703
      %v831 = vmul.f32 %v706, %v706
      %v832 = vadd.f32 %v824, %v825
      %v833 = vadd.f32 %v832, %v826
      %v834 = vadd.f32 %v833, %v827
      %v835 = vadd.f32 %v834, %v828
      %v836 = vadd.f32 %v835, %v829
      %v837 = vadd.f32 %v836, %v830
      %v838 = vadd.f32 %v837, %v831
      %v839 = vld [vmem:[%s377] sm:$0xff]
      %v840 = vld [vmem:[%s377 + $0x8] sm:$0xff]
      %v841 = vadd.f32 %v839, %v823
      %v842 = vadd.f32 %v840, %v838
      %843 = vst [vmem:[%s377] sm:$0xff] %v841
      %844 = vst [vmem:[%s377 + $0x8] sm:$0xff] %v842
      %s845 = sadd.s32 %s23, %s24
      %s846 = smul.u32 8, %s845
      %p847 = scmp.lt.s32.totalorder %s846, 15
      %s848 = scalar_select %p847, %s846, 15
      %s849 = smul.addr %s848, 4
      %s850 = scalar_lea.vmem %s4, %s849
      %s851 = sadd.s32 %s23, %s24
      %s852 = smul.u32 8, %s851
      %p853 = scmp.lt.s32.totalorder %s852, 15
      %s854 = scalar_select %p853, %s852, 15
      %s855 = smul.addr %s854, 4
      %s856 = scalar_lea.vmem %s5, %s855
      %p857 = scmp.lt.s32.totalorder %s23, 1
      %s858 = scalar_select %p857, %s23, 1
      %s859 = smul.addr %s858, 2
      %s860 = smul.addr %s859, 8
      %s861 = scalar_lea.vmem %s6, %s860
      %p862 = scmp.lt.s32.totalorder %s23, 1
      %s863 = scalar_select %p862, %s23, 1
      %s864 = smul.addr %s863, 2
      %s865 = smul.addr %s864, 8
      %s866 = scalar_lea.vmem %s7, %s865
      // Predicated region
      $region41: #{resblock_forward.6} parent=35 // pred_check
        %p867 = pneg %p149
      $region42: #{resblock_forward.6} parent=35 // pred_check_branch
        %869 = sbr.rel (%p867) target = $region44
      $region43: #{resblock_forward.6} parent=35 // pred_region
        %s870 = sadd.s32 %s23, %s24
        %s871 = smul.u32 8, %s870
      $region44: #{resblock_forward.6} parent=35 // pred_fallthru
        _
      // Predicated region
      $region45: #{resblock_forward.6} parent=35 // pred_check
        %p872 = pneg %p177
      $region46: #{resblock_forward.6} parent=35 // pred_check_branch
        %874 = sbr.rel (%p872) target = $region48
      $region47: #{resblock_forward.6} parent=35 // pred_region
        %s875 = sadd.s32 %s23, %s24
        %s876 = smul.u32 8, %s875
      $region48: #{resblock_forward.6} parent=35 // pred_fallthru
        _
      // Predicated region
      $region49: #{resblock_forward.6} parent=35 // pred_check
        %p877 = pneg %p203
      $region50: #{resblock_forward.6} parent=35 // pred_check_branch
        %879 = sbr.rel (%p877) target = $region52
      $region51: #{resblock_forward.6} parent=35 // pred_region
        _
      $region52: #{resblock_forward.6} parent=35 // pred_fallthru
        _
      // Predicated region
      $region53: #{resblock_forward.6} parent=35 // pred_check
        %p880 = pneg %p229
      $region54: #{resblock_forward.6} parent=35 // pred_check_branch
        %882 = sbr.rel (%p880) target = $region56
      $region55: #{resblock_forward.6} parent=35 // pred_region
        _
      $region56: #{resblock_forward.6} parent=35 // pred_fallthru
        _
    $region36: #{resblock_forward.6} parent=5 // pred_fallthru
      _
    %p883 = scmp.le.s32.totalorder 2, %s14
    // Predicated region
    $region57: #{resblock_forward.6} parent=5 // pred_check
      %p884 = pneg %p883
    $region58: #{resblock_forward.6} parent=5 // pred_check_branch
      %886 = sbr.rel (%p884) target = $region60
    $region59: #{resblock_forward.6} parent=5 // pred_region
      %s887 = ssub.s32 %s14, 2
      // Predicated region
      $region61: #{resblock_forward.6} parent=59 // pred_check
        %p888 = pneg %p155
      $region62: #{resblock_forward.6} parent=59 // pred_check_branch
        %890 = sbr.rel (%p888) target = $region64
      $region63: #{resblock_forward.6} parent=59 // pred_region
        %s891 = sadd.s32 %s25, %s26
        %s892 = smul.u32 8, %s891
        %p893 = scmp.lt.s32.totalorder %s892, 15
        %s894 = scalar_select %p893, %s892, 15
        %s895 = smul.addr %s894, 4
        %s896 = scalar_lea.vmem %s4, %s895
      $region64: #{resblock_forward.6} parent=59 // pred_fallthru
        _
      // Predicated region
      $region65: #{resblock_forward.6} parent=59 // pred_check
        %p897 = pneg %p183
      $region66: #{resblock_forward.6} parent=59 // pred_check_branch
        %899 = sbr.rel (%p897) target = $region68
      $region67: #{resblock_forward.6} parent=59 // pred_region
        %s900 = sadd.s32 %s25, %s26
        %s901 = smul.u32 8, %s900
        %p902 = scmp.lt.s32.totalorder %s901, 15
        %s903 = scalar_select %p902, %s901, 15
        %s904 = smul.addr %s903, 4
        %s905 = scalar_lea.vmem %s5, %s904
      $region68: #{resblock_forward.6} parent=59 // pred_fallthru
        _
      // Predicated region
      $region69: #{resblock_forward.6} parent=59 // pred_check
        %p906 = pneg %p209
      $region70: #{resblock_forward.6} parent=59 // pred_check_branch
        %908 = sbr.rel (%p906) target = $region72
      $region71: #{resblock_forward.6} parent=59 // pred_region
        %p909 = scmp.lt.s32.totalorder %s25, 1
        %s910 = scalar_select %p909, %s25, 1
        %s911 = smul.addr %s910, 2
        %s912 = smul.addr %s911, 8
        %s913 = scalar_lea.vmem %s6, %s912
      $region72: #{resblock_forward.6} parent=59 // pred_fallthru
        _
      // Predicated region
      $region73: #{resblock_forward.6} parent=59 // pred_check
        %p914 = pneg %p235
      $region74: #{resblock_forward.6} parent=59 // pred_check_branch
        %916 = sbr.rel (%p914) target = $region76
      $region75: #{resblock_forward.6} parent=59 // pred_region
        %p917 = scmp.lt.s32.totalorder %s25, 1
        %s918 = scalar_select %p917, %s25, 1
        %s919 = smul.addr %s918, 2
        %s920 = smul.addr %s919, 8
        %s921 = scalar_lea.vmem %s7, %s920
      $region76: #{resblock_forward.6} parent=59 // pred_fallthru
        _
    $region60: #{resblock_forward.6} parent=5 // pred_fallthru
      _
  $region6: #{resblock_forward.6} parent=0 // loop_footer
    %s18 = sadd.s32 1, %s14
  $region7: #{resblock_forward.6} parent=0 // loop_footer_branch
    %13 = sbr.rel target = $region3
  $region8: #{resblock_forward.6} parent=0 // loop_exit
    _

// kernel: resblock_forward.4
$region0: #{resblock_forward.4}
  #allocation0 [shape = 'u32[]', space=smem, size = 0x4, offset = 0x4, fixed_abs, tag = 'smem constant byte address 0x4 - core index']
  #allocation1 [shape = 'u32[144,128]{1,0:T(1,128)}', space=vmem, size = 0x12000, scoped, tag = 'internal scratch']
  %s0 = inlined_call_operand.vmem [shape: bf16[128,128], index: 0, kind: input, shape index: {}]
  %s1 = inlined_call_operand.vmem [shape: bf16[128,128], index: 1, kind: input, shape index: {}]
  %s2 = inlined_call_operand.vmem [shape: bf16[128,128], index: 2, kind: output, shape index: {0}]
  %s3 = inlined_call_operand.vmem [shape: f32[2,16,128], index: 3, kind: output, shape index: {1}]
  %4 = xla_tuple %s2, %s3
  %s5 = sld [smem:[#allocation0]]
  $region53: #{resblock_forward.4} parent=0
    _
  %s7 = ssub.s32 1, %s5
  %s8 = scalar_select 0, %s7, %s5
  loop: start=0, step=1, limit=4
  $region2: #{resblock_forward.4} parent=0 // loop_pre_header
    _
  $region3: #{resblock_forward.4} parent=0 // loop_header
    %s10 = sphi 0, %s14
    %p11 = scmp.ge.s32.totalorder %s10, 4
    %s17 = sphi 0, %s29
    %s18 = sphi 0, %s25
    %s19 = sphi 0, %s17
    %s20 = sphi 0, %s18
    %s21 = sphi 0, %s19
    %s22 = sphi 0, %s20
    %s34 = sphi 0, %s36
    %s37 = sphi 0, %s34
    %s38 = sphi 0, %s37
    %s54 = sphi 0, %s38
    %s58 = sphi 0, %s58
    %s60 = sphi 0, %s58
    %s61 = sphi 0, %s60
    %s75 = sphi 0, %s61
    %s83 = sphi 0, %s85
    %s86 = sphi 0, %s83
    %s87 = sphi 0, %s86
    %s103 = sphi 0, %s87
    %s109 = sphi 0, %s111
    %s112 = sphi 0, %s109
    %s113 = sphi 0, %s112
    %s129 = sphi 0, %s113
  $region4: #{resblock_forward.4} parent=0 // loop_header_branch
    %13 = sbr.rel (%p11) target = $region8
  $region5: #{resblock_forward.4} parent=0 // loop_body
    %s15 = ssub.s32 %s10, 1
    %s16 = ssub.s32 %s10, 2
    %s23 = sadd.s32 1, %s18
    %p24 = scmp.ge.s32.totalorder %s23, 1
    %s25 = scalar_select %p24, 0, %s23
    %s26 = sadd.s32 1, %s17
    %s27 = scalar_select %p24, %s26, %s17
    %p28 = scmp.ge.s32.totalorder %s27, 2
    %s29 = scalar_select %p28, 0, %s27
    %s30 = sadd.s32 %s17, %s18
    %s31 = sadd.s32 %s29, %s25
    %s32 = ssub.s32 %s30, %s31
    %p33 = scmp.eq.s32.totalorder %s32, 0
    %s35 = sadd.s32 %s34, 1
    %s36 = scalar_select %p33, %s34, %s35
    %p39 = pneg %p33
    %p40 = scmp.eq.s32.totalorder %s10, 1
    %p41 = por %p39, %p40
    %p42 = scmp.ne.s32.totalorder %s34, %s37
    %p43 = scmp.eq.s32.totalorder %s10, 0
    %p44 = por %p42, %p43
    %p45 = scmp.ne.s32.totalorder %s34, %s37
    %p46 = scmp.eq.s32.totalorder %s15, 1
    %p47 = por %p45, %p46
    %p48 = scmp.ne.s32.totalorder %s37, %s38
    %p49 = scmp.eq.s32.totalorder %s15, 0
    %p50 = por %p48, %p49
    %p51 = scmp.ne.s32.totalorder %s37, %s38
    %p52 = scmp.eq.s32.totalorder %s16, 1
    %p53 = por %p51, %p52
    %p55 = scmp.ne.s32.totalorder %s38, %s54
    %p56 = scmp.eq.s32.totalorder %s16, 0
    %p57 = por %p55, %p56
    %s59 = sadd.s32 %s58, 1
    %p62 = scmp.eq.s32.totalorder %s10, 1
    %p63 = scmp.ne.s32.totalorder %s58, %s60
    %p64 = scmp.eq.s32.totalorder %s10, 0
    %p65 = por %p63, %p64
    %p66 = scmp.ne.s32.totalorder %s58, %s60
    %p67 = scmp.eq.s32.totalorder %s15, 1
    %p68 = por %p66, %p67
    %p69 = scmp.ne.s32.totalorder %s60, %s61
    %p70 = scmp.eq.s32.totalorder %s15, 0
    %p71 = por %p69, %p70
    %p72 = scmp.ne.s32.totalorder %s60, %s61
    %p73 = scmp.eq.s32.totalorder %s16, 1
    %p74 = por %p72, %p73
    %p76 = scmp.ne.s32.totalorder %s61, %s75
    %p77 = scmp.eq.s32.totalorder %s16, 0
    %p78 = por %p76, %p77
    %s79 = sadd.s32 %s17, %s18
    %s80 = sadd.s32 %s29, %s25
    %s81 = ssub.s32 %s79, %s80
    %p82 = scmp.eq.s32.totalorder %s81, 0
    %s84 = sadd.s32 %s83, 1
    %s85 = scalar_select %p82, %s83, %s84
    %p88 = pneg %p82
    %p89 = scmp.eq.s32.totalorder %s10, 1
    %p90 = por %p88, %p89
    %p91 = scmp.ne.s32.totalorder %s83, %s86
    %p92 = scmp.eq.s32.totalorder %s10, 0
    %p93 = por %p91, %p92
    %p94 = scmp.ne.s32.totalorder %s83, %s86
    %p95 = scmp.eq.s32.totalorder %s15, 1
    %p96 = por %p94, %p95
    %p97 = scmp.ne.s32.totalorder %s86, %s87
    %p98 = scmp.eq.s32.totalorder %s15, 0
    %p99 = por %p97, %p98
    %p100 = scmp.ne.s32.totalorder %s86, %s87
    %p101 = scmp.eq.s32.totalorder %s16, 1
    %p102 = por %p100, %p101
    %p104 = scmp.ne.s32.totalorder %s87, %s103
    %p105 = scmp.eq.s32.totalorder %s16, 0
    %p106 = por %p104, %p105
    %s107 = ssub.s32 %s17, %s29
    %p108 = scmp.eq.s32.totalorder %s107, 0
    %s110 = sadd.s32 %s109, 1
    %s111 = scalar_select %p108, %s109, %s110
    %p114 = pneg %p108
    %p115 = scmp.eq.s32.totalorder %s10, 1
    %p116 = por %p114, %p115
    %p117 = scmp.ne.s32.totalorder %s109, %s112
    %p118 = scmp.eq.s32.totalorder %s10, 0
    %p119 = por %p117, %p118
    %p120 = scmp.ne.s32.totalorder %s109, %s112
    %p121 = scmp.eq.s32.totalorder %s15, 1
    %p122 = por %p120, %p121
    %p123 = scmp.ne.s32.totalorder %s112, %s113
    %p124 = scmp.eq.s32.totalorder %s15, 0
    %p125 = por %p123, %p124
    %p126 = scmp.ne.s32.totalorder %s112, %s113
    %p127 = scmp.eq.s32.totalorder %s16, 1
    %p128 = por %p126, %p127
    %p130 = scmp.ne.s32.totalorder %s113, %s129
    %p131 = scmp.eq.s32.totalorder %s16, 0
    %p132 = por %p130, %p131
    %p133 = scmp.le.s32.totalorder 1, %s10
    %p134 = scmp.lt.s32.totalorder %s10, 3
    %p135 = pnand %p133, %p134
    %p136 = pneg %p135
    // Predicated region
    $region9: #{resblock_forward.4} parent=5 // pred_check
      _
    $region10: #{resblock_forward.4} parent=5 // pred_check_branch
      %138 = sbr.rel (%p135) target = $region12
    $region11: #{resblock_forward.4} parent=5 // pred_region
      %s139 = ssub.s32 %s10, 1
      // Predicated region
      $region13: #{resblock_forward.4} parent=11 // pred_check
        %p140 = pneg %p71
      $region14: #{resblock_forward.4} parent=11 // pred_check_branch
        %142 = sbr.rel (%p140) target = $region16
      $region15: #{resblock_forward.4} parent=11 // pred_region
        _
      $region16: #{resblock_forward.4} parent=11 // pred_fallthru
        _
    $region12: #{resblock_forward.4} parent=5 // pred_fallthru
      _
    %p143 = scmp.lt.s32.totalorder %s10, 2
    // Predicated region
    $region17: #{resblock_forward.4} parent=5 // pred_check
      %p144 = pneg %p143
    $region18: #{resblock_forward.4} parent=5 // pred_check_branch
      %146 = sbr.rel (%p144) target = $region20
    $region19: #{resblock_forward.4} parent=5 // pred_region
      // Predicated region
      $region21: #{resblock_forward.4} parent=19 // pred_check
        %p147 = pneg %p44
      $region22: #{resblock_forward.4} parent=19 // pred_check_branch
        %149 = sbr.rel (%p147) target = $region24
      $region23: #{resblock_forward.4} parent=19 // pred_region
        %s150 = sadd.s32 %s17, %s18
        %s151 = smul.u32 8, %s150
        %p152 = scmp.lt.s32.totalorder %s151, 15
        %s153 = scalar_select %p152, %s151, 15
        %s154 = smul.addr %s153, 4
        %s155 = scalar_lea.vmem %s0, %s154
        %s156 = sadd.s32 %s17, %s18
        %s157 = smul.u32 8, %s156
      $region24: #{resblock_forward.4} parent=19 // pred_fallthru
        _
    $region20: #{resblock_forward.4} parent=5 // pred_fallthru
      _
    %p158 = scmp.le.s32.totalorder 1, %s10
    %p159 = scmp.lt.s32.totalorder %s10, 3
    %p160 = pnand %p158, %p159
    %p161 = pneg %p160
    // Predicated region
    $region25: #{resblock_forward.4} parent=5 // pred_check
      _
    $region26: #{resblock_forward.4} parent=5 // pred_check_branch
      %163 = sbr.rel (%p160) target = $region28
    $region27: #{resblock_forward.4} parent=5 // pred_region
      %s164 = ssub.s32 %s10, 1
      %s165 = sadd.s32 %s19, %s20
      %s166 = smul.u32 8, %s165
      %p167 = scmp.lt.s32.totalorder %s166, 15
      %s168 = scalar_select %p167, %s166, 15
      %s169 = smul.addr %s168, 4
      %s170 = scalar_lea.vmem %s0, %s169
      %p171 = pneg %p50
      %p172 = pneg %p47
      %p173 = pneg %p71
      %p174 = pneg %p68
      %p175 = pneg %p99
      %p176 = pneg %p96
      %s177 = sadd.s32 %s19, %s20
      %s178 = smul.u32 8, %s177
      %p179 = scmp.lt.s32.totalorder %s178, 15
      %s180 = scalar_select %p179, %s178, 15
      %s181 = smul.addr %s180, 4
      %s182 = scalar_lea.vmem %s2, %s181
      %p183 = pneg %p125
      %p184 = pneg %p122
      %p185 = scmp.lt.s32.totalorder %s19, 1
      %s186 = scalar_select %p185, %s19, 1
      %s187 = smul.addr %s186, 2
      %s188 = smul.addr %s187, 8
      %s189 = scalar_lea.vmem %s3, %s188
      %s190 = sadd.s32 %s19, %s20
      %s191 = smul.u32 8, %s190
      %p192 = scmp.lt.s32.totalorder %s191, 15
      %s193 = scalar_select %p192, %s191, 15
      %s194 = smul.addr %s193, 4
      %s195 = scalar_lea.vmem %s0, %s194
      %s196 = sadd.s32 %s19, %s20
      %s197 = smul.u32 8, %s196
      %s198 = sadd.s32 %s19, %s20
      %s199 = smul.u32 8, %s198
      %p200 = scmp.lt.s32.totalorder %s199, 15
      %s201 = scalar_select %p200, %s199, 15
      %s202 = smul.addr %s201, 4
      %s203 = scalar_lea.vmem %s2, %s202
      %s204 = sadd.s32 %s19, %s20
      %s205 = smul.u32 8, %s204
      %p206 = scmp.lt.s32.totalorder %s19, 1
      %s207 = scalar_select %p206, %s19, 1
      %s208 = smul.addr %s207, 2
      %s209 = smul.addr %s208, 8
      %s210 = scalar_lea.vmem %s3, %s209
      %p212 = scmp.eq.s32.totalorder %s20, 0
      // Predicated region
      $region29: #{resblock_forward.4} parent=27 // pred_check
        %p213 = pneg %p212
      $region30: #{resblock_forward.4} parent=27 // pred_check_branch
        %215 = sbr.rel (%p213) target = $region32
      $region31: #{resblock_forward.4} parent=27 // pred_region
        %216 = vst [vmem:[%s210] sm:$0xff] 0.0
        %217 = vst [vmem:[%s210 + $0x8] sm:$0xff] 0.0
      $region32: #{resblock_forward.4} parent=27 // pred_fallthru
        _
      %v218 = vld [vmem:[%s195] sm:$0xf]
      %v219 = vld [vmem:[%s195 + $0x4] sm:$0xf]
      %v220 = vld [vmem:[%s195 + $0x8] sm:$0xf]
      %v221 = vld [vmem:[%s195 + $0xc] sm:$0xf]
      %v222 = vld [vmem:[%s195 + $0x10] sm:$0xf]
      %v223 = vld [vmem:[%s195 + $0x14] sm:$0xf]
      %v224 = vld [vmem:[%s195 + $0x18] sm:$0xf]
      %v225 = vld [vmem:[%s195 + $0x1c] sm:$0xf]
      %v226 = vld [vmem:[%s1] sm:$0xf]
      %v227 = vld [vmem:[%s1 + $0x4] sm:$0xf]
      %v228 = vld [vmem:[%s1 + $0x8] sm:$0xf]
      %v229 = vld [vmem:[%s1 + $0xc] sm:$0xf]
      %v230 = vld [vmem:[%s1 + $0x10] sm:$0xf]
      %v231 = vld [vmem:[%s1 + $0x14] sm:$0xf]
      %v232 = vld [vmem:[%s1 + $0x18] sm:$0xf]
      %v233 = vld [vmem:[%s1 + $0x1c] sm:$0xf]
      %v234 = vld [vmem:[%s1 + $0x20] sm:$0xf]
      %v235 = vld [vmem:[%s1 + $0x24] sm:$0xf]
      %v236 = vld [vmem:[%s1 + $0x28] sm:$0xf]
      %v237 = vld [vmem:[%s1 + $0x2c] sm:$0xf]
      %v238 = vld [vmem:[%s1 + $0x30] sm:$0xf]
      %v239 = vld [vmem:[%s1 + $0x34] sm:$0xf]
      %v240 = vld [vmem:[%s1 + $0x38] sm:$0xf]
      %v241 = vld [vmem:[%s1 + $0x3c] sm:$0xf]
      %v250 = vunpack.c.l.b16 %v218
      %v251 = vunpack.c.l.b16 %v219
      %v252 = vunpack.c.l.b16 %v220
      %v253 = vunpack.c.l.b16 %v221
      %v254 = vunpack.c.l.b16 %v222
      %v255 = vunpack.c.l.b16 %v223
      %v256 = vunpack.c.l.b16 %v224
      %v257 = vunpack.c.l.b16 %v225
      %v258 = vpack.c.b16 %v251, %v250
      %v259 = vpack.c.b16 %v253, %v252
      %v260 = vpack.c.b16 %v255, %v254
      %v261 = vpack.c.b16 %v257, %v256
      %v282 = vunpack.c.l.b16 %v226
      %v283 = vunpack.c.l.b16 %v227
      %v284 = vunpack.c.l.b16 %v228
      %v285 = vunpack.c.l.b16 %v229
      %v286 = vunpack.c.l.b16 %v230
      %v287 = vunpack.c.l.b16 %v231
      %v288 = vunpack.c.l.b16 %v232
      %v289 = vunpack.c.l.b16 %v233
      %v290 = vunpack.c.l.b16 %v234
      %v291 = vunpack.c.l.b16 %v235
      %v292 = vunpack.c.l.b16 %v236
      %v293 = vunpack.c.l.b16 %v237
      %v294 = vunpack.c.l.b16 %v238
      %v295 = vunpack.c.l.b16 %v239
      %v296 = vunpack.c.l.b16 %v240
      %v297 = vunpack.c.l.b16 %v241
      %v298 = vpack.c.b16 %v283, %v282
      %v299 = vpack.c.b16 %v285, %v284
      %v300 = vpack.c.b16 %v287, %v286
      %v301 = vpack.c.b16 %v289, %v288
      %v302 = vpack.c.b16 %v291, %v290
      %v303 = vpack.c.b16 %v293, %v292
      %v304 = vpack.c.b16 %v295, %v294
      %v305 = vpack.c.b16 %v297, %v296
      %314 = vmatprep.subr.bf16.mxu0 0
      %315 = vmatpush1.bf16.msra.mxu0 %v305
      %316 = vmatprep.subr.bf16.mxu0 0
      %317 = vmatpush1.bf16.msra.mxu0 %v304
      %318 = vmatprep.subr.bf16.mxu0 0
      %319 = vmatpush1.bf16.msra.mxu0 %v303
      %320 = vmatprep.subr.bf16.mxu0 0
      %321 = vmatpush1.bf16.msra.mxu0 %v302
      %322 = vmatprep.subr.bf16.mxu0 0
      %323 = vmatpush1.bf16.msra.mxu0 %v301
      %324 = vmatprep.subr.bf16.mxu0 0
      %325 = vmatpush1.bf16.msra.mxu0 %v300
      %326 = vmatprep.subr.bf16.mxu0 0
      %327 = vmatpush1.bf16.msra.mxu0 %v299
      %328 = vmatprep.subr.bf16.mxu0 0
      %329 = vmatpush1.bf16.msra.mxu0 %v298
      %330 = vmatprep.subr.bf16.mxu0 0
      %331 = vmatpush2.bf16.msra.mxu0 0
      %332 = vmatprep.subr.bf16.mxu0 0
      %333 = vmatpush2.bf16.msra.mxu0 0
      %334 = vmatprep.subr.bf16.mxu0 0
      %335 = vmatpush2.bf16.msra.mxu0 0
      %336 = vmatprep.subr.bf16.mxu0 0
      %337 = vmatpush2.bf16.msra.mxu0 0
      %338 = vmatprep.subr.bf16.mxu0 0
      %339 = vmatpush2.bf16.msra.mxu0 0
      %340 = vmatprep.subr.bf16.mxu0 0
      %341 = vmatpush2.bf16.msra.mxu0 0
      %342 = vmatprep.subr.bf16.mxu0 0
      %343 = vmatpush2.bf16.msra.mxu0 0
      %344 = vmatprep.subr.bf16.mxu0 0
      %345 = vmatpush2.bf16.msra.mxu0 0
      %346 = vmatprep.mubr.bf16.mxu0 0
      %347 = vmatmul.mubr.bf16.gmra.mxu0 %v258
      %v348 = vpop.f32.mrf.mxu0
      %v349 = vadd.f32 0.0, %v348
      %v350 = vpop.f32.mrf.mxu0
      %v351 = vpop.f32.mrf.mxu0
      %v352 = vadd.f32 0.0, %v351
      %v353 = vpop.f32.mrf.mxu0
      %354 = vmatprep.mubr.bf16.mxu0 0
      %355 = vmatmul.mubr.bf16.gmra.mxu0 %v259
      %v356 = vpop.f32.mrf.mxu0
      %v357 = vadd.f32 0.0, %v356
      %v358 = vpop.f32.mrf.mxu0
      %v359 = vpop.f32.mrf.mxu0
      %v360 = vadd.f32 0.0, %v359
      %v361 = vpop.f32.mrf.mxu0
      %362 = vmatprep.mubr.bf16.mxu0 0
      %363 = vmatmul.mubr.bf16.gmra.mxu0 %v260
      %v364 = vpop.f32.mrf.mxu0
      %v365 = vadd.f32 0.0, %v364
      %v366 = vpop.f32.mrf.mxu0
      %v367 = vpop.f32.mrf.mxu0
      %v368 = vadd.f32 0.0, %v367
      %v369 = vpop.f32.mrf.mxu0
      %370 = vmatprep.mubr.bf16.mxu0 0
      %371 = vmatmul.mubr.bf16.gmra.mxu0 %v261
      %v372 = vpop.f32.mrf.mxu0
      %v373 = vadd.f32 0.0, %v372
      %v374 = vpop.f32.mrf.mxu0
      %v375 = vpop.f32.mrf.mxu0
      %v376 = vadd.f32 0.0, %v375
      %v377 = vpop.f32.mrf.mxu0
      %378 = vdwg.mxu0
      %v379 = vpack.c.bf16 %v352, %v349
      %v380 = vpack.c.bf16 %v360, %v357
      %v381 = vpack.c.bf16 %v368, %v365
      %v382 = vpack.c.bf16 %v376, %v373
      %v387 = vunpack.c.l.b16 %v379
      %v388 = vunpack.c.h.b16 %v379
      %v389 = vunpack.c.l.b16 %v380
      %v390 = vunpack.c.h.b16 %v380
      %v391 = vunpack.c.l.b16 %v381
      %v392 = vunpack.c.h.b16 %v381
      %v393 = vunpack.c.l.b16 %v382
      %v394 = vunpack.c.h.b16 %v382
      %v395 = vpack.c.b16 %v387, %v387
      %v396 = vpack.c.b16 %v388, %v388
      %v397 = vpack.c.b16 %v389, %v389
      %v398 = vpack.c.b16 %v390, %v390
      %v399 = vpack.c.b16 %v391, %v391
      %v400 = vpack.c.b16 %v392, %v392
      %v401 = vpack.c.b16 %v393, %v393
      %v402 = vpack.c.b16 %v394, %v394
      %411 = vst [vmem:[%s203] sm:$0xf] %v395
      %412 = vst [vmem:[%s203 + $0x4] sm:$0xf] %v396
      %413 = vst [vmem:[%s203 + $0x8] sm:$0xf] %v397
      %414 = vst [vmem:[%s203 + $0xc] sm:$0xf] %v398
      %415 = vst [vmem:[%s203 + $0x10] sm:$0xf] %v399
      %416 = vst [vmem:[%s203 + $0x14] sm:$0xf] %v400
      %417 = vst [vmem:[%s203 + $0x18] sm:$0xf] %v401
      %418 = vst [vmem:[%s203 + $0x1c] sm:$0xf] %v402
      %v419 = vadd.f32 %v349, %v352
      %v420 = vadd.f32 %v419, %v357
      %v421 = vadd.f32 %v420, %v360
      %v422 = vadd.f32 %v421, %v365
      %v423 = vadd.f32 %v422, %v368
      %v424 = vadd.f32 %v423, %v373
      %v425 = vadd.f32 %v424, %v376
      %v426 = vmul.f32 %v349, %v349
      %v427 = vmul.f32 %v352, %v352
      %v428 = vmul.f32 %v357, %v357
      %v429 = vmul.f32 %v360, %v360
      %v430 = vmul.f32 %v365, %v365
      %v431 = vmul.f32 %v368, %v368
      %v432 = vmul.f32 %v373, %v373
      %v433 = vmul.f32 %v376, %v376
      %v434 = vadd.f32 %v426, %v427
      %v435 = vadd.f32 %v434, %v428
      %v436 = vadd.f32 %v435, %v429
      %v437 = vadd.f32 %v436, %v430
      %v438 = vadd.f32 %v437, %v431
      %v439 = vadd.f32 %v438, %v432
      %v440 = vadd.f32 %v439, %v433
      %v441 = vld [vmem:[%s210] sm:$0xff]
      %v442 = vld [vmem:[%s210 + $0x8] sm:$0xff]
      %v443 = vadd.f32 %v441, %v425
      %v444 = vadd.f32 %v442, %v440
      %445 = vst [vmem:[%s210] sm:$0xff] %v443
      %446 = vst [vmem:[%s210 + $0x8] sm:$0xff] %v444
      %s447 = sadd.s32 %s19, %s20
      %s448 = smul.u32 8, %s447
      %p449 = scmp.lt.s32.totalorder %s448, 15
      %s450 = scalar_select %p449, %s448, 15
      %s451 = smul.addr %s450, 4
      %s452 = scalar_lea.vmem %s2, %s451
      %p453 = scmp.lt.s32.totalorder %s19, 1
      %s454 = scalar_select %p453, %s19, 1
      %s455 = smul.addr %s454, 2
      %s456 = smul.addr %s455, 8
      %s457 = scalar_lea.vmem %s3, %s456
      // Predicated region
      $region33: #{resblock_forward.4} parent=27 // pred_check
        %p458 = pneg %p96
      $region34: #{resblock_forward.4} parent=27 // pred_check_branch
        %460 = sbr.rel (%p458) target = $region36
      $region35: #{resblock_forward.4} parent=27 // pred_region
        %s461 = sadd.s32 %s19, %s20
        %s462 = smul.u32 8, %s461
      $region36: #{resblock_forward.4} parent=27 // pred_fallthru
        _
      // Predicated region
      $region37: #{resblock_forward.4} parent=27 // pred_check
        %p463 = pneg %p122
      $region38: #{resblock_forward.4} parent=27 // pred_check_branch
        %465 = sbr.rel (%p463) target = $region40
      $region39: #{resblock_forward.4} parent=27 // pred_region
        _
      $region40: #{resblock_forward.4} parent=27 // pred_fallthru
        _
    $region28: #{resblock_forward.4} parent=5 // pred_fallthru
      _
    %p466 = scmp.le.s32.totalorder 2, %s10
    // Predicated region
    $region41: #{resblock_forward.4} parent=5 // pred_check
      %p467 = pneg %p466
    $region42: #{resblock_forward.4} parent=5 // pred_check_branch
      %469 = sbr.rel (%p467) target = $region44
    $region43: #{resblock_forward.4} parent=5 // pred_region
      %s470 = ssub.s32 %s10, 2
      // Predicated region
      $region45: #{resblock_forward.4} parent=43 // pred_check
        %p471 = pneg %p102
      $region46: #{resblock_forward.4} parent=43 // pred_check_branch
        %473 = sbr.rel (%p471) target = $region48
      $region47: #{resblock_forward.4} parent=43 // pred_region
        %s474 = sadd.s32 %s21, %s22
        %s475 = smul.u32 8, %s474
        %p476 = scmp.lt.s32.totalorder %s475, 15
        %s477 = scalar_select %p476, %s475, 15
        %s478 = smul.addr %s477, 4
        %s479 = scalar_lea.vmem %s2, %s478
      $region48: #{resblock_forward.4} parent=43 // pred_fallthru
        _
      // Predicated region
      $region49: #{resblock_forward.4} parent=43 // pred_check
        %p480 = pneg %p128
      $region50: #{resblock_forward.4} parent=43 // pred_check_branch
        %482 = sbr.rel (%p480) target = $region52
      $region51: #{resblock_forward.4} parent=43 // pred_region
        %p483 = scmp.lt.s32.totalorder %s21, 1
        %s484 = scalar_select %p483, %s21, 1
        %s485 = smul.addr %s484, 2
        %s486 = smul.addr %s485, 8
        %s487 = scalar_lea.vmem %s3, %s486
      $region52: #{resblock_forward.4} parent=43 // pred_fallthru
        _
    $region44: #{resblock_forward.4} parent=5 // pred_fallthru
      _
  $region6: #{resblock_forward.4} parent=0 // loop_footer
    %s14 = sadd.s32 1, %s10
  $region7: #{resblock_forward.4} parent=0 // loop_footer_branch
    %9 = sbr.rel target = $region3
  $region8: #{resblock_forward.4} parent=0 // loop_exit
    _

// kernel: resblock_forward.5
$region0: #{resblock_forward.5}
  #allocation0 [shape = 'u32[]', space=smem, size = 0x4, offset = 0x4, fixed_abs, tag = 'smem constant byte address 0x4 - core index']
  #allocation1 [shape = 'u32[144,128]{1,0:T(1,128)}', space=vmem, size = 0x12000, scoped, tag = 'internal scratch']
  %s0 = inlined_call_operand.vmem [shape: bf16[128,128], index: 0, kind: input, shape index: {}]
  %s1 = inlined_call_operand.vmem [shape: f32[1,128], index: 1, kind: input, shape index: {}]
  %s2 = inlined_call_operand.vmem [shape: f32[1,128], index: 2, kind: input, shape index: {}]
  %s3 = inlined_call_operand.vmem [shape: bf16[128,128], index: 3, kind: output, shape index: {}]
  %s4 = sld [smem:[#allocation0]]
  $region22: #{resblock_forward.5} parent=0
    _
  %s6 = ssub.s32 1, %s4
  %s7 = scalar_select 0, %s6, %s4
  // Predicated region
  $region2: #{resblock_forward.5} parent=0 // pred_check
    _
  $region3: #{resblock_forward.5} parent=0 // pred_check_branch
    %9 = sbr.rel (0) target = $region5
  $region4: #{resblock_forward.5} parent=0 // pred_region
    _
  $region5: #{resblock_forward.5} parent=0 // pred_fallthru
    _
  // Predicated region
  $region6: #{resblock_forward.5} parent=0 // pred_check
    _
  $region7: #{resblock_forward.5} parent=0 // pred_check_branch
    %11 = sbr.rel (0) target = $region9
  $region8: #{resblock_forward.5} parent=0 // pred_region
    _
  $region9: #{resblock_forward.5} parent=0 // pred_fallthru
    _
  // Predicated region
  $region10: #{resblock_forward.5} parent=0 // pred_check
    _
  $region11: #{resblock_forward.5} parent=0 // pred_check_branch
    %13 = sbr.rel (0) target = $region13
  $region12: #{resblock_forward.5} parent=0 // pred_region
    _
  $region13: #{resblock_forward.5} parent=0 // pred_fallthru
    _
  %v14 = vld [vmem:[%s0] sm:$0xf]
  %v15 = vld [vmem:[%s0 + $0x4] sm:$0xf]
  %v16 = vld [vmem:[%s0 + $0x8] sm:$0xf]
  %v17 = vld [vmem:[%s0 + $0xc] sm:$0xf]
  %v18 = vld [vmem:[%s0 + $0x10] sm:$0xf]
  %v19 = vld [vmem:[%s0 + $0x14] sm:$0xf]
  %v20 = vld [vmem:[%s0 + $0x18] sm:$0xf]
  %v21 = vld [vmem:[%s0 + $0x1c] sm:$0xf]
  %v22 = vld [vmem:[%s0 + $0x20] sm:$0xf]
  %v23 = vld [vmem:[%s0 + $0x24] sm:$0xf]
  %v24 = vld [vmem:[%s0 + $0x28] sm:$0xf]
  %v25 = vld [vmem:[%s0 + $0x2c] sm:$0xf]
  %v26 = vld [vmem:[%s0 + $0x30] sm:$0xf]
  %v27 = vld [vmem:[%s0 + $0x34] sm:$0xf]
  %v28 = vld [vmem:[%s0 + $0x38] sm:$0xf]
  %v29 = vld [vmem:[%s0 + $0x3c] sm:$0xf]
  %v30 = vunpack.c.l.bf16 %v14
  %v31 = vunpack.c.l.bf16 %v15
  %v32 = vunpack.c.l.bf16 %v16
  %v33 = vunpack.c.l.bf16 %v17
  %v34 = vunpack.c.l.bf16 %v18
  %v35 = vunpack.c.l.bf16 %v19
  %v36 = vunpack.c.l.bf16 %v20
  %v37 = vunpack.c.l.bf16 %v21
  %v38 = vunpack.c.l.bf16 %v22
  %v39 = vunpack.c.l.bf16 %v23
  %v40 = vunpack.c.l.bf16 %v24
  %v41 = vunpack.c.l.bf16 %v25
  %v42 = vunpack.c.l.bf16 %v26
  %v43 = vunpack.c.l.bf16 %v27
  %v44 = vunpack.c.l.bf16 %v28
  %v45 = vunpack.c.l.bf16 %v29
  %v46 = vld [vmem:[%s1] sm:$0x1]
  %v48 = vlaneseq
  %v49 = vshrl.u32 %v48, 7
  %v50 = vsub.s32 0, %v49
  %v51 = vrot.slane %v46, %v50
  %v53 = vmul.f32 %v30, %v51
  %v54 = vmul.f32 %v31, %v51
  %v55 = vmul.f32 %v32, %v51
  %v56 = vmul.f32 %v33, %v51
  %v57 = vmul.f32 %v34, %v51
  %v58 = vmul.f32 %v35, %v51
  %v59 = vmul.f32 %v36, %v51
  %v60 = vmul.f32 %v37, %v51
  %v61 = vmul.f32 %v38, %v51
  %v62 = vmul.f32 %v39, %v51
  %v63 = vmul.f32 %v40, %v51
  %v64 = vmul.f32 %v41, %v51
  %v65 = vmul.f32 %v42, %v51
  %v66 = vmul.f32 %v43, %v51
  %v67 = vmul.f32 %v44, %v51
  %v68 = vmul.f32 %v45, %v51
  %v69 = vld [vmem:[%s2] sm:$0x1]
  %v71 = vlaneseq
  %v72 = vshrl.u32 %v71, 7
  %v73 = vsub.s32 0, %v72
  %v74 = vrot.slane %v69, %v73
  %v76 = vadd.f32 %v53, %v74
  %v77 = vadd.f32 %v54, %v74
  %v78 = vadd.f32 %v55, %v74
  %v79 = vadd.f32 %v56, %v74
  %v80 = vadd.f32 %v57, %v74
  %v81 = vadd.f32 %v58, %v74
  %v82 = vadd.f32 %v59, %v74
  %v83 = vadd.f32 %v60, %v74
  %v84 = vadd.f32 %v61, %v74
  %v85 = vadd.f32 %v62, %v74
  %v86 = vadd.f32 %v63, %v74
  %v87 = vadd.f32 %v64, %v74
  %v88 = vadd.f32 %v65, %v74
  %v89 = vadd.f32 %v66, %v74
  %v90 = vadd.f32 %v67, %v74
  %v91 = vadd.f32 %v68, %v74
  %v92 = vmax.f32 %v76, 0.0
  %v93 = vmax.f32 %v77, 0.0
  %v94 = vmax.f32 %v78, 0.0
  %v95 = vmax.f32 %v79, 0.0
  %v96 = vmax.f32 %v80, 0.0
  %v97 = vmax.f32 %v81, 0.0
  %v98 = vmax.f32 %v82, 0.0
  %v99 = vmax.f32 %v83, 0.0
  %v100 = vmax.f32 %v84, 0.0
  %v101 = vmax.f32 %v85, 0.0
  %v102 = vmax.f32 %v86, 0.0
  %v103 = vmax.f32 %v87, 0.0
  %v104 = vmax.f32 %v88, 0.0
  %v105 = vmax.f32 %v89, 0.0
  %v106 = vmax.f32 %v90, 0.0
  %v107 = vmax.f32 %v91, 0.0
  %v108 = vpack.c.bf16 %v93, %v92
  %v109 = vpack.c.bf16 %v95, %v94
  %v110 = vpack.c.bf16 %v97, %v96
  %v111 = vpack.c.bf16 %v99, %v98
  %v112 = vpack.c.bf16 %v101, %v100
  %v113 = vpack.c.bf16 %v103, %v102
  %v114 = vpack.c.bf16 %v105, %v104
  %v115 = vpack.c.bf16 %v107, %v106
  %v124 = vunpack.c.l.b16 %v108
  %v125 = vunpack.c.h.b16 %v108
  %v126 = vunpack.c.l.b16 %v109
  %v127 = vunpack.c.h.b16 %v109
  %v128 = vunpack.c.l.b16 %v110
  %v129 = vunpack.c.h.b16 %v110
  %v130 = vunpack.c.l.b16 %v111
  %v131 = vunpack.c.h.b16 %v111
  %v132 = vunpack.c.l.b16 %v112
  %v133 = vunpack.c.h.b16 %v112
  %v134 = vunpack.c.l.b16 %v113
  %v135 = vunpack.c.h.b16 %v113
  %v136 = vunpack.c.l.b16 %v114
  %v137 = vunpack.c.h.b16 %v114
  %v138 = vunpack.c.l.b16 %v115
  %v139 = vunpack.c.h.b16 %v115
  %v140 = vpack.c.b16 %v124, %v124
  %v141 = vpack.c.b16 %v125, %v125
  %v142 = vpack.c.b16 %v126, %v126
  %v143 = vpack.c.b16 %v127, %v127
  %v144 = vpack.c.b16 %v128, %v128
  %v145 = vpack.c.b16 %v129, %v129
  %v146 = vpack.c.b16 %v130, %v130
  %v147 = vpack.c.b16 %v131, %v131
  %v148 = vpack.c.b16 %v132, %v132
  %v149 = vpack.c.b16 %v133, %v133
  %v150 = vpack.c.b16 %v134, %v134
  %v151 = vpack.c.b16 %v135, %v135
  %v152 = vpack.c.b16 %v136, %v136
  %v153 = vpack.c.b16 %v137, %v137
  %v154 = vpack.c.b16 %v138, %v138
  %v155 = vpack.c.b16 %v139, %v139
  %172 = vst [vmem:[%s3] sm:$0xf] %v140
  %173 = vst [vmem:[%s3 + $0x4] sm:$0xf] %v141
  %174 = vst [vmem:[%s3 + $0x8] sm:$0xf] %v142
  %175 = vst [vmem:[%s3 + $0xc] sm:$0xf] %v143
  %176 = vst [vmem:[%s3 + $0x10] sm:$0xf] %v144
  %177 = vst [vmem:[%s3 + $0x14] sm:$0xf] %v145
  %178 = vst [vmem:[%s3 + $0x18] sm:$0xf] %v146
  %179 = vst [vmem:[%s3 + $0x1c] sm:$0xf] %v147
  %180 = vst [vmem:[%s3 + $0x20] sm:$0xf] %v148
  %181 = vst [vmem:[%s3 + $0x24] sm:$0xf] %v149
  %182 = vst [vmem:[%s3 + $0x28] sm:$0xf] %v150
  %183 = vst [vmem:[%s3 + $0x2c] sm:$0xf] %v151
  %184 = vst [vmem:[%s3 + $0x30] sm:$0xf] %v152
  %185 = vst [vmem:[%s3 + $0x34] sm:$0xf] %v153
  %186 = vst [vmem:[%s3 + $0x38] sm:$0xf] %v154
  %187 = vst [vmem:[%s3 + $0x3c] sm:$0xf] %v155
  // Predicated region
  $region14: #{resblock_forward.5} parent=0 // pred_check
    _
  $region15: #{resblock_forward.5} parent=0 // pred_check_branch
    %189 = sbr.rel (0) target = $region17
  $region16: #{resblock_forward.5} parent=0 // pred_region
    _
  $region17: #{resblock_forward.5} parent=0 // pred_fallthru
    _
  // Predicated region
  $region18: #{resblock_forward.5} parent=0 // pred_check
    _
  $region19: #{resblock_forward.5} parent=0 // pred_check_branch
    %191 = sbr.rel (0) target = $region21
  $region20: #{resblock_forward.5} parent=0 // pred_region
    _
  $region21: #{resblock_forward.5} parent=0 // pred_fallthru
    _

// kernel: resblock_forward.7
$region0: #{resblock_forward.7}
  #allocation0 [shape = 'u32[]', space=smem, size = 0x4, offset = 0x4, fixed_abs, tag = 'smem constant byte address 0x4 - core index']
  #allocation1 [shape = 'u32[144,128]{1,0:T(1,128)}', space=vmem, size = 0x12000, scoped, tag = 'internal scratch']
  %s0 = inlined_call_operand.vmem [shape: bf16[128,128], index: 0, kind: input, shape index: {}]
  %s1 = inlined_call_operand.vmem [shape: bf16[128,128], index: 1, kind: input, shape index: {}]
  %s2 = inlined_call_operand.vmem [shape: f32[1,128], index: 2, kind: input, shape index: {}]
  %s3 = inlined_call_operand.vmem [shape: f32[1,128], index: 3, kind: input, shape index: {}]
  %s4 = inlined_call_operand.vmem [shape: f32[1,128], index: 4, kind: input, shape index: {}]
  %s5 = inlined_call_operand.vmem [shape: f32[1,128], index: 5, kind: input, shape index: {}]
  %s6 = inlined_call_operand.vmem [shape: f32[128,128], index: 6, kind: output, shape index: {}]
  %s7 = sld [smem:[#allocation0]]
  $region34: #{resblock_forward.7} parent=0
    _
  %s9 = ssub.s32 1, %s7
  %s10 = scalar_select 0, %s9, %s7
  // Predicated region
  $region2: #{resblock_forward.7} parent=0 // pred_check
    _
  $region3: #{resblock_forward.7} parent=0 // pred_check_branch
    %12 = sbr.rel (0) target = $region5
  $region4: #{resblock_forward.7} parent=0 // pred_region
    _
  $region5: #{resblock_forward.7} parent=0 // pred_fallthru
    _
  // Predicated region
  $region6: #{resblock_forward.7} parent=0 // pred_check
    _
  $region7: #{resblock_forward.7} parent=0 // pred_check_branch
    %14 = sbr.rel (0) target = $region9
  $region8: #{resblock_forward.7} parent=0 // pred_region
    _
  $region9: #{resblock_forward.7} parent=0 // pred_fallthru
    _
  // Predicated region
  $region10: #{resblock_forward.7} parent=0 // pred_check
    _
  $region11: #{resblock_forward.7} parent=0 // pred_check_branch
    %16 = sbr.rel (0) target = $region13
  $region12: #{resblock_forward.7} parent=0 // pred_region
    _
  $region13: #{resblock_forward.7} parent=0 // pred_fallthru
    _
  // Predicated region
  $region14: #{resblock_forward.7} parent=0 // pred_check
    _
  $region15: #{resblock_forward.7} parent=0 // pred_check_branch
    %18 = sbr.rel (0) target = $region17
  $region16: #{resblock_forward.7} parent=0 // pred_region
    _
  $region17: #{resblock_forward.7} parent=0 // pred_fallthru
    _
  // Predicated region
  $region18: #{resblock_forward.7} parent=0 // pred_check
    _
  $region19: #{resblock_forward.7} parent=0 // pred_check_branch
    %20 = sbr.rel (0) target = $region21
  $region20: #{resblock_forward.7} parent=0 // pred_region
    _
  $region21: #{resblock_forward.7} parent=0 // pred_fallthru
    _
  // Predicated region
  $region22: #{resblock_forward.7} parent=0 // pred_check
    _
  $region23: #{resblock_forward.7} parent=0 // pred_check_branch
    %22 = sbr.rel (0) target = $region25
  $region24: #{resblock_forward.7} parent=0 // pred_region
    _
  $region25: #{resblock_forward.7} parent=0 // pred_fallthru
    _
  %v23 = vld [vmem:[%s0] sm:$0xf]
  %v24 = vld [vmem:[%s0 + $0x4] sm:$0xf]
  %v25 = vld [vmem:[%s0 + $0x8] sm:$0xf]
  %v26 = vld [vmem:[%s0 + $0xc] sm:$0xf]
  %v27 = vld [vmem:[%s0 + $0x10] sm:$0xf]
  %v28 = vld [vmem:[%s0 + $0x14] sm:$0xf]
  %v29 = vld [vmem:[%s0 + $0x18] sm:$0xf]
  %v30 = vld [vmem:[%s0 + $0x1c] sm:$0xf]
  %v31 = vld [vmem:[%s0 + $0x20] sm:$0xf]
  %v32 = vld [vmem:[%s0 + $0x24] sm:$0xf]
  %v33 = vld [vmem:[%s0 + $0x28] sm:$0xf]
  %v34 = vld [vmem:[%s0 + $0x2c] sm:$0xf]
  %v35 = vld [vmem:[%s0 + $0x30] sm:$0xf]
  %v36 = vld [vmem:[%s0 + $0x34] sm:$0xf]
  %v37 = vld [vmem:[%s0 + $0x38] sm:$0xf]
  %v38 = vld [vmem:[%s0 + $0x3c] sm:$0xf]
  %v39 = vunpack.c.l.bf16 %v23
  %v40 = vunpack.c.l.bf16 %v24
  %v41 = vunpack.c.l.bf16 %v25
  %v42 = vunpack.c.l.bf16 %v26
  %v43 = vunpack.c.l.bf16 %v27
  %v44 = vunpack.c.l.bf16 %v28
  %v45 = vunpack.c.l.bf16 %v29
  %v46 = vunpack.c.l.bf16 %v30
  %v47 = vunpack.c.l.bf16 %v31
  %v48 = vunpack.c.l.bf16 %v32
  %v49 = vunpack.c.l.bf16 %v33
  %v50 = vunpack.c.l.bf16 %v34
  %v51 = vunpack.c.l.bf16 %v35
  %v52 = vunpack.c.l.bf16 %v36
  %v53 = vunpack.c.l.bf16 %v37
  %v54 = vunpack.c.l.bf16 %v38
  %v55 = vld [vmem:[%s2] sm:$0x1]
  %v57 = vlaneseq
  %v58 = vshrl.u32 %v57, 7
  %v59 = vsub.s32 0, %v58
  %v60 = vrot.slane %v55, %v59
  %v62 = vmul.f32 %v39, %v60
  %v63 = vmul.f32 %v40, %v60
  %v64 = vmul.f32 %v41, %v60
  %v65 = vmul.f32 %v42, %v60
  %v66 = vmul.f32 %v43, %v60
  %v67 = vmul.f32 %v44, %v60
  %v68 = vmul.f32 %v45, %v60
  %v69 = vmul.f32 %v46, %v60
  %v70 = vmul.f32 %v47, %v60
  %v71 = vmul.f32 %v48, %v60
  %v72 = vmul.f32 %v49, %v60
  %v73 = vmul.f32 %v50, %v60
  %v74 = vmul.f32 %v51, %v60
  %v75 = vmul.f32 %v52, %v60
  %v76 = vmul.f32 %v53, %v60
  %v77 = vmul.f32 %v54, %v60
  %v78 = vld [vmem:[%s3] sm:$0x1]
  %v80 = vlaneseq
  %v81 = vshrl.u32 %v80, 7
  %v82 = vsub.s32 0, %v81
  %v83 = vrot.slane %v78, %v82
  %v85 = vadd.f32 %v62, %v83
  %v86 = vadd.f32 %v63, %v83
  %v87 = vadd.f32 %v64, %v83
  %v88 = vadd.f32 %v65, %v83
  %v89 = vadd.f32 %v66, %v83
  %v90 = vadd.f32 %v67, %v83
  %v91 = vadd.f32 %v68, %v83
  %v92 = vadd.f32 %v69, %v83
  %v93 = vadd.f32 %v70, %v83
  %v94 = vadd.f32 %v71, %v83
  %v95 = vadd.f32 %v72, %v83
  %v96 = vadd.f32 %v73, %v83
  %v97 = vadd.f32 %v74, %v83
  %v98 = vadd.f32 %v75, %v83
  %v99 = vadd.f32 %v76, %v83
  %v100 = vadd.f32 %v77, %v83
  %v101 = vld [vmem:[%s1] sm:$0xf]
  %v102 = vld [vmem:[%s1 + $0x4] sm:$0xf]
  %v103 = vld [vmem:[%s1 + $0x8] sm:$0xf]
  %v104 = vld [vmem:[%s1 + $0xc] sm:$0xf]
  %v105 = vld [vmem:[%s1 + $0x10] sm:$0xf]
  %v106 = vld [vmem:[%s1 + $0x14] sm:$0xf]
  %v107 = vld [vmem:[%s1 + $0x18] sm:$0xf]
  %v108 = vld [vmem:[%s1 + $0x1c] sm:$0xf]
  %v109 = vld [vmem:[%s1 + $0x20] sm:$0xf]
  %v110 = vld [vmem:[%s1 + $0x24] sm:$0xf]
  %v111 = vld [vmem:[%s1 + $0x28] sm:$0xf]
  %v112 = vld [vmem:[%s1 + $0x2c] sm:$0xf]
  %v113 = vld [vmem:[%s1 + $0x30] sm:$0xf]
  %v114 = vld [vmem:[%s1 + $0x34] sm:$0xf]
  %v115 = vld [vmem:[%s1 + $0x38] sm:$0xf]
  %v116 = vld [vmem:[%s1 + $0x3c] sm:$0xf]
  %v117 = vunpack.c.l.bf16 %v101
  %v118 = vunpack.c.l.bf16 %v102
  %v119 = vunpack.c.l.bf16 %v103
  %v120 = vunpack.c.l.bf16 %v104
  %v121 = vunpack.c.l.bf16 %v105
  %v122 = vunpack.c.l.bf16 %v106
  %v123 = vunpack.c.l.bf16 %v107
  %v124 = vunpack.c.l.bf16 %v108
  %v125 = vunpack.c.l.bf16 %v109
  %v126 = vunpack.c.l.bf16 %v110
  %v127 = vunpack.c.l.bf16 %v111
  %v128 = vunpack.c.l.bf16 %v112
  %v129 = vunpack.c.l.bf16 %v113
  %v130 = vunpack.c.l.bf16 %v114
  %v131 = vunpack.c.l.bf16 %v115
  %v132 = vunpack.c.l.bf16 %v116
  %v133 = vld [vmem:[%s4] sm:$0x1]
  %v135 = vlaneseq
  %v136 = vshrl.u32 %v135, 7
  %v137 = vsub.s32 0, %v136
  %v138 = vrot.slane %v133, %v137
  %v140 = vmul.f32 %v117, %v138
  %v141 = vmul.f32 %v118, %v138
  %v142 = vmul.f32 %v119, %v138
  %v143 = vmul.f32 %v120, %v138
  %v144 = vmul.f32 %v121, %v138
  %v145 = vmul.f32 %v122, %v138
  %v146 = vmul.f32 %v123, %v138
  %v147 = vmul.f32 %v124, %v138
  %v148 = vmul.f32 %v125, %v138
  %v149 = vmul.f32 %v126, %v138
  %v150 = vmul.f32 %v127, %v138
  %v151 = vmul.f32 %v128, %v138
  %v152 = vmul.f32 %v129, %v138
  %v153 = vmul.f32 %v130, %v138
  %v154 = vmul.f32 %v131, %v138
  %v155 = vmul.f32 %v132, %v138
  %v156 = vld [vmem:[%s5] sm:$0x1]
  %v158 = vlaneseq
  %v159 = vshrl.u32 %v158, 7
  %v160 = vsub.s32 0, %v159
  %v161 = vrot.slane %v156, %v160
  %v163 = vadd.f32 %v140, %v161
  %v164 = vadd.f32 %v141, %v161
  %v165 = vadd.f32 %v142, %v161
  %v166 = vadd.f32 %v143, %v161
  %v167 = vadd.f32 %v144, %v161
  %v168 = vadd.f32 %v145, %v161
  %v169 = vadd.f32 %v146, %v161
  %v170 = vadd.f32 %v147, %v161
  %v171 = vadd.f32 %v148, %v161
  %v172 = vadd.f32 %v149, %v161
  %v173 = vadd.f32 %v150, %v161
  %v174 = vadd.f32 %v151, %v161
  %v175 = vadd.f32 %v152, %v161
  %v176 = vadd.f32 %v153, %v161
  %v177 = vadd.f32 %v154, %v161
  %v178 = vadd.f32 %v155, %v161
  %v179 = vadd.f32 %v85, %v163
  %v180 = vadd.f32 %v86, %v164
  %v181 = vadd.f32 %v87, %v165
  %v182 = vadd.f32 %v88, %v166
  %v183 = vadd.f32 %v89, %v167
  %v184 = vadd.f32 %v90, %v168
  %v185 = vadd.f32 %v91, %v169
  %v186 = vadd.f32 %v92, %v170
  %v187 = vadd.f32 %v93, %v171
  %v188 = vadd.f32 %v94, %v172
  %v189 = vadd.f32 %v95, %v173
  %v190 = vadd.f32 %v96, %v174
  %v191 = vadd.f32 %v97, %v175
  %v192 = vadd.f32 %v98, %v176
  %v193 = vadd.f32 %v99, %v177
  %v194 = vadd.f32 %v100, %v178
  %v195 = vmax.f32 %v179, 0.0
  %v196 = vmax.f32 %v180, 0.0
  %v197 = vmax.f32 %v181, 0.0
  %v198 = vmax.f32 %v182, 0.0
  %v199 = vmax.f32 %v183, 0.0
  %v200 = vmax.f32 %v184, 0.0
  %v201 = vmax.f32 %v185, 0.0
  %v202 = vmax.f32 %v186, 0.0
  %v203 = vmax.f32 %v187, 0.0
  %v204 = vmax.f32 %v188, 0.0
  %v205 = vmax.f32 %v189, 0.0
  %v206 = vmax.f32 %v190, 0.0
  %v207 = vmax.f32 %v191, 0.0
  %v208 = vmax.f32 %v192, 0.0
  %v209 = vmax.f32 %v193, 0.0
  %v210 = vmax.f32 %v194, 0.0
  %211 = vst [vmem:[%s6] sm:$0xff] %v195
  %212 = vst [vmem:[%s6 + $0x8] sm:$0xff] %v196
  %213 = vst [vmem:[%s6 + $0x10] sm:$0xff] %v197
  %214 = vst [vmem:[%s6 + $0x18] sm:$0xff] %v198
  %215 = vst [vmem:[%s6 + $0x20] sm:$0xff] %v199
  %216 = vst [vmem:[%s6 + $0x28] sm:$0xff] %v200
  %217 = vst [vmem:[%s6 + $0x30] sm:$0xff] %v201
  %218 = vst [vmem:[%s6 + $0x38] sm:$0xff] %v202
  %219 = vst [vmem:[%s6 + $0x40] sm:$0xff] %v203
  %220 = vst [vmem:[%s6 + $0x48] sm:$0xff] %v204
  %221 = vst [vmem:[%s6 + $0x50] sm:$0xff] %v205
  %222 = vst [vmem:[%s6 + $0x58] sm:$0xff] %v206
  %223 = vst [vmem:[%s6 + $0x60] sm:$0xff] %v207
  %224 = vst [vmem:[%s6 + $0x68] sm:$0xff] %v208
  %225 = vst [vmem:[%s6 + $0x70] sm:$0xff] %v209
  %226 = vst [vmem:[%s6 + $0x78] sm:$0xff] %v210
  // Predicated region
  $region26: #{resblock_forward.7} parent=0 // pred_check
    _
  $region27: #{resblock_forward.7} parent=0 // pred_check_branch
    %228 = sbr.rel (0) target = $region29
  $region28: #{resblock_forward.7} parent=0 // pred_region
    _
  $region29: #{resblock_forward.7} parent=0 // pred_fallthru
    _
  // Predicated region
  $region30: #{resblock_forward.7} parent=0 // pred_check
    _
  $region31: #{resblock_forward.7} parent=0 // pred_check_branch
    %230 = sbr.rel (0) target = $region33
  $region32: #{resblock_forward.7} parent=0 // pred_region
    _
  $region33: #{resblock_forward.7} parent=0 // pred_fallthru
    _

// kernel: resblock_forward.6
$region0: #{resblock_forward.6}
  #allocation0 [shape = 'u32[]', space=smem, size = 0x4, offset = 0x4, fixed_abs, tag = 'smem constant byte address 0x4 - core index']
  #allocation1 [shape = 'u32[144,128]{1,0:T(1,128)}', space=vmem, size = 0x12000, scoped, tag = 'internal scratch']
  %s0 = inlined_call_operand.vmem [shape: bf16[128,128], index: 0, kind: input, shape index: {}]
  %s1 = inlined_call_operand.vmem [shape: bf16[128,128], index: 1, kind: input, shape index: {}]
  %s2 = inlined_call_operand.vmem [shape: bf16[128,128], index: 2, kind: input, shape index: {}]
  %s3 = inlined_call_operand.vmem [shape: bf16[128,128], index: 3, kind: input, shape index: {}]
  %s4 = inlined_call_operand.vmem [shape: bf16[128,128], index: 4, kind: output, shape index: {0}]
  %s5 = inlined_call_operand.vmem [shape: bf16[128,128], index: 5, kind: output, shape index: {1}]
  %s6 = inlined_call_operand.vmem [shape: f32[2,16,128], index: 6, kind: output, shape index: {2}]
  %s7 = inlined_call_operand.vmem [shape: f32[2,16,128], index: 7, kind: output, shape index: {3}]
  %8 = xla_tuple %s4, %s5, %s6, %s7
  %s9 = sld [smem:[#allocation0]]
  $region77: #{resblock_forward.6} parent=0
    _
  %s11 = ssub.s32 1, %s9
  %s12 = scalar_select 0, %s11, %s9
  loop: start=0, step=1, limit=4
  $region2: #{resblock_forward.6} parent=0 // loop_pre_header
    _
  $region3: #{resblock_forward.6} parent=0 // loop_header
    %s14 = sphi 0, %s18
    %p15 = scmp.ge.s32.totalorder %s14, 4
    %s21 = sphi 0, %s33
    %s22 = sphi 0, %s29
    %s23 = sphi 0, %s21
    %s24 = sphi 0, %s22
    %s25 = sphi 0, %s23
    %s26 = sphi 0, %s24
    %s38 = sphi 0, %s40
    %s41 = sphi 0, %s38
    %s42 = sphi 0, %s41
    %s58 = sphi 0, %s42
    %s62 = sphi 0, %s62
    %s64 = sphi 0, %s62
    %s65 = sphi 0, %s64
    %s79 = sphi 0, %s65
    %s87 = sphi 0, %s89
    %s90 = sphi 0, %s87
    %s91 = sphi 0, %s90
    %s107 = sphi 0, %s91
    %s111 = sphi 0, %s111
    %s113 = sphi 0, %s111
    %s114 = sphi 0, %s113
    %s128 = sphi 0, %s114
    %s136 = sphi 0, %s138
    %s139 = sphi 0, %s136
    %s140 = sphi 0, %s139
    %s156 = sphi 0, %s140
    %s164 = sphi 0, %s166
    %s167 = sphi 0, %s164
    %s168 = sphi 0, %s167
    %s184 = sphi 0, %s168
    %s190 = sphi 0, %s192
    %s193 = sphi 0, %s190
    %s194 = sphi 0, %s193
    %s210 = sphi 0, %s194
    %s216 = sphi 0, %s218
    %s219 = sphi 0, %s216
    %s220 = sphi 0, %s219
    %s236 = sphi 0, %s220
  $region4: #{resblock_forward.6} parent=0 // loop_header_branch
    %17 = sbr.rel (%p15) target = $region8
  $region5: #{resblock_forward.6} parent=0 // loop_body
    %s19 = ssub.s32 %s14, 1
    %s20 = ssub.s32 %s14, 2
    %s27 = sadd.s32 1, %s22
    %p28 = scmp.ge.s32.totalorder %s27, 1
    %s29 = scalar_select %p28, 0, %s27
    %s30 = sadd.s32 1, %s21
    %s31 = scalar_select %p28, %s30, %s21
    %p32 = scmp.ge.s32.totalorder %s31, 2
    %s33 = scalar_select %p32, 0, %s31
    %s34 = sadd.s32 %s21, %s22
    %s35 = sadd.s32 %s33, %s29
    %s36 = ssub.s32 %s34, %s35
    %p37 = scmp.eq.s32.totalorder %s36, 0
    %s39 = sadd.s32 %s38, 1
    %s40 = scalar_select %p37, %s38, %s39
    %p43 = pneg %p37
    %p44 = scmp.eq.s32.totalorder %s14, 1
    %p45 = por %p43, %p44
    %p46 = scmp.ne.s32.totalorder %s38, %s41
    %p47 = scmp.eq.s32.totalorder %s14, 0
    %p48 = por %p46, %p47
    %p49 = scmp.ne.s32.totalorder %s38, %s41
    %p50 = scmp.eq.s32.totalorder %s19, 1
    %p51 = por %p49, %p50
    %p52 = scmp.ne.s32.totalorder %s41, %s42
    %p53 = scmp.eq.s32.totalorder %s19, 0
    %p54 = por %p52, %p53
    %p55 = scmp.ne.s32.totalorder %s41, %s42
    %p56 = scmp.eq.s32.totalorder %s20, 1
    %p57 = por %p55, %p56
    %p59 = scmp.ne.s32.totalorder %s42, %s58
    %p60 = scmp.eq.s32.totalorder %s20, 0
    %p61 = por %p59, %p60
    %s63 = sadd.s32 %s62, 1
    %p66 = scmp.eq.s32.totalorder %s14, 1
    %p67 = scmp.ne.s32.totalorder %s62, %s64
    %p68 = scmp.eq.s32.totalorder %s14, 0
    %p69 = por %p67, %p68
    %p70 = scmp.ne.s32.totalorder %s62, %s64
    %p71 = scmp.eq.s32.totalorder %s19, 1
    %p72 = por %p70, %p71
    %p73 = scmp.ne.s32.totalorder %s64, %s65
    %p74 = scmp.eq.s32.totalorder %s19, 0
    %p75 = por %p73, %p74
    %p76 = scmp.ne.s32.totalorder %s64, %s65
    %p77 = scmp.eq.s32.totalorder %s20, 1
    %p78 = por %p76, %p77
    %p80 = scmp.ne.s32.totalorder %s65, %s79
    %p81 = scmp.eq.s32.totalorder %s20, 0
    %p82 = por %p80, %p81
    %s83 = sadd.s32 %s21, %s22
    %s84 = sadd.s32 %s33, %s29
    %s85 = ssub.s32 %s83, %s84
    %p86 = scmp.eq.s32.totalorder %s85, 0
    %s88 = sadd.s32 %s87, 1
    %s89 = scalar_select %p86, %s87, %s88
    %p92 = pneg %p86
    %p93 = scmp.eq.s32.totalorder %s14, 1
    %p94 = por %p92, %p93
    %p95 = scmp.ne.s32.totalorder %s87, %s90
    %p96 = scmp.eq.s32.totalorder %s14, 0
    %p97 = por %p95, %p96
    %p98 = scmp.ne.s32.totalorder %s87, %s90
    %p99 = scmp.eq.s32.totalorder %s19, 1
    %p100 = por %p98, %p99
    %p101 = scmp.ne.s32.totalorder %s90, %s91
    %p102 = scmp.eq.s32.totalorder %s19, 0
    %p103 = por %p101, %p102
    %p104 = scmp.ne.s32.totalorder %s90, %s91
    %p105 = scmp.eq.s32.totalorder %s20, 1
    %p106 = por %p104, %p105
    %p108 = scmp.ne.s32.totalorder %s91, %s107
    %p109 = scmp.eq.s32.totalorder %s20, 0
    %p110 = por %p108, %p109
    %s112 = sadd.s32 %s111, 1
    %p115 = scmp.eq.s32.totalorder %s14, 1
    %p116 = scmp.ne.s32.totalorder %s111, %s113
    %p117 = scmp.eq.s32.totalorder %s14, 0
    %p118 = por %p116, %p117
    %p119 = scmp.ne.s32.totalorder %s111, %s113
    %p120 = scmp.eq.s32.totalorder %s19, 1
    %p121 = por %p119, %p120
    %p122 = scmp.ne.s32.totalorder %s113, %s114
    %p123 = scmp.eq.s32.totalorder %s19, 0
    %p124 = por %p122, %p123
    %p125 = scmp.ne.s32.totalorder %s113, %s114
    %p126 = scmp.eq.s32.totalorder %s20, 1
    %p127 = por %p125, %p126
    %p129 = scmp.ne.s32.totalorder %s114, %s128
    %p130 = scmp.eq.s32.totalorder %s20, 0
    %p131 = por %p129, %p130
    %s132 = sadd.s32 %s21, %s22
    %s133 = sadd.s32 %s33, %s29
    %s134 = ssub.s32 %s132, %s133
    %p135 = scmp.eq.s32.totalorder %s134, 0
    %s137 = sadd.s32 %s136, 1
    %s138 = scalar_select %p135, %s136, %s137
    %p141 = pneg %p135
    %p142 = scmp.eq.s32.totalorder %s14, 1
    %p143 = por %p141, %p142
    %p144 = scmp.ne.s32.totalorder %s136, %s139
    %p145 = scmp.eq.s32.totalorder %s14, 0
    %p146 = por %p144, %p145
    %p147 = scmp.ne.s32.totalorder %s136, %s139
    %p148 = scmp.eq.s32.totalorder %s19, 1
    %p149 = por %p147, %p148
    %p150 = scmp.ne.s32.totalorder %s139, %s140
    %p151 = scmp.eq.s32.totalorder %s19, 0
    %p152 = por %p150, %p151
    %p153 = scmp.ne.s32.totalorder %s139, %s140
    %p154 = scmp.eq.s32.totalorder %s20, 1
    %p155 = por %p153, %p154
    %p157 = scmp.ne.s32.totalorder %s140, %s156
    %p158 = scmp.eq.s32.totalorder %s20, 0
    %p159 = por %p157, %p158
    %s160 = sadd.s32 %s21, %s22
    %s161 = sadd.s32 %s33, %s29
    %s162 = ssub.s32 %s160, %s161
    %p163 = scmp.eq.s32.totalorder %s162, 0
    %s165 = sadd.s32 %s164, 1
    %s166 = scalar_select %p163, %s164, %s165
    %p169 = pneg %p163
    %p170 = scmp.eq.s32.totalorder %s14, 1
    %p171 = por %p169, %p170
    %p172 = scmp.ne.s32.totalorder %s164, %s167
    %p173 = scmp.eq.s32.totalorder %s14, 0
    %p174 = por %p172, %p173
    %p175 = scmp.ne.s32.totalorder %s164, %s167
    %p176 = scmp.eq.s32.totalorder %s19, 1
    %p177 = por %p175, %p176
    %p178 = scmp.ne.s32.totalorder %s167, %s168
    %p179 = scmp.eq.s32.totalorder %s19, 0
    %p180 = por %p178, %p179
    %p181 = scmp.ne.s32.totalorder %s167, %s168
    %p182 = scmp.eq.s32.totalorder %s20, 1
    %p183 = por %p181, %p182
    %p185 = scmp.ne.s32.totalorder %s168, %s184
    %p186 = scmp.eq.s32.totalorder %s20, 0
    %p187 = por %p185, %p186
    %s188 = ssub.s32 %s21, %s33
    %p189 = scmp.eq.s32.totalorder %s188, 0
    %s191 = sadd.s32 %s190, 1
    %s192 = scalar_select %p189, %s190, %s191
    %p195 = pneg %p189
    %p196 = scmp.eq.s32.totalorder %s14, 1
    %p197 = por %p195, %p196
    %p198 = scmp.ne.s32.totalorder %s190, %s193
    %p199 = scmp.eq.s32.totalorder %s14, 0
    %p200 = por %p198, %p199
    %p201 = scmp.ne.s32.totalorder %s190, %s193
    %p202 = scmp.eq.s32.totalorder %s19, 1
    %p203 = por %p201, %p202
    %p204 = scmp.ne.s32.totalorder %s193, %s194
    %p205 = scmp.eq.s32.totalorder %s19, 0
    %p206 = por %p204, %p205
    %p207 = scmp.ne.s32.totalorder %s193, %s194
    %p208 = scmp.eq.s32.totalorder %s20, 1
    %p209 = por %p207, %p208
    %p211 = scmp.ne.s32.totalorder %s194, %s210
    %p212 = scmp.eq.s32.totalorder %s20, 0
    %p213 = por %p211, %p212
    %s214 = ssub.s32 %s21, %s33
    %p215 = scmp.eq.s32.totalorder %s214, 0
    %s217 = sadd.s32 %s216, 1
    %s218 = scalar_select %p215, %s216, %s217
    %p221 = pneg %p215
    %p222 = scmp.eq.s32.totalorder %s14, 1
    %p223 = por %p221, %p222
    %p224 = scmp.ne.s32.totalorder %s216, %s219
    %p225 = scmp.eq.s32.totalorder %s14, 0
    %p226 = por %p224, %p225
    %p227 = scmp.ne.s32.totalorder %s216, %s219
    %p228 = scmp.eq.s32.totalorder %s19, 1
    %p229 = por %p227, %p228
    %p230 = scmp.ne.s32.totalorder %s219, %s220
    %p231 = scmp.eq.s32.totalorder %s19, 0
    %p232 = por %p230, %p231
    %p233 = scmp.ne.s32.totalorder %s219, %s220
    %p234 = scmp.eq.s32.totalorder %s20, 1
    %p235 = por %p233, %p234
    %p237 = scmp.ne.s32.totalorder %s220, %s236
    %p238 = scmp.eq.s32.totalorder %s20, 0
    %p239 = por %p237, %p238
    %p240 = scmp.le.s32.totalorder 1, %s14
    %p241 = scmp.lt.s32.totalorder %s14, 3
    %p242 = pnand %p240, %p241
    %p243 = pneg %p242
    // Predicated region
    $region9: #{resblock_forward.6} parent=5 // pred_check
      _
    $region10: #{resblock_forward.6} parent=5 // pred_check_branch
      %245 = sbr.rel (%p242) target = $region12
    $region11: #{resblock_forward.6} parent=5 // pred_region
      %s246 = ssub.s32 %s14, 1
      // Predicated region
      $region13: #{resblock_forward.6} parent=11 // pred_check
        %p247 = pneg %p75
      $region14: #{resblock_forward.6} parent=11 // pred_check_branch
        %249 = sbr.rel (%p247) target = $region16
      $region15: #{resblock_forward.6} parent=11 // pred_region
        _
      $region16: #{resblock_forward.6} parent=11 // pred_fallthru
        _
      // Predicated region
      $region17: #{resblock_forward.6} parent=11 // pred_check
        %p250 = pneg %p124
      $region18: #{resblock_forward.6} parent=11 // pred_check_branch
        %252 = sbr.rel (%p250) target = $region20
      $region19: #{resblock_forward.6} parent=11 // pred_region
        _
      $region20: #{resblock_forward.6} parent=11 // pred_fallthru
        _
    $region12: #{resblock_forward.6} parent=5 // pred_fallthru
      _
    %p253 = scmp.lt.s32.totalorder %s14, 2
    // Predicated region
    $region21: #{resblock_forward.6} parent=5 // pred_check
      %p254 = pneg %p253
    $region22: #{resblock_forward.6} parent=5 // pred_check_branch
      %256 = sbr.rel (%p254) target = $region24
    $region23: #{resblock_forward.6} parent=5 // pred_region
      // Predicated region
      $region25: #{resblock_forward.6} parent=23 // pred_check
        %p257 = pneg %p48
      $region26: #{resblock_forward.6} parent=23 // pred_check_branch
        %259 = sbr.rel (%p257) target = $region28
      $region27: #{resblock_forward.6} parent=23 // pred_region
        %s260 = sadd.s32 %s21, %s22
        %s261 = smul.u32 8, %s260
        %p262 = scmp.lt.s32.totalorder %s261, 15
        %s263 = scalar_select %p262, %s261, 15
        %s264 = smul.addr %s263, 4
        %s265 = scalar_lea.vmem %s0, %s264
        %s266 = sadd.s32 %s21, %s22
        %s267 = smul.u32 8, %s266
      $region28: #{resblock_forward.6} parent=23 // pred_fallthru
        _
      // Predicated region
      $region29: #{resblock_forward.6} parent=23 // pred_check
        %p268 = pneg %p97
      $region30: #{resblock_forward.6} parent=23 // pred_check_branch
        %270 = sbr.rel (%p268) target = $region32
      $region31: #{resblock_forward.6} parent=23 // pred_region
        %s271 = sadd.s32 %s21, %s22
        %s272 = smul.u32 8, %s271
        %p273 = scmp.lt.s32.totalorder %s272, 15
        %s274 = scalar_select %p273, %s272, 15
        %s275 = smul.addr %s274, 4
        %s276 = scalar_lea.vmem %s2, %s275
        %s277 = sadd.s32 %s21, %s22
        %s278 = smul.u32 8, %s277
      $region32: #{resblock_forward.6} parent=23 // pred_fallthru
        _
    $region24: #{resblock_forward.6} parent=5 // pred_fallthru
      _
    %p279 = scmp.le.s32.totalorder 1, %s14
    %p280 = scmp.lt.s32.totalorder %s14, 3
    %p281 = pnand %p279, %p280
    %p282 = pneg %p281
    // Predicated region
    $region33: #{resblock_forward.6} parent=5 // pred_check
      _
    $region34: #{resblock_forward.6} parent=5 // pred_check_branch
      %284 = sbr.rel (%p281) target = $region36
    $region35: #{resblock_forward.6} parent=5 // pred_region
      %s285 = ssub.s32 %s14, 1
      %s286 = sadd.s32 %s23, %s24
      %s287 = smul.u32 8, %s286
      %p288 = scmp.lt.s32.totalorder %s287, 15
      %s289 = scalar_select %p288, %s287, 15
      %s290 = smul.addr %s289, 4
      %s291 = scalar_lea.vmem %s0, %s290
      %p292 = pneg %p54
      %p293 = pneg %p51
      %p294 = pneg %p75
      %p295 = pneg %p72
      %s296 = sadd.s32 %s23, %s24
      %s297 = smul.u32 8, %s296
      %p298 = scmp.lt.s32.totalorder %s297, 15
      %s299 = scalar_select %p298, %s297, 15
      %s300 = smul.addr %s299, 4
      %s301 = scalar_lea.vmem %s2, %s300
      %p302 = pneg %p103
      %p303 = pneg %p100
      %p304 = pneg %p124
      %p305 = pneg %p121
      %p306 = pneg %p152
      %p307 = pneg %p149
      %s308 = sadd.s32 %s23, %s24
      %s309 = smul.u32 8, %s308
      %p310 = scmp.lt.s32.totalorder %s309, 15
      %s311 = scalar_select %p310, %s309, 15
      %s312 = smul.addr %s311, 4
      %s313 = scalar_lea.vmem %s4, %s312
      %p314 = pneg %p180
      %p315 = pneg %p177
      %s316 = sadd.s32 %s23, %s24
      %s317 = smul.u32 8, %s316
      %p318 = scmp.lt.s32.totalorder %s317, 15
      %s319 = scalar_select %p318, %s317, 15
      %s320 = smul.addr %s319, 4
      %s321 = scalar_lea.vmem %s5, %s320
      %p322 = pneg %p206
      %p323 = pneg %p203
      %p324 = scmp.lt.s32.totalorder %s23, 1
      %s325 = scalar_select %p324, %s23, 1
      %s326 = smul.addr %s325, 2
      %s327 = smul.addr %s326, 8
      %s328 = scalar_lea.vmem %s6, %s327
      %p329 = pneg %p232
      %p330 = pneg %p229
      %p331 = scmp.lt.s32.totalorder %s23, 1
      %s332 = scalar_select %p331, %s23, 1
      %s333 = smul.addr %s332, 2
      %s334 = smul.addr %s333, 8
      %s335 = scalar_lea.vmem %s7, %s334
      %s336 = sadd.s32 %s23, %s24
      %s337 = smul.u32 8, %s336
      %p338 = scmp.lt.s32.totalorder %s337, 15
      %s339 = scalar_select %p338, %s337, 15
      %s340 = smul.addr %s339, 4
      %s341 = scalar_lea.vmem %s0, %s340
      %s342 = sadd.s32 %s23, %s24
      %s343 = smul.u32 8, %s342
      %s344 = sadd.s32 %s23, %s24
      %s345 = smul.u32 8, %s344
      %p346 = scmp.lt.s32.totalorder %s345, 15
      %s347 = scalar_select %p346, %s345, 15
      %s348 = smul.addr %s347, 4
      %s349 = scalar_lea.vmem %s2, %s348
      %s350 = sadd.s32 %s23, %s24
      %s351 = smul.u32 8, %s350
      %s352 = sadd.s32 %s23, %s24
      %s353 = smul.u32 8, %s352
      %p354 = scmp.lt.s32.totalorder %s353, 15
      %s355 = scalar_select %p354, %s353, 15
      %s356 = smul.addr %s355, 4
      %s357 = scalar_lea.vmem %s4, %s356
      %s358 = sadd.s32 %s23, %s24
      %s359 = smul.u32 8, %s358
      %s360 = sadd.s32 %s23, %s24
      %s361 = smul.u32 8, %s360
      %p362 = scmp.lt.s32.totalorder %s361, 15
      %s363 = scalar_select %p362, %s361, 15
      %s364 = smul.addr %s363, 4
      %s365 = scalar_lea.vmem %s5, %s364
      %s366 = sadd.s32 %s23, %s24
      %s367 = smul.u32 8, %s366
      %p368 = scmp.lt.s32.totalorder %s23, 1
      %s369 = scalar_select %p368, %s23, 1
      %s370 = smul.addr %s369, 2
      %s371 = smul.addr %s370, 8
      %s372 = scalar_lea.vmem %s6, %s371
      %p373 = scmp.lt.s32.totalorder %s23, 1
      %s374 = scalar_select %p373, %s23, 1
      %s375 = smul.addr %s374, 2
      %s376 = smul.addr %s375, 8
      %s377 = scalar_lea.vmem %s7, %s376
      %p379 = scmp.eq.s32.totalorder %s24, 0
      // Predicated region
      $region37: #{resblock_forward.6} parent=35 // pred_check
        %p380 = pneg %p379
      $region38: #{resblock_forward.6} parent=35 // pred_check_branch
        %382 = sbr.rel (%p380) target = $region40
      $region39: #{resblock_forward.6} parent=35 // pred_region
        %383 = vst [vmem:[%s372] sm:$0xff] 0.0
        %384 = vst [vmem:[%s372 + $0x8] sm:$0xff] 0.0
        %385 = vst [vmem:[%s377] sm:$0xff] 0.0
        %386 = vst [vmem:[%s377 + $0x8] sm:$0xff] 0.0
      $region40: #{resblock_forward.6} parent=35 // pred_fallthru
        _
      %v387 = vld [vmem:[%s341] sm:$0xf]
      %v388 = vld [vmem:[%s341 + $0x4] sm:$0xf]
      %v389 = vld [vmem:[%s341 + $0x8] sm:$0xf]
      %v390 = vld [vmem:[%s341 + $0xc] sm:$0xf]
      %v391 = vld [vmem:[%s341 + $0x10] sm:$0xf]
      %v392 = vld [vmem:[%s341 + $0x14] sm:$0xf]
      %v393 = vld [vmem:[%s341 + $0x18] sm:$0xf]
      %v394 = vld [vmem:[%s341 + $0x1c] sm:$0xf]
      %v395 = vld [vmem:[%s1] sm:$0xf]
      %v396 = vld [vmem:[%s1 + $0x4] sm:$0xf]
      %v397 = vld [vmem:[%s1 + $0x8] sm:$0xf]
      %v398 = vld [vmem:[%s1 + $0xc] sm:$0xf]
      %v399 = vld [vmem:[%s1 + $0x10] sm:$0xf]
      %v400 = vld [vmem:[%s1 + $0x14] sm:$0xf]
      %v401 = vld [vmem:[%s1 + $0x18] sm:$0xf]
      %v402 = vld [vmem:[%s1 + $0x1c] sm:$0xf]
      %v403 = vld [vmem:[%s1 + $0x20] sm:$0xf]
      %v404 = vld [vmem:[%s1 + $0x24] sm:$0xf]
      %v405 = vld [vmem:[%s1 + $0x28] sm:$0xf]
      %v406 = vld [vmem:[%s1 + $0x2c] sm:$0xf]
      %v407 = vld [vmem:[%s1 + $0x30] sm:$0xf]
      %v408 = vld [vmem:[%s1 + $0x34] sm:$0xf]
      %v409 = vld [vmem:[%s1 + $0x38] sm:$0xf]
      %v410 = vld [vmem:[%s1 + $0x3c] sm:$0xf]
      %v419 = vunpack.c.l.b16 %v387
      %v420 = vunpack.c.l.b16 %v388
      %v421 = vunpack.c.l.b16 %v389
      %v422 = vunpack.c.l.b16 %v390
      %v423 = vunpack.c.l.b16 %v391
      %v424 = vunpack.c.l.b16 %v392
      %v425 = vunpack.c.l.b16 %v393
      %v426 = vunpack.c.l.b16 %v394
      %v427 = vpack.c.b16 %v420, %v419
      %v428 = vpack.c.b16 %v422, %v421
      %v429 = vpack.c.b16 %v424, %v423
      %v430 = vpack.c.b16 %v426, %v425
      %v451 = vunpack.c.l.b16 %v395
      %v452 = vunpack.c.l.b16 %v396
      %v453 = vunpack.c.l.b16 %v397
      %v454 = vunpack.c.l.b16 %v398
      %v455 = vunpack.c.l.b16 %v399
      %v456 = vunpack.c.l.b16 %v400
      %v457 = vunpack.c.l.b16 %v401
      %v458 = vunpack.c.l.b16 %v402
      %v459 = vunpack.c.l.b16 %v403
      %v460 = vunpack.c.l.b16 %v404
      %v461 = vunpack.c.l.b16 %v405
      %v462 = vunpack.c.l.b16 %v406
      %v463 = vunpack.c.l.b16 %v407
      %v464 = vunpack.c.l.b16 %v408
      %v465 = vunpack.c.l.b16 %v409
      %v466 = vunpack.c.l.b16 %v410
      %v467 = vpack.c.b16 %v452, %v451
      %v468 = vpack.c.b16 %v454, %v453
      %v469 = vpack.c.b16 %v456, %v455
      %v470 = vpack.c.b16 %v458, %v457
      %v471 = vpack.c.b16 %v460, %v459
      %v472 = vpack.c.b16 %v462, %v461
      %v473 = vpack.c.b16 %v464, %v463
      %v474 = vpack.c.b16 %v466, %v465
      %483 = vmatprep.subr.bf16.mxu0 0
      %484 = vmatpush1.bf16.msra.mxu0 %v474
      %485 = vmatprep.subr.bf16.mxu0 0
      %486 = vmatpush1.bf16.msra.mxu0 %v473
      %487 = vmatprep.subr.bf16.mxu0 0
      %488 = vmatpush1.bf16.msra.mxu0 %v472
      %489 = vmatprep.subr.bf16.mxu0 0
      %490 = vmatpush1.bf16.msra.mxu0 %v471
      %491 = vmatprep.subr.bf16.mxu0 0
      %492 = vmatpush1.bf16.msra.mxu0 %v470
      %493 = vmatprep.subr.bf16.mxu0 0
      %494 = vmatpush1.bf16.msra.mxu0 %v469
      %495 = vmatprep.subr.bf16.mxu0 0
      %496 = vmatpush1.bf16.msra.mxu0 %v468
      %497 = vmatprep.subr.bf16.mxu0 0
      %498 = vmatpush1.bf16.msra.mxu0 %v467
      %499 = vmatprep.subr.bf16.mxu0 0
      %500 = vmatpush2.bf16.msra.mxu0 0
      %501 = vmatprep.subr.bf16.mxu0 0
      %502 = vmatpush2.bf16.msra.mxu0 0
      %503 = vmatprep.subr.bf16.mxu0 0
      %504 = vmatpush2.bf16.msra.mxu0 0
      %505 = vmatprep.subr.bf16.mxu0 0
      %506 = vmatpush2.bf16.msra.mxu0 0
      %507 = vmatprep.subr.bf16.mxu0 0
      %508 = vmatpush2.bf16.msra.mxu0 0
      %509 = vmatprep.subr.bf16.mxu0 0
      %510 = vmatpush2.bf16.msra.mxu0 0
      %511 = vmatprep.subr.bf16.mxu0 0
      %512 = vmatpush2.bf16.msra.mxu0 0
      %513 = vmatprep.subr.bf16.mxu0 0
      %514 = vmatpush2.bf16.msra.mxu0 0
      %515 = vmatprep.mubr.bf16.mxu0 0
      %516 = vmatmul.mubr.bf16.gmra.mxu0 %v427
      %v517 = vpop.f32.mrf.mxu0
      %v518 = vadd.f32 0.0, %v517
      %v519 = vpop.f32.mrf.mxu0
      %v520 = vpop.f32.mrf.mxu0
      %v521 = vadd.f32 0.0, %v520
      %v522 = vpop.f32.mrf.mxu0
      %523 = vmatprep.mubr.bf16.mxu0 0
      %524 = vmatmul.mubr.bf16.gmra.mxu0 %v428
      %v525 = vpop.f32.mrf.mxu0
      %v526 = vadd.f32 0.0, %v525
      %v527 = vpop.f32.mrf.mxu0
      %v528 = vpop.f32.mrf.mxu0
      %v529 = vadd.f32 0.0, %v528
      %v530 = vpop.f32.mrf.mxu0
      %531 = vmatprep.mubr.bf16.mxu0 0
      %532 = vmatmul.mubr.bf16.gmra.mxu0 %v429
      %v533 = vpop.f32.mrf.mxu0
      %v534 = vadd.f32 0.0, %v533
      %v535 = vpop.f32.mrf.mxu0
      %v536 = vpop.f32.mrf.mxu0
      %v537 = vadd.f32 0.0, %v536
      %v538 = vpop.f32.mrf.mxu0
      %539 = vmatprep.mubr.bf16.mxu0 0
      %540 = vmatmul.mubr.bf16.gmra.mxu0 %v430
      %v541 = vpop.f32.mrf.mxu0
      %v542 = vadd.f32 0.0, %v541
      %v543 = vpop.f32.mrf.mxu0
      %v544 = vpop.f32.mrf.mxu0
      %v545 = vadd.f32 0.0, %v544
      %v546 = vpop.f32.mrf.mxu0
      %547 = vdwg.mxu0
      %v548 = vld [vmem:[%s349] sm:$0xf]
      %v549 = vld [vmem:[%s349 + $0x4] sm:$0xf]
      %v550 = vld [vmem:[%s349 + $0x8] sm:$0xf]
      %v551 = vld [vmem:[%s349 + $0xc] sm:$0xf]
      %v552 = vld [vmem:[%s349 + $0x10] sm:$0xf]
      %v553 = vld [vmem:[%s349 + $0x14] sm:$0xf]
      %v554 = vld [vmem:[%s349 + $0x18] sm:$0xf]
      %v555 = vld [vmem:[%s349 + $0x1c] sm:$0xf]
      %v556 = vld [vmem:[%s3] sm:$0xf]
      %v557 = vld [vmem:[%s3 + $0x4] sm:$0xf]
      %v558 = vld [vmem:[%s3 + $0x8] sm:$0xf]
      %v559 = vld [vmem:[%s3 + $0xc] sm:$0xf]
      %v560 = vld [vmem:[%s3 + $0x10] sm:$0xf]
      %v561 = vld [vmem:[%s3 + $0x14] sm:$0xf]
      %v562 = vld [vmem:[%s3 + $0x18] sm:$0xf]
      %v563 = vld [vmem:[%s3 + $0x1c] sm:$0xf]
      %v564 = vld [vmem:[%s3 + $0x20] sm:$0xf]
      %v565 = vld [vmem:[%s3 + $0x24] sm:$0xf]
      %v566 = vld [vmem:[%s3 + $0x28] sm:$0xf]
      %v567 = vld [vmem:[%s3 + $0x2c] sm:$0xf]
      %v568 = vld [vmem:[%s3 + $0x30] sm:$0xf]
      %v569 = vld [vmem:[%s3 + $0x34] sm:$0xf]
      %v570 = vld [vmem:[%s3 + $0x38] sm:$0xf]
      %v571 = vld [vmem:[%s3 + $0x3c] sm:$0xf]
      %v580 = vunpack.c.l.b16 %v548
      %v581 = vunpack.c.l.b16 %v549
      %v582 = vunpack.c.l.b16 %v550
      %v583 = vunpack.c.l.b16 %v551
      %v584 = vunpack.c.l.b16 %v552
      %v585 = vunpack.c.l.b16 %v553
      %v586 = vunpack.c.l.b16 %v554
      %v587 = vunpack.c.l.b16 %v555
      %v588 = vpack.c.b16 %v581, %v580
      %v589 = vpack.c.b16 %v583, %v582
      %v590 = vpack.c.b16 %v585, %v584
      %v591 = vpack.c.b16 %v587, %v586
      %v612 = vunpack.c.l.b16 %v556
      %v613 = vunpack.c.l.b16 %v557
      %v614 = vunpack.c.l.b16 %v558
      %v615 = vunpack.c.l.b16 %v559
      %v616 = vunpack.c.l.b16 %v560
      %v617 = vunpack.c.l.b16 %v561
      %v618 = vunpack.c.l.b16 %v562
      %v619 = vunpack.c.l.b16 %v563
      %v620 = vunpack.c.l.b16 %v564
      %v621 = vunpack.c.l.b16 %v565
      %v622 = vunpack.c.l.b16 %v566
      %v623 = vunpack.c.l.b16 %v567
      %v624 = vunpack.c.l.b16 %v568
      %v625 = vunpack.c.l.b16 %v569
      %v626 = vunpack.c.l.b16 %v570
      %v627 = vunpack.c.l.b16 %v571
      %v628 = vpack.c.b16 %v613, %v612
      %v629 = vpack.c.b16 %v615, %v614
      %v630 = vpack.c.b16 %v617, %v616
      %v631 = vpack.c.b16 %v619, %v618
      %v632 = vpack.c.b16 %v621, %v620
      %v633 = vpack.c.b16 %v623, %v622
      %v634 = vpack.c.b16 %v625, %v624
      %v635 = vpack.c.b16 %v627, %v626
      %644 = vmatprep.subr.bf16.mxu0 0
      %645 = vmatpush1.bf16.msra.mxu0 %v635
      %646 = vmatprep.subr.bf16.mxu0 0
      %647 = vmatpush1.bf16.msra.mxu0 %v634
      %648 = vmatprep.subr.bf16.mxu0 0
      %649 = vmatpush1.bf16.msra.mxu0 %v633
      %650 = vmatprep.subr.bf16.mxu0 0
      %651 = vmatpush1.bf16.msra.mxu0 %v632
      %652 = vmatprep.subr.bf16.mxu0 0
      %653 = vmatpush1.bf16.msra.mxu0 %v631
      %654 = vmatprep.subr.bf16.mxu0 0
      %655 = vmatpush1.bf16.msra.mxu0 %v630
      %656 = vmatprep.subr.bf16.mxu0 0
      %657 = vmatpush1.bf16.msra.mxu0 %v629
      %658 = vmatprep.subr.bf16.mxu0 0
      %659 = vmatpush1.bf16.msra.mxu0 %v628
      %660 = vmatprep.subr.bf16.mxu0 0
      %661 = vmatpush2.bf16.msra.mxu0 0
      %662 = vmatprep.subr.bf16.mxu0 0
      %663 = vmatpush2.bf16.msra.mxu0 0
      %664 = vmatprep.subr.bf16.mxu0 0
      %665 = vmatpush2.bf16.msra.mxu0 0
      %666 = vmatprep.subr.bf16.mxu0 0
      %667 = vmatpush2.bf16.msra.mxu0 0
      %668 = vmatprep.subr.bf16.mxu0 0
      %669 = vmatpush2.bf16.msra.mxu0 0
      %670 = vmatprep.subr.bf16.mxu0 0
      %671 = vmatpush2.bf16.msra.mxu0 0
      %672 = vmatprep.subr.bf16.mxu0 0
      %673 = vmatpush2.bf16.msra.mxu0 0
      %674 = vmatprep.subr.bf16.mxu0 0
      %675 = vmatpush2.bf16.msra.mxu0 0
      %676 = vmatprep.mubr.bf16.mxu0 0
      %677 = vmatmul.mubr.bf16.gmra.mxu0 %v588
      %v678 = vpop.f32.mrf.mxu0
      %v679 = vadd.f32 0.0, %v678
      %v680 = vpop.f32.mrf.mxu0
      %v681 = vpop.f32.mrf.mxu0
      %v682 = vadd.f32 0.0, %v681
      %v683 = vpop.f32.mrf.mxu0
      %684 = vmatprep.mubr.bf16.mxu0 0
      %685 = vmatmul.mubr.bf16.gmra.mxu0 %v589
      %v686 = vpop.f32.mrf.mxu0
      %v687 = vadd.f32 0.0, %v686
      %v688 = vpop.f32.mrf.mxu0
      %v689 = vpop.f32.mrf.mxu0
      %v690 = vadd.f32 0.0, %v689
      %v691 = vpop.f32.mrf.mxu0
      %692 = vmatprep.mubr.bf16.mxu0 0
      %693 = vmatmul.mubr.bf16.gmra.mxu0 %v590
      %v694 = vpop.f32.mrf.mxu0
      %v695 = vadd.f32 0.0, %v694
      %v696 = vpop.f32.mrf.mxu0
      %v697 = vpop.f32.mrf.mxu0
      %v698 = vadd.f32 0.0, %v697
      %v699 = vpop.f32.mrf.mxu0
      %700 = vmatprep.mubr.bf16.mxu0 0
      %701 = vmatmul.mubr.bf16.gmra.mxu0 %v591
      %v702 = vpop.f32.mrf.mxu0
      %v703 = vadd.f32 0.0, %v702
      %v704 = vpop.f32.mrf.mxu0
      %v705 = vpop.f32.mrf.mxu0
      %v706 = vadd.f32 0.0, %v705
      %v707 = vpop.f32.mrf.mxu0
      %708 = vdwg.mxu0
      %v709 = vpack.c.bf16 %v521, %v518
      %v710 = vpack.c.bf16 %v529, %v526
      %v711 = vpack.c.bf16 %v537, %v534
      %v712 = vpack.c.bf16 %v545, %v542
      %v717 = vunpack.c.l.b16 %v709
      %v718 = vunpack.c.h.b16 %v709
      %v719 = vunpack.c.l.b16 %v710
      %v720 = vunpack.c.h.b16 %v710
      %v721 = vunpack.c.l.b16 %v711
      %v722 = vunpack.c.h.b16 %v711
      %v723 = vunpack.c.l.b16 %v712
      %v724 = vunpack.c.h.b16 %v712
      %v725 = vpack.c.b16 %v717, %v717
      %v726 = vpack.c.b16 %v718, %v718
      %v727 = vpack.c.b16 %v719, %v719
      %v728 = vpack.c.b16 %v720, %v720
      %v729 = vpack.c.b16 %v721, %v721
      %v730 = vpack.c.b16 %v722, %v722
      %v731 = vpack.c.b16 %v723, %v723
      %v732 = vpack.c.b16 %v724, %v724
      %741 = vst [vmem:[%s357] sm:$0xf] %v725
      %742 = vst [vmem:[%s357 + $0x4] sm:$0xf] %v726
      %743 = vst [vmem:[%s357 + $0x8] sm:$0xf] %v727
      %744 = vst [vmem:[%s357 + $0xc] sm:$0xf] %v728
      %745 = vst [vmem:[%s357 + $0x10] sm:$0xf] %v729
      %746 = vst [vmem:[%s357 + $0x14] sm:$0xf] %v730
      %747 = vst [vmem:[%s357 + $0x18] sm:$0xf] %v731
      %748 = vst [vmem:[%s357 + $0x1c] sm:$0xf] %v732
      %v749 = vpack.c.bf16 %v682, %v679
      %v750 = vpack.c.bf16 %v690, %v687
      %v751 = vpack.c.bf16 %v698, %v695
      %v752 = vpack.c.bf16 %v706, %v703
      %v757 = vunpack.c.l.b16 %v749
      %v758 = vunpack.c.h.b16 %v749
      %v759 = vunpack.c.l.b16 %v750
      %v760 = vunpack.c.h.b16 %v750
      %v761 = vunpack.c.l.b16 %v751
      %v762 = vunpack.c.h.b16 %v751
      %v763 = vunpack.c.l.b16 %v752
      %v764 = vunpack.c.h.b16 %v752
      %v765 = vpack.c.b16 %v757, %v757
      %v766 = vpack.c.b16 %v758, %v758
      %v767 = vpack.c.b16 %v759, %v759
      %v768 = vpack.c.b16 %v760, %v760
      %v769 = vpack.c.b16 %v761, %v761
      %v770 = vpack.c.b16 %v762, %v762
      %v771 = vpack.c.b16 %v763, %v763
      %v772 = vpack.c.b16 %v764, %v764
      %781 = vst [vmem:[%s365] sm:$0xf] %v765
      %782 = vst [vmem:[%s365 + $0x4] sm:$0xf] %v766
      %783 = vst [vmem:[%s365 + $0x8] sm:$0xf] %v767
      %784 = vst [vmem:[%s365 + $0xc] sm:$0xf] %v768
      %785 = vst [vmem:[%s365 + $0x10] sm:$0xf] %v769
      %786 = vst [vmem:[%s365 + $0x14] sm:$0xf] %v770
      %787 = vst [vmem:[%s365 + $0x18] sm:$0xf] %v771
      %788 = vst [vmem:[%s365 + $0x1c] sm:$0xf] %v772
      %v789 = vadd.f32 %v518, %v521
      %v790 = vadd.f32 %v789, %v526
      %v791 = vadd.f32 %v790, %v529
      %v792 = vadd.f32 %v791, %v534
      %v793 = vadd.f32 %v792, %v537
      %v794 = vadd.f32 %v793, %v542
      %v795 = vadd.f32 %v794, %v545
      %v796 = vmul.f32 %v518, %v518
      %v797 = vmul.f32 %v521, %v521
      %v798 = vmul.f32 %v526, %v526
      %v799 = vmul.f32 %v529, %v529
      %v800 = vmul.f32 %v534, %v534
      %v801 = vmul.f32 %v537, %v537
      %v802 = vmul.f32 %v542, %v542
      %v803 = vmul.f32 %v545, %v545
      %v804 = vadd.f32 %v796, %v797
      %v805 = vadd.f32 %v804, %v798
      %v806 = vadd.f32 %v805, %v799
      %v807 = vadd.f32 %v806, %v800
      %v808 = vadd.f32 %v807, %v801
      %v809 = vadd.f32 %v808, %v802
      %v810 = vadd.f32 %v809, %v803
      %v811 = vld [vmem:[%s372] sm:$0xff]
      %v812 = vld [vmem:[%s372 + $0x8] sm:$0xff]
      %v813 = vadd.f32 %v811, %v795
      %v814 = vadd.f32 %v812, %v810
      %815 = vst [vmem:[%s372] sm:$0xff] %v813
      %816 = vst [vmem:[%s372 + $0x8] sm:$0xff] %v814
      %v817 = vadd.f32 %v679, %v682
      %v818 = vadd.f32 %v817, %v687
      %v819 = vadd.f32 %v818, %v690
      %v820 = vadd.f32 %v819, %v695
      %v821 = vadd.f32 %v820, %v698
      %v822 = vadd.f32 %v821, %v703
      %v823 = vadd.f32 %v822, %v706
      %v824 = vmul.f32 %v679, %v679
      %v825 = vmul.f32 %v682, %v682
      %v826 = vmul.f32 %v687, %v687
      %v827 = vmul.f32 %v690, %v690
      %v828 = vmul.f32 %v695, %v695
      %v829 = vmul.f32 %v698, %v698
      %v830 = vmul.f32 %v703, %v703
      %v831 = vmul.f32 %v706, %v706
      %v832 = vadd.f32 %v824, %v825
      %v833 = vadd.f32 %v832, %v826
      %v834 = vadd.f32 %v833, %v827
      %v835 = vadd.f32 %v834, %v828
      %v836 = vadd.f32 %v835, %v829
      %v837 = vadd.f32 %v836, %v830
      %v838 = vadd.f32 %v837, %v831
      %v839 = vld [vmem:[%s377] sm:$0xff]
      %v840 = vld [vmem:[%s377 + $0x8] sm:$0xff]
      %v841 = vadd.f32 %v839, %v823
      %v842 = vadd.f32 %v840, %v838
      %843 = vst [vmem:[%s377] sm:$0xff] %v841
      %844 = vst [vmem:[%s377 + $0x8] sm:$0xff] %v842
      %s845 = sadd.s32 %s23, %s24
      %s846 = smul.u32 8, %s845
      %p847 = scmp.lt.s32.totalorder %s846, 15
      %s848 = scalar_select %p847, %s846, 15
      %s849 = smul.addr %s848, 4
      %s850 = scalar_lea.vmem %s4, %s849
      %s851 = sadd.s32 %s23, %s24
      %s852 = smul.u32 8, %s851
      %p853 = scmp.lt.s32.totalorder %s852, 15
      %s854 = scalar_select %p853, %s852, 15
      %s855 = smul.addr %s854, 4
      %s856 = scalar_lea.vmem %s5, %s855
      %p857 = scmp.lt.s32.totalorder %s23, 1
      %s858 = scalar_select %p857, %s23, 1
      %s859 = smul.addr %s858, 2
      %s860 = smul.addr %s859, 8
      %s861 = scalar_lea.vmem %s6, %s860
      %p862 = scmp.lt.s32.totalorder %s23, 1
      %s863 = scalar_select %p862, %s23, 1
      %s864 = smul.addr %s863, 2
      %s865 = smul.addr %s864, 8
      %s866 = scalar_lea.vmem %s7, %s865
      // Predicated region
      $region41: #{resblock_forward.6} parent=35 // pred_check
        %p867 = pneg %p149
      $region42: #{resblock_forward.6} parent=35 // pred_check_branch
        %869 = sbr.rel (%p867) target = $region44
      $region43: #{resblock_forward.6} parent=35 // pred_region
        %s870 = sadd.s32 %s23, %s24
        %s871 = smul.u32 8, %s870
      $region44: #{resblock_forward.6} parent=35 // pred_fallthru
        _
      // Predicated region
      $region45: #{resblock_forward.6} parent=35 // pred_check
        %p872 = pneg %p177
      $region46: #{resblock_forward.6} parent=35 // pred_check_branch
        %874 = sbr.rel (%p872) target = $region48
      $region47: #{resblock_forward.6} parent=35 // pred_region
        %s875 = sadd.s32 %s23, %s24
        %s876 = smul.u32 8, %s875
      $region48: #{resblock_forward.6} parent=35 // pred_fallthru
        _
      // Predicated region
      $region49: #{resblock_forward.6} parent=35 // pred_check
        %p877 = pneg %p203
      $region50: #{resblock_forward.6} parent=35 // pred_check_branch
        %879 = sbr.rel (%p877) target = $region52
      $region51: #{resblock_forward.6} parent=35 // pred_region
        _
      $region52: #{resblock_forward.6} parent=35 // pred_fallthru
        _
      // Predicated region
      $region53: #{resblock_forward.6} parent=35 // pred_check
        %p880 = pneg %p229
      $region54: #{resblock_forward.6} parent=35 // pred_check_branch
        %882 = sbr.rel (%p880) target = $region56
      $region55: #{resblock_forward.6} parent=35 // pred_region
        _
      $region56: #{resblock_forward.6} parent=35 // pred_fallthru
        _
    $region36: #{resblock_forward.6} parent=5 // pred_fallthru
      _
    %p883 = scmp.le.s32.totalorder 2, %s14
    // Predicated region
    $region57: #{resblock_forward.6} parent=5 // pred_check
      %p884 = pneg %p883
    $region58: #{resblock_forward.6} parent=5 // pred_check_branch
      %886 = sbr.rel (%p884) target = $region60
    $region59: #{resblock_forward.6} parent=5 // pred_region
      %s887 = ssub.s32 %s14, 2
      // Predicated region
      $region61: #{resblock_forward.6} parent=59 // pred_check
        %p888 = pneg %p155
      $region62: #{resblock_forward.6} parent=59 // pred_check_branch
        %890 = sbr.rel (%p888) target = $region64
      $region63: #{resblock_forward.6} parent=59 // pred_region
        %s891 = sadd.s32 %s25, %s26
        %s892 = smul.u32 8, %s891
        %p893 = scmp.lt.s32.totalorder %s892, 15
        %s894 = scalar_select %p893, %s892, 15
        %s895 = smul.addr %s894, 4
        %s896 = scalar_lea.vmem %s4, %s895
      $region64: #{resblock_forward.6} parent=59 // pred_fallthru
        _
      // Predicated region
      $region65: #{resblock_forward.6} parent=59 // pred_check
        %p897 = pneg %p183
      $region66: #{resblock_forward.6} parent=59 // pred_check_branch
        %899 = sbr.rel (%p897) target = $region68
      $region67: #{resblock_forward.6} parent=59 // pred_region
        %s900 = sadd.s32 %s25, %s26
        %s901 = smul.u32 8, %s900
        %p902 = scmp.lt.s32.totalorder %s901, 15
        %s903 = scalar_select %p902, %s901, 15
        %s904 = smul.addr %s903, 4
        %s905 = scalar_lea.vmem %s5, %s904
      $region68: #{resblock_forward.6} parent=59 // pred_fallthru
        _
      // Predicated region
      $region69: #{resblock_forward.6} parent=59 // pred_check
        %p906 = pneg %p209
      $region70: #{resblock_forward.6} parent=59 // pred_check_branch
        %908 = sbr.rel (%p906) target = $region72
      $region71: #{resblock_forward.6} parent=59 // pred_region
        %p909 = scmp.lt.s32.totalorder %s25, 1
        %s910 = scalar_select %p909, %s25, 1
        %s911 = smul.addr %s910, 2
        %s912 = smul.addr %s911, 8
        %s913 = scalar_lea.vmem %s6, %s912
      $region72: #{resblock_forward.6} parent=59 // pred_fallthru
        _
      // Predicated region
      $region73: #{resblock_forward.6} parent=59 // pred_check
        %p914 = pneg %p235
      $region74: #{resblock_forward.6} parent=59 // pred_check_branch
        %916 = sbr.rel (%p914) target = $region76
      $region75: #{resblock_forward.6} parent=59 // pred_region
        %p917 = scmp.lt.s32.totalorder %s25, 1
        %s918 = scalar_select %p917, %s25, 1
        %s919 = smul.addr %s918, 2
        %s920 = smul.addr %s919, 8
        %s921 = scalar_lea.vmem %s7, %s920
      $region76: #{resblock_forward.6} parent=59 // pred_fallthru
        _
    $region60: #{resblock_forward.6} parent=5 // pred_fallthru
      _
  $region6: #{resblock_forward.6} parent=0 // loop_footer
    %s18 = sadd.s32 1, %s14
  $region7: #{resblock_forward.6} parent=0 // loop_footer_branch
    %13 = sbr.rel target = $region3
  $region8: #{resblock_forward.6} parent=0 // loop_exit
    _

</llo_original>
